<compile_context>
chip_gen: v6e
topology: v6e:2x2x1
jax: 0.10.0
libtpu: 0.0.40
codegen_flags: <defaults>
</compile_context>

<pallas_src>
import functools

import jax
import jax.numpy as jnp
import numpy as np
from jax.experimental import pallas as pl

LANES = 128


# ----------------------------------------------------------------------------
# Host-side parameter packing: one f32 slab, 8-row-aligned sections, 128 lanes.
# ----------------------------------------------------------------------------
def pack_params(lstm_params, fc_params):
    """lstm_params: flat list of (wih_T (D_in,4H), whh_T (H,4H), bias (1,4H)) per layer.
    fc_params: list of (w (D_in,D_out), b (1,D_out)).
    Returns (slab (R,128) f32 ndarray, layout) where layout holds static
    (row_offset, rows, cols) triples for every tensor."""
    blocks, cur = [], 0

    def add(a):
        nonlocal cur
        a = np.asarray(a, np.float32)
        r, c = a.shape
        assert c <= LANES
        rp = ((r + 7) // 8) * 8                      # 8-sublane aligned section start
        buf = np.zeros((rp, LANES), np.float32)
        buf[:r, :c] = a
        blocks.append(buf)
        off = cur
        cur += rp
        return (off, r, c)

    lstm_layout = tuple((add(wih), add(whh), add(b)) for (wih, whh, b) in lstm_params)
    fc_layout = tuple((add(w), add(b)) for (w, b) in fc_params)
    return np.concatenate(blocks, axis=0), (lstm_layout, fc_layout)


# ----------------------------------------------------------------------------
# Fused forward kernel (no grid: single invocation, everything VMEM/vreg-resident)
# ----------------------------------------------------------------------------
def fused_forward_kernel(x_ref, p_ref, out_ref, *, B, T, D, layout, n1, n2):
    lstm_layout, fc_layout = layout
    f32, bf16 = jnp.float32, jnp.bfloat16

    def load(sec):
        off, r, c = sec
        return p_ref[off:off + r, 0:c]               # static slice of the param slab

    # Unpack once; matmul weights cast to bf16 once (hoisted out of the time loop).
    wih = [load(w).astype(bf16) for (w, _, _) in lstm_layout]
    whh = [load(w).astype(bf16) for (_, w, _) in lstm_layout]
    bias = [load(b) for (_, _, b) in lstm_layout]    # (1, 4H) f32
    hsz = [w_sec[1] for (_, w_sec, _) in lstm_layout]  # hidden size per layer (static)
    fcs = [(load(w).astype(bf16), load(b)) for (w, b) in fc_layout]

    n_layers = n1 + n2
    h = [jnp.zeros((B, hsz[l]), f32) for l in range(n_layers)]
    c = [jnp.zeros((B, hsz[l]), f32) for l in range(n_layers)]

    # Fused wavefront recurrence: all stacked LSTM layers advance inside one unrolled
    # time loop; per-step hidden states stay in vregs and feed the next layer directly.
    # PyTorch gate order (i, f, g, o); bias = b_ih + b_hh, pre-combined on the host.
    for t in range(T):
        x_in = x_ref[:, t * D:(t + 1) * D]           # (B, D) f32 lane slice
        for l in range(n_layers):
            H = hsz[l]
            gates = (jnp.dot(x_in.astype(bf16), wih[l], preferred_element_type=f32)
                     + jnp.dot(h[l].astype(bf16), whh[l], preferred_element_type=f32)
                     + bias[l])                      # (B, 4H) f32
            sig = jax.nn.sigmoid(gates)              # one full-width EUP pass
            tg = jnp.tanh(gates)                     # one full-width EUP pass
            i_g = sig[:, 0 * H:1 * H]
            f_g = sig[:, 1 * H:2 * H]
            g_g = tg[:, 2 * H:3 * H]
            o_g = sig[:, 3 * H:4 * H]
            c[l] = f_g * c[l] + i_g * g_g            # cell state stays f32
            h[l] = o_g * jnp.tanh(c[l])
            x_in = h[l]                              # feeds the next stacked layer

    # MLP head on hn2 (final h of the second stack, layer-major). dropout == identity.
    # relu -> fc1 -> relu -> fc2 -> relu -> fc3  (no relu after fc3).
    for j in range(n2):
        z = jnp.maximum(h[n1 + j], 0.0)
        for idx, (w, b) in enumerate(fcs):
            z = jnp.dot(z.astype(bf16), w, preferred_element_type=f32) + b
            if idx < len(fcs) - 1:
                z = jnp.maximum(z, 0.0)
        out_ref[j * B:(j + 1) * B, :] = z.astype(out_ref.dtype)


def build_forward(layout, *, B, T, D, n1, n2, num_classes):
    kernel = functools.partial(fused_forward_kernel, B=B, T=T, D=D,
                               layout=layout, n1=n1, n2=n2)

    @jax.jit
    def forward(x, param_slab):
        # (B, T, D) -> (B, T*D): row-major merge of minor dims (bitcast, no HBM copy),
        # unlike the previous transpose+reshape which launched a real copy op.
        x2 = x.reshape(B, T * D)
        return pl.pallas_call(
            kernel,
            out_shape=jax.ShapeDtypeStruct((n2 * B, num_classes), jnp.float32),
        )(x2, param_slab)

    return forward


# ----------------------------------------------------------------------------
# Parameter construction (deterministic, PyTorch-default-like scales)
# ----------------------------------------------------------------------------
def _uniform(key, shape, lim):
    return jax.random.uniform(key, shape, jnp.float32, minval=-lim, maxval=lim)


def make_lstm_stack_params(key, input_size, hidden_size, num_layers):
    params = []
    k = 1.0 / jnp.sqrt(hidden_size)
    for layer in range(num_layers):
        d_in = input_size if layer == 0 else hidden_size
        key, k1, k2, k3, k4 = jax.random.split(key, 5)
        w_ih = _uniform(k1, (4 * hidden_size, d_in), k)       # PyTorch layout (4H, D)
        w_hh = _uniform(k2, (4 * hidden_size, hidden_size), k)
        b_ih = _uniform(k3, (4 * hidden_size,), k)
        b_hh = _uniform(k4, (4 * hidden_size,), k)
        params.append((w_ih.T, w_hh.T, (b_ih + b_hh).reshape(1, -1)))
    return params, key


def make_fc_params(key, dims):
    params = []
    for d_in, d_out in zip(dims[:-1], dims[1:]):
        key, kw, kb = jax.random.split(key, 3)
        lim_w = jnp.sqrt(6.0 / (d_in + d_out))                # xavier_uniform
        lim_b = 1.0 / jnp.sqrt(d_in)
        w = _uniform(kw, (d_in, d_out), lim_w)                # stored transposed
        b = _uniform(kb, (1, d_out), lim_b)
        params.append((w, b))
    return params, key


# ----------------------------------------------------------------------------
# Pure numpy reference (exact module semantics, eval mode, f32) for validation
# ----------------------------------------------------------------------------
def _sigmoid(z):
    return 1.0 / (1.0 + np.exp(-z))


def _forward_ref(x, lstm1_params, lstm2_params, fc_params):
    def layer(x_tbd, wih, whh, b):
        T, B, _ = x_tbd.shape
        H = whh.shape[0]
        h = np.zeros((B, H), np.float32)
        c = np.zeros((B, H), np.float32)
        outs = []
        for t in range(T):
            gates = x_tbd[t] @ wih + h @ whh + b
            i = _sigmoid(gates[:, 0 * H:1 * H])
            f = _sigmoid(gates[:, 1 * H:2 * H])
            g = np.tanh(gates[:, 2 * H:3 * H])
            o = _sigmoid(gates[:, 3 * H:4 * H])
            c = f * c + i * g
            h = o * np.tanh(c)
            outs.append(h)
        return np.stack(outs), h

    to_np = lambda t: tuple(np.asarray(a, np.float32) for a in t)
    seq = np.transpose(np.asarray(x, np.float32), (1, 0, 2))
    for p in lstm1_params:
        seq, _ = layer(seq, *to_np(p))
    hs = []
    for p in lstm2_params:
        seq, h = layer(seq, *to_np(p))
        hs.append(h)
    z = np.maximum(np.concatenate(hs, axis=0), 0.0)
    for (w, b) in fc_params[:-1]:
        z = np.maximum(z @ np.asarray(w) + np.asarray(b), 0.0)
    return z @ np.asarray(fc_params[-1][0]) + np.asarray(fc_params[-1][1])


if __name__ == "__main__":
    # Small shapes consistent with the module.
    num_classes = 3
    input_size = 8
    hidden_size1 = 32
    hidden_size2 = 16
    num_layers = 2
    batch = 2
    seq_len = 8

    key = jax.random.PRNGKey(0)
    key, kx = jax.random.split(key)
    x = jax.random.normal(kx, (batch, seq_len, input_size), jnp.float32)

    lstm1_params, key = make_lstm_stack_params(key, input_size, hidden_size1, num_layers)
    lstm2_params, key = make_lstm_stack_params(key, hidden_size1, hidden_size2, num_layers)
    fc_params, key = make_fc_params(key, (hidden_size2, 16, 4, num_classes))

    slab, layout = pack_params(list(lstm1_params) + list(lstm2_params), fc_params)
    forward = build_forward(layout, B=batch, T=seq_len, D=input_size,
                            n1=num_layers, n2=num_layers, num_classes=num_classes)

    out = forward(x, jnp.asarray(slab))
    out = jax.block_until_ready(out)
    assert out.shape == (num_layers * batch, num_classes), out.shape

    ref = _forward_ref(x, lstm1_params, lstm2_params, fc_params)
    max_err = float(np.max(np.abs(np.asarray(out) - ref)))
    # Tolerance sized for bf16 MXU operands over the T=8 recurrence (the all-f32 path
    # passes at ~1e-5; bf16 matmul inputs with f32 accumulation land around 1e-3..1e-2).
    assert np.allclose(np.asarray(out), ref, atol=2e-2, rtol=2e-2), f"max_err={max_err}"

    print("KERNEL_OK")
</pallas_src>

<mosaic_0001>
module attributes {stable_mosaic.version = 11 : i64} {
  func.func @fused_forward_kernel(%arg0: memref<2x64xf32, #tpu.memory_space<vmem>>, %arg1: memref<280x128xf32, #tpu.memory_space<vmem>>, %arg2: memref<4x3xf32, #tpu.memory_space<vmem>>) attributes {dimension_semantics = [], scalar_prefetch = 0 : i64, scratch_operands = 0 : i64, tpu.core_type = #tpu.core_type<tc>} {
    %c0 = arith.constant 0 : index
    %c0_0 = arith.constant 0 : index
    %0 = vector.load %arg1[%c0, %c0_0] : memref<280x128xf32, #tpu.memory_space<vmem>>, vector<8x128xf32>
    %1 = arith.truncf %0 : vector<8x128xf32> to vector<8x128xbf16>
    %c48 = arith.constant 48 : index
    %c0_1 = arith.constant 0 : index
    %2 = vector.load %arg1[%c48, %c0_1] : memref<280x128xf32, #tpu.memory_space<vmem>>, vector<32x128xf32>
    %3 = arith.truncf %2 : vector<32x128xf32> to vector<32x128xbf16>
    %c120 = arith.constant 120 : index
    %c0_2 = arith.constant 0 : index
    %4 = vector.load %arg1[%c120, %c0_2] : memref<280x128xf32, #tpu.memory_space<vmem>>, vector<32x64xf32>
    %5 = arith.truncf %4 : vector<32x64xf32> to vector<32x64xbf16>
    %c176 = arith.constant 176 : index
    %c0_3 = arith.constant 0 : index
    %6 = vector.load %arg1[%c176, %c0_3] : memref<280x128xf32, #tpu.memory_space<vmem>>, vector<16x64xf32>
    %7 = arith.truncf %6 : vector<16x64xf32> to vector<16x64xbf16>
    %c8 = arith.constant 8 : index
    %c0_4 = arith.constant 0 : index
    %8 = vector.load %arg1[%c8, %c0_4] : memref<280x128xf32, #tpu.memory_space<vmem>>, vector<32x128xf32>
    %9 = arith.truncf %8 : vector<32x128xf32> to vector<32x128xbf16>
    %c80 = arith.constant 80 : index
    %c0_5 = arith.constant 0 : index
    %10 = vector.load %arg1[%c80, %c0_5] : memref<280x128xf32, #tpu.memory_space<vmem>>, vector<32x128xf32>
    %11 = arith.truncf %10 : vector<32x128xf32> to vector<32x128xbf16>
    %c152 = arith.constant 152 : index
    %c0_6 = arith.constant 0 : index
    %12 = vector.load %arg1[%c152, %c0_6] : memref<280x128xf32, #tpu.memory_space<vmem>>, vector<16x64xf32>
    %13 = arith.truncf %12 : vector<16x64xf32> to vector<16x64xbf16>
    %c192 = arith.constant 192 : index
    %c0_7 = arith.constant 0 : index
    %14 = vector.load %arg1[%c192, %c0_7] : memref<280x128xf32, #tpu.memory_space<vmem>>, vector<16x64xf32>
    %15 = arith.truncf %14 : vector<16x64xf32> to vector<16x64xbf16>
    %c40 = arith.constant 40 : index
    %c0_8 = arith.constant 0 : index
    %16 = vector.load %arg1[%c40, %c0_8] : memref<280x128xf32, #tpu.memory_space<vmem>>, vector<1x128xf32>
    %c112 = arith.constant 112 : index
    %c0_9 = arith.constant 0 : index
    %17 = vector.load %arg1[%c112, %c0_9] : memref<280x128xf32, #tpu.memory_space<vmem>>, vector<1x128xf32>
    %c168 = arith.constant 168 : index
    %c0_10 = arith.constant 0 : index
    %18 = vector.load %arg1[%c168, %c0_10] : memref<280x128xf32, #tpu.memory_space<vmem>>, vector<1x64xf32>
    %c208 = arith.constant 208 : index
    %c0_11 = arith.constant 0 : index
    %19 = vector.load %arg1[%c208, %c0_11] : memref<280x128xf32, #tpu.memory_space<vmem>>, vector<1x64xf32>
    %c216 = arith.constant 216 : index
    %c0_12 = arith.constant 0 : index
    %20 = vector.load %arg1[%c216, %c0_12] : memref<280x128xf32, #tpu.memory_space<vmem>>, vector<16x16xf32>
    %21 = arith.truncf %20 : vector<16x16xf32> to vector<16x16xbf16>
    %c232 = arith.constant 232 : index
    %c0_13 = arith.constant 0 : index
    %22 = vector.load %arg1[%c232, %c0_13] : memref<280x128xf32, #tpu.memory_space<vmem>>, vector<1x16xf32>
    %c240 = arith.constant 240 : index
    %c0_14 = arith.constant 0 : index
    %23 = vector.load %arg1[%c240, %c0_14] : memref<280x128xf32, #tpu.memory_space<vmem>>, vector<16x4xf32>
    %24 = arith.truncf %23 : vector<16x4xf32> to vector<16x4xbf16>
    %c256 = arith.constant 256 : index
    %c0_15 = arith.constant 0 : index
    %25 = vector.load %arg1[%c256, %c0_15] : memref<280x128xf32, #tpu.memory_space<vmem>>, vector<1x4xf32>
    %c264 = arith.constant 264 : index
    %c0_16 = arith.constant 0 : index
    %26 = vector.load %arg1[%c264, %c0_16] : memref<280x128xf32, #tpu.memory_space<vmem>>, vector<4x3xf32>
    %27 = arith.truncf %26 : vector<4x3xf32> to vector<4x3xbf16>
    %c272 = arith.constant 272 : index
    %c0_17 = arith.constant 0 : index
    %28 = vector.load %arg1[%c272, %c0_17] : memref<280x128xf32, #tpu.memory_space<vmem>>, vector<1x3xf32>
    %cst = arith.constant 0.000000e+00 : f32
    %29 = vector.broadcast %cst : f32 to vector<2x32xf32>
    %cst_18 = arith.constant 0.000000e+00 : f32
    %30 = vector.broadcast %cst_18 : f32 to vector<2x32xf32>
    %cst_19 = arith.constant 0.000000e+00 : f32
    %31 = vector.broadcast %cst_19 : f32 to vector<2x16xf32>
    %cst_20 = arith.constant 0.000000e+00 : f32
    %32 = vector.broadcast %cst_20 : f32 to vector<2x16xf32>
    %cst_21 = arith.constant 0.000000e+00 : f32
    %33 = vector.broadcast %cst_21 : f32 to vector<2x32xf32>
    %cst_22 = arith.constant 0.000000e+00 : f32
    %34 = vector.broadcast %cst_22 : f32 to vector<2x32xf32>
    %cst_23 = arith.constant 0.000000e+00 : f32
    %35 = vector.broadcast %cst_23 : f32 to vector<2x16xf32>
    %cst_24 = arith.constant 0.000000e+00 : f32
    %36 = vector.broadcast %cst_24 : f32 to vector<2x16xf32>
    %c0_25 = arith.constant 0 : index
    %c0_26 = arith.constant 0 : index
    %37 = vector.load %arg0[%c0_25, %c0_26] : memref<2x64xf32, #tpu.memory_space<vmem>>, vector<2x8xf32>
    %38 = arith.truncf %37 : vector<2x8xf32> to vector<2x8xbf16>
    %cst_27 = arith.constant dense<0.000000e+00> : vector<2x128xf32>
    %39 = tpu.matmul %38, %1, %cst_27 {dimension_numbers = #tpu.dot_dimension_numbers<[1], [0], [0], [1], [0, 0, 1, 1], [], []>} : vector<2x8xbf16>, vector<8x128xbf16>, vector<2x128xf32> -> vector<2x128xf32>
    %40 = arith.truncf %29 : vector<2x32xf32> to vector<2x32xbf16>
    %cst_28 = arith.constant dense<0.000000e+00> : vector<2x128xf32>
    %41 = tpu.matmul %40, %9, %cst_28 {dimension_numbers = #tpu.dot_dimension_numbers<[1], [0], [0], [1], [0, 0, 1, 1], [], []>} : vector<2x32xbf16>, vector<32x128xbf16>, vector<2x128xf32> -> vector<2x128xf32>
    %42 = arith.addf %39, %41 : vector<2x128xf32>
    %43 = vector.broadcast %16 : vector<1x128xf32> to vector<2x128xf32>
    %44 = arith.addf %42, %43 : vector<2x128xf32>
    %45 = arith.negf %44 : vector<2x128xf32>
    %46 = math.exp %45 : vector<2x128xf32>
    %cst_29 = arith.constant 1.000000e+00 : f32
    %47 = vector.broadcast %cst_29 : f32 to vector<2x128xf32>
    %48 = arith.addf %47, %46 : vector<2x128xf32>
    %49 = arith.divf %47, %48 : vector<2x128xf32>
    %50 = math.tanh %44 : vector<2x128xf32>
    %51 = vector.extract_strided_slice %49 {offsets = [0, 0], sizes = [2, 32], strides = [1, 1]} : vector<2x128xf32> to vector<2x32xf32>
    %52 = vector.extract_strided_slice %49 {offsets = [0, 32], sizes = [2, 32], strides = [1, 1]} : vector<2x128xf32> to vector<2x32xf32>
    %53 = vector.extract_strided_slice %50 {offsets = [0, 64], sizes = [2, 32], strides = [1, 1]} : vector<2x128xf32> to vector<2x32xf32>
    %54 = vector.extract_strided_slice %49 {offsets = [0, 96], sizes = [2, 32], strides = [1, 1]} : vector<2x128xf32> to vector<2x32xf32>
    %55 = arith.mulf %52, %33 : vector<2x32xf32>
    %56 = arith.mulf %51, %53 : vector<2x32xf32>
    %57 = arith.addf %55, %56 : vector<2x32xf32>
    %58 = math.tanh %57 : vector<2x32xf32>
    %59 = arith.mulf %54, %58 : vector<2x32xf32>
    %60 = arith.truncf %59 : vector<2x32xf32> to vector<2x32xbf16>
    %cst_30 = arith.constant dense<0.000000e+00> : vector<2x128xf32>
    %61 = tpu.matmul %60, %3, %cst_30 {dimension_numbers = #tpu.dot_dimension_numbers<[1], [0], [0], [1], [0, 0, 1, 1], [], []>} : vector<2x32xbf16>, vector<32x128xbf16>, vector<2x128xf32> -> vector<2x128xf32>
    %62 = arith.truncf %30 : vector<2x32xf32> to vector<2x32xbf16>
    %cst_31 = arith.constant dense<0.000000e+00> : vector<2x128xf32>
    %63 = tpu.matmul %62, %11, %cst_31 {dimension_numbers = #tpu.dot_dimension_numbers<[1], [0], [0], [1], [0, 0, 1, 1], [], []>} : vector<2x32xbf16>, vector<32x128xbf16>, vector<2x128xf32> -> vector<2x128xf32>
    %64 = arith.addf %61, %63 : vector<2x128xf32>
    %65 = vector.broadcast %17 : vector<1x128xf32> to vector<2x128xf32>
    %66 = arith.addf %64, %65 : vector<2x128xf32>
    %67 = arith.negf %66 : vector<2x128xf32>
    %68 = math.exp %67 : vector<2x128xf32>
    %cst_32 = arith.constant 1.000000e+00 : f32
    %69 = vector.broadcast %cst_32 : f32 to vector<2x128xf32>
    %70 = arith.addf %69, %68 : vector<2x128xf32>
    %71 = arith.divf %69, %70 : vector<2x128xf32>
    %72 = math.tanh %66 : vector<2x128xf32>
    %73 = vector.extract_strided_slice %71 {offsets = [0, 0], sizes = [2, 32], strides = [1, 1]} : vector<2x128xf32> to vector<2x32xf32>
    %74 = vector.extract_strided_slice %71 {offsets = [0, 32], sizes = [2, 32], strides = [1, 1]} : vector<2x128xf32> to vector<2x32xf32>
    %75 = vector.extract_strided_slice %72 {offsets = [0, 64], sizes = [2, 32], strides = [1, 1]} : vector<2x128xf32> to vector<2x32xf32>
    %76 = vector.extract_strided_slice %71 {offsets = [0, 96], sizes = [2, 32], strides = [1, 1]} : vector<2x128xf32> to vector<2x32xf32>
    %77 = arith.mulf %74, %34 : vector<2x32xf32>
    %78 = arith.mulf %73, %75 : vector<2x32xf32>
    %79 = arith.addf %77, %78 : vector<2x32xf32>
    %80 = math.tanh %79 : vector<2x32xf32>
    %81 = arith.mulf %76, %80 : vector<2x32xf32>
    %82 = arith.truncf %81 : vector<2x32xf32> to vector<2x32xbf16>
    %cst_33 = arith.constant dense<0.000000e+00> : vector<2x64xf32>
    %83 = tpu.matmul %82, %5, %cst_33 {dimension_numbers = #tpu.dot_dimension_numbers<[1], [0], [0], [1], [0, 0, 1, 1], [], []>} : vector<2x32xbf16>, vector<32x64xbf16>, vector<2x64xf32> -> vector<2x64xf32>
    %84 = arith.truncf %31 : vector<2x16xf32> to vector<2x16xbf16>
    %cst_34 = arith.constant dense<0.000000e+00> : vector<2x64xf32>
    %85 = tpu.matmul %84, %13, %cst_34 {dimension_numbers = #tpu.dot_dimension_numbers<[1], [0], [0], [1], [0, 0, 1, 1], [], []>} : vector<2x16xbf16>, vector<16x64xbf16>, vector<2x64xf32> -> vector<2x64xf32>
    %86 = arith.addf %83, %85 : vector<2x64xf32>
    %87 = vector.broadcast %18 : vector<1x64xf32> to vector<2x64xf32>
    %88 = arith.addf %86, %87 : vector<2x64xf32>
    %89 = arith.negf %88 : vector<2x64xf32>
    %90 = math.exp %89 : vector<2x64xf32>
    %cst_35 = arith.constant 1.000000e+00 : f32
    %91 = vector.broadcast %cst_35 : f32 to vector<2x64xf32>
    %92 = arith.addf %91, %90 : vector<2x64xf32>
    %93 = arith.divf %91, %92 : vector<2x64xf32>
    %94 = math.tanh %88 : vector<2x64xf32>
    %95 = vector.extract_strided_slice %93 {offsets = [0, 0], sizes = [2, 16], strides = [1, 1]} : vector<2x64xf32> to vector<2x16xf32>
    %96 = vector.extract_strided_slice %93 {offsets = [0, 16], sizes = [2, 16], strides = [1, 1]} : vector<2x64xf32> to vector<2x16xf32>
    %97 = vector.extract_strided_slice %94 {offsets = [0, 32], sizes = [2, 16], strides = [1, 1]} : vector<2x64xf32> to vector<2x16xf32>
    %98 = vector.extract_strided_slice %93 {offsets = [0, 48], sizes = [2, 16], strides = [1, 1]} : vector<2x64xf32> to vector<2x16xf32>
    %99 = arith.mulf %96, %35 : vector<2x16xf32>
    %100 = arith.mulf %95, %97 : vector<2x16xf32>
    %101 = arith.addf %99, %100 : vector<2x16xf32>
    %102 = math.tanh %101 : vector<2x16xf32>
    %103 = arith.mulf %98, %102 : vector<2x16xf32>
    %104 = arith.truncf %103 : vector<2x16xf32> to vector<2x16xbf16>
    %cst_36 = arith.constant dense<0.000000e+00> : vector<2x64xf32>
    %105 = tpu.matmul %104, %7, %cst_36 {dimension_numbers = #tpu.dot_dimension_numbers<[1], [0], [0], [1], [0, 0, 1, 1], [], []>} : vector<2x16xbf16>, vector<16x64xbf16>, vector<2x64xf32> -> vector<2x64xf32>
    %106 = arith.truncf %32 : vector<2x16xf32> to vector<2x16xbf16>
    %cst_37 = arith.constant dense<0.000000e+00> : vector<2x64xf32>
    %107 = tpu.matmul %106, %15, %cst_37 {dimension_numbers = #tpu.dot_dimension_numbers<[1], [0], [0], [1], [0, 0, 1, 1], [], []>} : vector<2x16xbf16>, vector<16x64xbf16>, vector<2x64xf32> -> vector<2x64xf32>
    %108 = arith.addf %105, %107 : vector<2x64xf32>
    %109 = vector.broadcast %19 : vector<1x64xf32> to vector<2x64xf32>
    %110 = arith.addf %108, %109 : vector<2x64xf32>
    %111 = arith.negf %110 : vector<2x64xf32>
    %112 = math.exp %111 : vector<2x64xf32>
    %cst_38 = arith.constant 1.000000e+00 : f32
    %113 = vector.broadcast %cst_38 : f32 to vector<2x64xf32>
    %114 = arith.addf %113, %112 : vector<2x64xf32>
    %115 = arith.divf %113, %114 : vector<2x64xf32>
    %116 = math.tanh %110 : vector<2x64xf32>
    %117 = vector.extract_strided_slice %115 {offsets = [0, 0], sizes = [2, 16], strides = [1, 1]} : vector<2x64xf32> to vector<2x16xf32>
    %118 = vector.extract_strided_slice %115 {offsets = [0, 16], sizes = [2, 16], strides = [1, 1]} : vector<2x64xf32> to vector<2x16xf32>
    %119 = vector.extract_strided_slice %116 {offsets = [0, 32], sizes = [2, 16], strides = [1, 1]} : vector<2x64xf32> to vector<2x16xf32>
    %120 = vector.extract_strided_slice %115 {offsets = [0, 48], sizes = [2, 16], strides = [1, 1]} : vector<2x64xf32> to vector<2x16xf32>
    %121 = arith.mulf %118, %36 : vector<2x16xf32>
    %122 = arith.mulf %117, %119 : vector<2x16xf32>
    %123 = arith.addf %121, %122 : vector<2x16xf32>
    %124 = math.tanh %123 : vector<2x16xf32>
    %125 = arith.mulf %120, %124 : vector<2x16xf32>
    %c0_39 = arith.constant 0 : index
    %c8_40 = arith.constant 8 : index
    %126 = vector.load %arg0[%c0_39, %c8_40] : memref<2x64xf32, #tpu.memory_space<vmem>>, vector<2x8xf32>
    %127 = arith.truncf %126 : vector<2x8xf32> to vector<2x8xbf16>
    %cst_41 = arith.constant dense<0.000000e+00> : vector<2x128xf32>
    %128 = tpu.matmul %127, %1, %cst_41 {dimension_numbers = #tpu.dot_dimension_numbers<[1], [0], [0], [1], [0, 0, 1, 1], [], []>} : vector<2x8xbf16>, vector<8x128xbf16>, vector<2x128xf32> -> vector<2x128xf32>
    %129 = arith.truncf %59 : vector<2x32xf32> to vector<2x32xbf16>
    %cst_42 = arith.constant dense<0.000000e+00> : vector<2x128xf32>
    %130 = tpu.matmul %129, %9, %cst_42 {dimension_numbers = #tpu.dot_dimension_numbers<[1], [0], [0], [1], [0, 0, 1, 1], [], []>} : vector<2x32xbf16>, vector<32x128xbf16>, vector<2x128xf32> -> vector<2x128xf32>
    %131 = arith.addf %128, %130 : vector<2x128xf32>
    %132 = vector.broadcast %16 : vector<1x128xf32> to vector<2x128xf32>
    %133 = arith.addf %131, %132 : vector<2x128xf32>
    %134 = arith.negf %133 : vector<2x128xf32>
    %135 = math.exp %134 : vector<2x128xf32>
    %cst_43 = arith.constant 1.000000e+00 : f32
    %136 = vector.broadcast %cst_43 : f32 to vector<2x128xf32>
    %137 = arith.addf %136, %135 : vector<2x128xf32>
    %138 = arith.divf %136, %137 : vector<2x128xf32>
    %139 = math.tanh %133 : vector<2x128xf32>
    %140 = vector.extract_strided_slice %138 {offsets = [0, 0], sizes = [2, 32], strides = [1, 1]} : vector<2x128xf32> to vector<2x32xf32>
    %141 = vector.extract_strided_slice %138 {offsets = [0, 32], sizes = [2, 32], strides = [1, 1]} : vector<2x128xf32> to vector<2x32xf32>
    %142 = vector.extract_strided_slice %139 {offsets = [0, 64], sizes = [2, 32], strides = [1, 1]} : vector<2x128xf32> to vector<2x32xf32>
    %143 = vector.extract_strided_slice %138 {offsets = [0, 96], sizes = [2, 32], strides = [1, 1]} : vector<2x128xf32> to vector<2x32xf32>
    %144 = arith.mulf %141, %57 : vector<2x32xf32>
    %145 = arith.mulf %140, %142 : vector<2x32xf32>
    %146 = arith.addf %144, %145 : vector<2x32xf32>
    %147 = math.tanh %146 : vector<2x32xf32>
    %148 = arith.mulf %143, %147 : vector<2x32xf32>
    %149 = arith.truncf %148 : vector<2x32xf32> to vector<2x32xbf16>
    %cst_44 = arith.constant dense<0.000000e+00> : vector<2x128xf32>
    %150 = tpu.matmul %149, %3, %cst_44 {dimension_numbers = #tpu.dot_dimension_numbers<[1], [0], [0], [1], [0, 0, 1, 1], [], []>} : vector<2x32xbf16>, vector<32x128xbf16>, vector<2x128xf32> -> vector<2x128xf32>
    %151 = arith.truncf %81 : vector<2x32xf32> to vector<2x32xbf16>
    %cst_45 = arith.constant dense<0.000000e+00> : vector<2x128xf32>
    %152 = tpu.matmul %151, %11, %cst_45 {dimension_numbers = #tpu.dot_dimension_numbers<[1], [0], [0], [1], [0, 0, 1, 1], [], []>} : vector<2x32xbf16>, vector<32x128xbf16>, vector<2x128xf32> -> vector<2x128xf32>
    %153 = arith.addf %150, %152 : vector<2x128xf32>
    %154 = vector.broadcast %17 : vector<1x128xf32> to vector<2x128xf32>
    %155 = arith.addf %153, %154 : vector<2x128xf32>
    %156 = arith.negf %155 : vector<2x128xf32>
    %157 = math.exp %156 : vector<2x128xf32>
    %cst_46 = arith.constant 1.000000e+00 : f32
    %158 = vector.broadcast %cst_46 : f32 to vector<2x128xf32>
    %159 = arith.addf %158, %157 : vector<2x128xf32>
    %160 = arith.divf %158, %159 : vector<2x128xf32>
    %161 = math.tanh %155 : vector<2x128xf32>
    %162 = vector.extract_strided_slice %160 {offsets = [0, 0], sizes = [2, 32], strides = [1, 1]} : vector<2x128xf32> to vector<2x32xf32>
    %163 = vector.extract_strided_slice %160 {offsets = [0, 32], sizes = [2, 32], strides = [1, 1]} : vector<2x128xf32> to vector<2x32xf32>
    %164 = vector.extract_strided_slice %161 {offsets = [0, 64], sizes = [2, 32], strides = [1, 1]} : vector<2x128xf32> to vector<2x32xf32>
    %165 = vector.extract_strided_slice %160 {offsets = [0, 96], sizes = [2, 32], strides = [1, 1]} : vector<2x128xf32> to vector<2x32xf32>
    %166 = arith.mulf %163, %79 : vector<2x32xf32>
    %167 = arith.mulf %162, %164 : vector<2x32xf32>
    %168 = arith.addf %166, %167 : vector<2x32xf32>
    %169 = math.tanh %168 : vector<2x32xf32>
    %170 = arith.mulf %165, %169 : vector<2x32xf32>
    %171 = arith.truncf %170 : vector<2x32xf32> to vector<2x32xbf16>
    %cst_47 = arith.constant dense<0.000000e+00> : vector<2x64xf32>
    %172 = tpu.matmul %171, %5, %cst_47 {dimension_numbers = #tpu.dot_dimension_numbers<[1], [0], [0], [1], [0, 0, 1, 1], [], []>} : vector<2x32xbf16>, vector<32x64xbf16>, vector<2x64xf32> -> vector<2x64xf32>
    %173 = arith.truncf %103 : vector<2x16xf32> to vector<2x16xbf16>
    %cst_48 = arith.constant dense<0.000000e+00> : vector<2x64xf32>
    %174 = tpu.matmul %173, %13, %cst_48 {dimension_numbers = #tpu.dot_dimension_numbers<[1], [0], [0], [1], [0, 0, 1, 1], [], []>} : vector<2x16xbf16>, vector<16x64xbf16>, vector<2x64xf32> -> vector<2x64xf32>
    %175 = arith.addf %172, %174 : vector<2x64xf32>
    %176 = vector.broadcast %18 : vector<1x64xf32> to vector<2x64xf32>
    %177 = arith.addf %175, %176 : vector<2x64xf32>
    %178 = arith.negf %177 : vector<2x64xf32>
    %179 = math.exp %178 : vector<2x64xf32>
    %cst_49 = arith.constant 1.000000e+00 : f32
    %180 = vector.broadcast %cst_49 : f32 to vector<2x64xf32>
    %181 = arith.addf %180, %179 : vector<2x64xf32>
    %182 = arith.divf %180, %181 : vector<2x64xf32>
    %183 = math.tanh %177 : vector<2x64xf32>
    %184 = vector.extract_strided_slice %182 {offsets = [0, 0], sizes = [2, 16], strides = [1, 1]} : vector<2x64xf32> to vector<2x16xf32>
    %185 = vector.extract_strided_slice %182 {offsets = [0, 16], sizes = [2, 16], strides = [1, 1]} : vector<2x64xf32> to vector<2x16xf32>
    %186 = vector.extract_strided_slice %183 {offsets = [0, 32], sizes = [2, 16], strides = [1, 1]} : vector<2x64xf32> to vector<2x16xf32>
    %187 = vector.extract_strided_slice %182 {offsets = [0, 48], sizes = [2, 16], strides = [1, 1]} : vector<2x64xf32> to vector<2x16xf32>
    %188 = arith.mulf %185, %101 : vector<2x16xf32>
    %189 = arith.mulf %184, %186 : vector<2x16xf32>
    %190 = arith.addf %188, %189 : vector<2x16xf32>
    %191 = math.tanh %190 : vector<2x16xf32>
    %192 = arith.mulf %187, %191 : vector<2x16xf32>
    %193 = arith.truncf %192 : vector<2x16xf32> to vector<2x16xbf16>
    %cst_50 = arith.constant dense<0.000000e+00> : vector<2x64xf32>
    %194 = tpu.matmul %193, %7, %cst_50 {dimension_numbers = #tpu.dot_dimension_numbers<[1], [0], [0], [1], [0, 0, 1, 1], [], []>} : vector<2x16xbf16>, vector<16x64xbf16>, vector<2x64xf32> -> vector<2x64xf32>
    %195 = arith.truncf %125 : vector<2x16xf32> to vector<2x16xbf16>
    %cst_51 = arith.constant dense<0.000000e+00> : vector<2x64xf32>
    %196 = tpu.matmul %195, %15, %cst_51 {dimension_numbers = #tpu.dot_dimension_numbers<[1], [0], [0], [1], [0, 0, 1, 1], [], []>} : vector<2x16xbf16>, vector<16x64xbf16>, vector<2x64xf32> -> vector<2x64xf32>
    %197 = arith.addf %194, %196 : vector<2x64xf32>
    %198 = vector.broadcast %19 : vector<1x64xf32> to vector<2x64xf32>
    %199 = arith.addf %197, %198 : vector<2x64xf32>
    %200 = arith.negf %199 : vector<2x64xf32>
    %201 = math.exp %200 : vector<2x64xf32>
    %cst_52 = arith.constant 1.000000e+00 : f32
    %202 = vector.broadcast %cst_52 : f32 to vector<2x64xf32>
    %203 = arith.addf %202, %201 : vector<2x64xf32>
    %204 = arith.divf %202, %203 : vector<2x64xf32>
    %205 = math.tanh %199 : vector<2x64xf32>
    %206 = vector.extract_strided_slice %204 {offsets = [0, 0], sizes = [2, 16], strides = [1, 1]} : vector<2x64xf32> to vector<2x16xf32>
    %207 = vector.extract_strided_slice %204 {offsets = [0, 16], sizes = [2, 16], strides = [1, 1]} : vector<2x64xf32> to vector<2x16xf32>
    %208 = vector.extract_strided_slice %205 {offsets = [0, 32], sizes = [2, 16], strides = [1, 1]} : vector<2x64xf32> to vector<2x16xf32>
    %209 = vector.extract_strided_slice %204 {offsets = [0, 48], sizes = [2, 16], strides = [1, 1]} : vector<2x64xf32> to vector<2x16xf32>
    %210 = arith.mulf %207, %123 : vector<2x16xf32>
    %211 = arith.mulf %206, %208 : vector<2x16xf32>
    %212 = arith.addf %210, %211 : vector<2x16xf32>
    %213 = math.tanh %212 : vector<2x16xf32>
    %214 = arith.mulf %209, %213 : vector<2x16xf32>
    %c0_53 = arith.constant 0 : index
    %c16 = arith.constant 16 : index
    %215 = vector.load %arg0[%c0_53, %c16] : memref<2x64xf32, #tpu.memory_space<vmem>>, vector<2x8xf32>
    %216 = arith.truncf %215 : vector<2x8xf32> to vector<2x8xbf16>
    %cst_54 = arith.constant dense<0.000000e+00> : vector<2x128xf32>
    %217 = tpu.matmul %216, %1, %cst_54 {dimension_numbers = #tpu.dot_dimension_numbers<[1], [0], [0], [1], [0, 0, 1, 1], [], []>} : vector<2x8xbf16>, vector<8x128xbf16>, vector<2x128xf32> -> vector<2x128xf32>
    %218 = arith.truncf %148 : vector<2x32xf32> to vector<2x32xbf16>
    %cst_55 = arith.constant dense<0.000000e+00> : vector<2x128xf32>
    %219 = tpu.matmul %218, %9, %cst_55 {dimension_numbers = #tpu.dot_dimension_numbers<[1], [0], [0], [1], [0, 0, 1, 1], [], []>} : vector<2x32xbf16>, vector<32x128xbf16>, vector<2x128xf32> -> vector<2x128xf32>
    %220 = arith.addf %217, %219 : vector<2x128xf32>
    %221 = vector.broadcast %16 : vector<1x128xf32> to vector<2x128xf32>
    %222 = arith.addf %220, %221 : vector<2x128xf32>
    %223 = arith.negf %222 : vector<2x128xf32>
    %224 = math.exp %223 : vector<2x128xf32>
    %cst_56 = arith.constant 1.000000e+00 : f32
    %225 = vector.broadcast %cst_56 : f32 to vector<2x128xf32>
    %226 = arith.addf %225, %224 : vector<2x128xf32>
    %227 = arith.divf %225, %226 : vector<2x128xf32>
    %228 = math.tanh %222 : vector<2x128xf32>
    %229 = vector.extract_strided_slice %227 {offsets = [0, 0], sizes = [2, 32], strides = [1, 1]} : vector<2x128xf32> to vector<2x32xf32>
    %230 = vector.extract_strided_slice %227 {offsets = [0, 32], sizes = [2, 32], strides = [1, 1]} : vector<2x128xf32> to vector<2x32xf32>
    %231 = vector.extract_strided_slice %228 {offsets = [0, 64], sizes = [2, 32], strides = [1, 1]} : vector<2x128xf32> to vector<2x32xf32>
    %232 = vector.extract_strided_slice %227 {offsets = [0, 96], sizes = [2, 32], strides = [1, 1]} : vector<2x128xf32> to vector<2x32xf32>
    %233 = arith.mulf %230, %146 : vector<2x32xf32>
    %234 = arith.mulf %229, %231 : vector<2x32xf32>
    %235 = arith.addf %233, %234 : vector<2x32xf32>
    %236 = math.tanh %235 : vector<2x32xf32>
    %237 = arith.mulf %232, %236 : vector<2x32xf32>
    %238 = arith.truncf %237 : vector<2x32xf32> to vector<2x32xbf16>
    %cst_57 = arith.constant dense<0.000000e+00> : vector<2x128xf32>
    %239 = tpu.matmul %238, %3, %cst_57 {dimension_numbers = #tpu.dot_dimension_numbers<[1], [0], [0], [1], [0, 0, 1, 1], [], []>} : vector<2x32xbf16>, vector<32x128xbf16>, vector<2x128xf32> -> vector<2x128xf32>
    %240 = arith.truncf %170 : vector<2x32xf32> to vector<2x32xbf16>
    %cst_58 = arith.constant dense<0.000000e+00> : vector<2x128xf32>
    %241 = tpu.matmul %240, %11, %cst_58 {dimension_numbers = #tpu.dot_dimension_numbers<[1], [0], [0], [1], [0, 0, 1, 1], [], []>} : vector<2x32xbf16>, vector<32x128xbf16>, vector<2x128xf32> -> vector<2x128xf32>
    %242 = arith.addf %239, %241 : vector<2x128xf32>
    %243 = vector.broadcast %17 : vector<1x128xf32> to vector<2x128xf32>
    %244 = arith.addf %242, %243 : vector<2x128xf32>
    %245 = arith.negf %244 : vector<2x128xf32>
    %246 = math.exp %245 : vector<2x128xf32>
    %cst_59 = arith.constant 1.000000e+00 : f32
    %247 = vector.broadcast %cst_59 : f32 to vector<2x128xf32>
    %248 = arith.addf %247, %246 : vector<2x128xf32>
    %249 = arith.divf %247, %248 : vector<2x128xf32>
    %250 = math.tanh %244 : vector<2x128xf32>
    %251 = vector.extract_strided_slice %249 {offsets = [0, 0], sizes = [2, 32], strides = [1, 1]} : vector<2x128xf32> to vector<2x32xf32>
    %252 = vector.extract_strided_slice %249 {offsets = [0, 32], sizes = [2, 32], strides = [1, 1]} : vector<2x128xf32> to vector<2x32xf32>
    %253 = vector.extract_strided_slice %250 {offsets = [0, 64], sizes = [2, 32], strides = [1, 1]} : vector<2x128xf32> to vector<2x32xf32>
    %254 = vector.extract_strided_slice %249 {offsets = [0, 96], sizes = [2, 32], strides = [1, 1]} : vector<2x128xf32> to vector<2x32xf32>
    %255 = arith.mulf %252, %168 : vector<2x32xf32>
    %256 = arith.mulf %251, %253 : vector<2x32xf32>
    %257 = arith.addf %255, %256 : vector<2x32xf32>
    %258 = math.tanh %257 : vector<2x32xf32>
    %259 = arith.mulf %254, %258 : vector<2x32xf32>
    %260 = arith.truncf %259 : vector<2x32xf32> to vector<2x32xbf16>
    %cst_60 = arith.constant dense<0.000000e+00> : vector<2x64xf32>
    %261 = tpu.matmul %260, %5, %cst_60 {dimension_numbers = #tpu.dot_dimension_numbers<[1], [0], [0], [1], [0, 0, 1, 1], [], []>} : vector<2x32xbf16>, vector<32x64xbf16>, vector<2x64xf32> -> vector<2x64xf32>
    %262 = arith.truncf %192 : vector<2x16xf32> to vector<2x16xbf16>
    %cst_61 = arith.constant dense<0.000000e+00> : vector<2x64xf32>
    %263 = tpu.matmul %262, %13, %cst_61 {dimension_numbers = #tpu.dot_dimension_numbers<[1], [0], [0], [1], [0, 0, 1, 1], [], []>} : vector<2x16xbf16>, vector<16x64xbf16>, vector<2x64xf32> -> vector<2x64xf32>
    %264 = arith.addf %261, %263 : vector<2x64xf32>
    %265 = vector.broadcast %18 : vector<1x64xf32> to vector<2x64xf32>
    %266 = arith.addf %264, %265 : vector<2x64xf32>
    %267 = arith.negf %266 : vector<2x64xf32>
    %268 = math.exp %267 : vector<2x64xf32>
    %cst_62 = arith.constant 1.000000e+00 : f32
    %269 = vector.broadcast %cst_62 : f32 to vector<2x64xf32>
    %270 = arith.addf %269, %268 : vector<2x64xf32>
    %271 = arith.divf %269, %270 : vector<2x64xf32>
    %272 = math.tanh %266 : vector<2x64xf32>
    %273 = vector.extract_strided_slice %271 {offsets = [0, 0], sizes = [2, 16], strides = [1, 1]} : vector<2x64xf32> to vector<2x16xf32>
    %274 = vector.extract_strided_slice %271 {offsets = [0, 16], sizes = [2, 16], strides = [1, 1]} : vector<2x64xf32> to vector<2x16xf32>
    %275 = vector.extract_strided_slice %272 {offsets = [0, 32], sizes = [2, 16], strides = [1, 1]} : vector<2x64xf32> to vector<2x16xf32>
    %276 = vector.extract_strided_slice %271 {offsets = [0, 48], sizes = [2, 16], strides = [1, 1]} : vector<2x64xf32> to vector<2x16xf32>
    %277 = arith.mulf %274, %190 : vector<2x16xf32>
    %278 = arith.mulf %273, %275 : vector<2x16xf32>
    %279 = arith.addf %277, %278 : vector<2x16xf32>
    %280 = math.tanh %279 : vector<2x16xf32>
    %281 = arith.mulf %276, %280 : vector<2x16xf32>
    %282 = arith.truncf %281 : vector<2x16xf32> to vector<2x16xbf16>
    %cst_63 = arith.constant dense<0.000000e+00> : vector<2x64xf32>
    %283 = tpu.matmul %282, %7, %cst_63 {dimension_numbers = #tpu.dot_dimension_numbers<[1], [0], [0], [1], [0, 0, 1, 1], [], []>} : vector<2x16xbf16>, vector<16x64xbf16>, vector<2x64xf32> -> vector<2x64xf32>
    %284 = arith.truncf %214 : vector<2x16xf32> to vector<2x16xbf16>
    %cst_64 = arith.constant dense<0.000000e+00> : vector<2x64xf32>
    %285 = tpu.matmul %284, %15, %cst_64 {dimension_numbers = #tpu.dot_dimension_numbers<[1], [0], [0], [1], [0, 0, 1, 1], [], []>} : vector<2x16xbf16>, vector<16x64xbf16>, vector<2x64xf32> -> vector<2x64xf32>
    %286 = arith.addf %283, %285 : vector<2x64xf32>
    %287 = vector.broadcast %19 : vector<1x64xf32> to vector<2x64xf32>
    %288 = arith.addf %286, %287 : vector<2x64xf32>
    %289 = arith.negf %288 : vector<2x64xf32>
    %290 = math.exp %289 : vector<2x64xf32>
    %cst_65 = arith.constant 1.000000e+00 : f32
    %291 = vector.broadcast %cst_65 : f32 to vector<2x64xf32>
    %292 = arith.addf %291, %290 : vector<2x64xf32>
    %293 = arith.divf %291, %292 : vector<2x64xf32>
    %294 = math.tanh %288 : vector<2x64xf32>
    %295 = vector.extract_strided_slice %293 {offsets = [0, 0], sizes = [2, 16], strides = [1, 1]} : vector<2x64xf32> to vector<2x16xf32>
    %296 = vector.extract_strided_slice %293 {offsets = [0, 16], sizes = [2, 16], strides = [1, 1]} : vector<2x64xf32> to vector<2x16xf32>
    %297 = vector.extract_strided_slice %294 {offsets = [0, 32], sizes = [2, 16], strides = [1, 1]} : vector<2x64xf32> to vector<2x16xf32>
    %298 = vector.extract_strided_slice %293 {offsets = [0, 48], sizes = [2, 16], strides = [1, 1]} : vector<2x64xf32> to vector<2x16xf32>
    %299 = arith.mulf %296, %212 : vector<2x16xf32>
    %300 = arith.mulf %295, %297 : vector<2x16xf32>
    %301 = arith.addf %299, %300 : vector<2x16xf32>
    %302 = math.tanh %301 : vector<2x16xf32>
    %303 = arith.mulf %298, %302 : vector<2x16xf32>
    %c0_66 = arith.constant 0 : index
    %c24 = arith.constant 24 : index
    %304 = vector.load %arg0[%c0_66, %c24] : memref<2x64xf32, #tpu.memory_space<vmem>>, vector<2x8xf32>
    %305 = arith.truncf %304 : vector<2x8xf32> to vector<2x8xbf16>
    %cst_67 = arith.constant dense<0.000000e+00> : vector<2x128xf32>
    %306 = tpu.matmul %305, %1, %cst_67 {dimension_numbers = #tpu.dot_dimension_numbers<[1], [0], [0], [1], [0, 0, 1, 1], [], []>} : vector<2x8xbf16>, vector<8x128xbf16>, vector<2x128xf32> -> vector<2x128xf32>
    %307 = arith.truncf %237 : vector<2x32xf32> to vector<2x32xbf16>
    %cst_68 = arith.constant dense<0.000000e+00> : vector<2x128xf32>
    %308 = tpu.matmul %307, %9, %cst_68 {dimension_numbers = #tpu.dot_dimension_numbers<[1], [0], [0], [1], [0, 0, 1, 1], [], []>} : vector<2x32xbf16>, vector<32x128xbf16>, vector<2x128xf32> -> vector<2x128xf32>
    %309 = arith.addf %306, %308 : vector<2x128xf32>
    %310 = vector.broadcast %16 : vector<1x128xf32> to vector<2x128xf32>
    %311 = arith.addf %309, %310 : vector<2x128xf32>
    %312 = arith.negf %311 : vector<2x128xf32>
    %313 = math.exp %312 : vector<2x128xf32>
    %cst_69 = arith.constant 1.000000e+00 : f32
    %314 = vector.broadcast %cst_69 : f32 to vector<2x128xf32>
    %315 = arith.addf %314, %313 : vector<2x128xf32>
    %316 = arith.divf %314, %315 : vector<2x128xf32>
    %317 = math.tanh %311 : vector<2x128xf32>
    %318 = vector.extract_strided_slice %316 {offsets = [0, 0], sizes = [2, 32], strides = [1, 1]} : vector<2x128xf32> to vector<2x32xf32>
    %319 = vector.extract_strided_slice %316 {offsets = [0, 32], sizes = [2, 32], strides = [1, 1]} : vector<2x128xf32> to vector<2x32xf32>
    %320 = vector.extract_strided_slice %317 {offsets = [0, 64], sizes = [2, 32], strides = [1, 1]} : vector<2x128xf32> to vector<2x32xf32>
    %321 = vector.extract_strided_slice %316 {offsets = [0, 96], sizes = [2, 32], strides = [1, 1]} : vector<2x128xf32> to vector<2x32xf32>
    %322 = arith.mulf %319, %235 : vector<2x32xf32>
    %323 = arith.mulf %318, %320 : vector<2x32xf32>
    %324 = arith.addf %322, %323 : vector<2x32xf32>
    %325 = math.tanh %324 : vector<2x32xf32>
    %326 = arith.mulf %321, %325 : vector<2x32xf32>
    %327 = arith.truncf %326 : vector<2x32xf32> to vector<2x32xbf16>
    %cst_70 = arith.constant dense<0.000000e+00> : vector<2x128xf32>
    %328 = tpu.matmul %327, %3, %cst_70 {dimension_numbers = #tpu.dot_dimension_numbers<[1], [0], [0], [1], [0, 0, 1, 1], [], []>} : vector<2x32xbf16>, vector<32x128xbf16>, vector<2x128xf32> -> vector<2x128xf32>
    %329 = arith.truncf %259 : vector<2x32xf32> to vector<2x32xbf16>
    %cst_71 = arith.constant dense<0.000000e+00> : vector<2x128xf32>
    %330 = tpu.matmul %329, %11, %cst_71 {dimension_numbers = #tpu.dot_dimension_numbers<[1], [0], [0], [1], [0, 0, 1, 1], [], []>} : vector<2x32xbf16>, vector<32x128xbf16>, vector<2x128xf32> -> vector<2x128xf32>
    %331 = arith.addf %328, %330 : vector<2x128xf32>
    %332 = vector.broadcast %17 : vector<1x128xf32> to vector<2x128xf32>
    %333 = arith.addf %331, %332 : vector<2x128xf32>
    %334 = arith.negf %333 : vector<2x128xf32>
    %335 = math.exp %334 : vector<2x128xf32>
    %cst_72 = arith.constant 1.000000e+00 : f32
    %336 = vector.broadcast %cst_72 : f32 to vector<2x128xf32>
    %337 = arith.addf %336, %335 : vector<2x128xf32>
    %338 = arith.divf %336, %337 : vector<2x128xf32>
    %339 = math.tanh %333 : vector<2x128xf32>
    %340 = vector.extract_strided_slice %338 {offsets = [0, 0], sizes = [2, 32], strides = [1, 1]} : vector<2x128xf32> to vector<2x32xf32>
    %341 = vector.extract_strided_slice %338 {offsets = [0, 32], sizes = [2, 32], strides = [1, 1]} : vector<2x128xf32> to vector<2x32xf32>
    %342 = vector.extract_strided_slice %339 {offsets = [0, 64], sizes = [2, 32], strides = [1, 1]} : vector<2x128xf32> to vector<2x32xf32>
    %343 = vector.extract_strided_slice %338 {offsets = [0, 96], sizes = [2, 32], strides = [1, 1]} : vector<2x128xf32> to vector<2x32xf32>
    %344 = arith.mulf %341, %257 : vector<2x32xf32>
    %345 = arith.mulf %340, %342 : vector<2x32xf32>
    %346 = arith.addf %344, %345 : vector<2x32xf32>
    %347 = math.tanh %346 : vector<2x32xf32>
    %348 = arith.mulf %343, %347 : vector<2x32xf32>
    %349 = arith.truncf %348 : vector<2x32xf32> to vector<2x32xbf16>
    %cst_73 = arith.constant dense<0.000000e+00> : vector<2x64xf32>
    %350 = tpu.matmul %349, %5, %cst_73 {dimension_numbers = #tpu.dot_dimension_numbers<[1], [0], [0], [1], [0, 0, 1, 1], [], []>} : vector<2x32xbf16>, vector<32x64xbf16>, vector<2x64xf32> -> vector<2x64xf32>
    %351 = arith.truncf %281 : vector<2x16xf32> to vector<2x16xbf16>
    %cst_74 = arith.constant dense<0.000000e+00> : vector<2x64xf32>
    %352 = tpu.matmul %351, %13, %cst_74 {dimension_numbers = #tpu.dot_dimension_numbers<[1], [0], [0], [1], [0, 0, 1, 1], [], []>} : vector<2x16xbf16>, vector<16x64xbf16>, vector<2x64xf32> -> vector<2x64xf32>
    %353 = arith.addf %350, %352 : vector<2x64xf32>
    %354 = vector.broadcast %18 : vector<1x64xf32> to vector<2x64xf32>
    %355 = arith.addf %353, %354 : vector<2x64xf32>
    %356 = arith.negf %355 : vector<2x64xf32>
    %357 = math.exp %356 : vector<2x64xf32>
    %cst_75 = arith.constant 1.000000e+00 : f32
    %358 = vector.broadcast %cst_75 : f32 to vector<2x64xf32>
    %359 = arith.addf %358, %357 : vector<2x64xf32>
    %360 = arith.divf %358, %359 : vector<2x64xf32>
    %361 = math.tanh %355 : vector<2x64xf32>
    %362 = vector.extract_strided_slice %360 {offsets = [0, 0], sizes = [2, 16], strides = [1, 1]} : vector<2x64xf32> to vector<2x16xf32>
    %363 = vector.extract_strided_slice %360 {offsets = [0, 16], sizes = [2, 16], strides = [1, 1]} : vector<2x64xf32> to vector<2x16xf32>
    %364 = vector.extract_strided_slice %361 {offsets = [0, 32], sizes = [2, 16], strides = [1, 1]} : vector<2x64xf32> to vector<2x16xf32>
    %365 = vector.extract_strided_slice %360 {offsets = [0, 48], sizes = [2, 16], strides = [1, 1]} : vector<2x64xf32> to vector<2x16xf32>
    %366 = arith.mulf %363, %279 : vector<2x16xf32>
    %367 = arith.mulf %362, %364 : vector<2x16xf32>
    %368 = arith.addf %366, %367 : vector<2x16xf32>
    %369 = math.tanh %368 : vector<2x16xf32>
    %370 = arith.mulf %365, %369 : vector<2x16xf32>
    %371 = arith.truncf %370 : vector<2x16xf32> to vector<2x16xbf16>
    %cst_76 = arith.constant dense<0.000000e+00> : vector<2x64xf32>
    %372 = tpu.matmul %371, %7, %cst_76 {dimension_numbers = #tpu.dot_dimension_numbers<[1], [0], [0], [1], [0, 0, 1, 1], [], []>} : vector<2x16xbf16>, vector<16x64xbf16>, vector<2x64xf32> -> vector<2x64xf32>
    %373 = arith.truncf %303 : vector<2x16xf32> to vector<2x16xbf16>
    %cst_77 = arith.constant dense<0.000000e+00> : vector<2x64xf32>
    %374 = tpu.matmul %373, %15, %cst_77 {dimension_numbers = #tpu.dot_dimension_numbers<[1], [0], [0], [1], [0, 0, 1, 1], [], []>} : vector<2x16xbf16>, vector<16x64xbf16>, vector<2x64xf32> -> vector<2x64xf32>
    %375 = arith.addf %372, %374 : vector<2x64xf32>
    %376 = vector.broadcast %19 : vector<1x64xf32> to vector<2x64xf32>
    %377 = arith.addf %375, %376 : vector<2x64xf32>
    %378 = arith.negf %377 : vector<2x64xf32>
    %379 = math.exp %378 : vector<2x64xf32>
    %cst_78 = arith.constant 1.000000e+00 : f32
    %380 = vector.broadcast %cst_78 : f32 to vector<2x64xf32>
    %381 = arith.addf %380, %379 : vector<2x64xf32>
    %382 = arith.divf %380, %381 : vector<2x64xf32>
    %383 = math.tanh %377 : vector<2x64xf32>
    %384 = vector.extract_strided_slice %382 {offsets = [0, 0], sizes = [2, 16], strides = [1, 1]} : vector<2x64xf32> to vector<2x16xf32>
    %385 = vector.extract_strided_slice %382 {offsets = [0, 16], sizes = [2, 16], strides = [1, 1]} : vector<2x64xf32> to vector<2x16xf32>
    %386 = vector.extract_strided_slice %383 {offsets = [0, 32], sizes = [2, 16], strides = [1, 1]} : vector<2x64xf32> to vector<2x16xf32>
    %387 = vector.extract_strided_slice %382 {offsets = [0, 48], sizes = [2, 16], strides = [1, 1]} : vector<2x64xf32> to vector<2x16xf32>
    %388 = arith.mulf %385, %301 : vector<2x16xf32>
    %389 = arith.mulf %384, %386 : vector<2x16xf32>
    %390 = arith.addf %388, %389 : vector<2x16xf32>
    %391 = math.tanh %390 : vector<2x16xf32>
    %392 = arith.mulf %387, %391 : vector<2x16xf32>
    %c0_79 = arith.constant 0 : index
    %c32 = arith.constant 32 : index
    %393 = vector.load %arg0[%c0_79, %c32] : memref<2x64xf32, #tpu.memory_space<vmem>>, vector<2x8xf32>
    %394 = arith.truncf %393 : vector<2x8xf32> to vector<2x8xbf16>
    %cst_80 = arith.constant dense<0.000000e+00> : vector<2x128xf32>
    %395 = tpu.matmul %394, %1, %cst_80 {dimension_numbers = #tpu.dot_dimension_numbers<[1], [0], [0], [1], [0, 0, 1, 1], [], []>} : vector<2x8xbf16>, vector<8x128xbf16>, vector<2x128xf32> -> vector<2x128xf32>
    %396 = arith.truncf %326 : vector<2x32xf32> to vector<2x32xbf16>
    %cst_81 = arith.constant dense<0.000000e+00> : vector<2x128xf32>
    %397 = tpu.matmul %396, %9, %cst_81 {dimension_numbers = #tpu.dot_dimension_numbers<[1], [0], [0], [1], [0, 0, 1, 1], [], []>} : vector<2x32xbf16>, vector<32x128xbf16>, vector<2x128xf32> -> vector<2x128xf32>
    %398 = arith.addf %395, %397 : vector<2x128xf32>
    %399 = vector.broadcast %16 : vector<1x128xf32> to vector<2x128xf32>
    %400 = arith.addf %398, %399 : vector<2x128xf32>
    %401 = arith.negf %400 : vector<2x128xf32>
    %402 = math.exp %401 : vector<2x128xf32>
    %cst_82 = arith.constant 1.000000e+00 : f32
    %403 = vector.broadcast %cst_82 : f32 to vector<2x128xf32>
    %404 = arith.addf %403, %402 : vector<2x128xf32>
    %405 = arith.divf %403, %404 : vector<2x128xf32>
    %406 = math.tanh %400 : vector<2x128xf32>
    %407 = vector.extract_strided_slice %405 {offsets = [0, 0], sizes = [2, 32], strides = [1, 1]} : vector<2x128xf32> to vector<2x32xf32>
    %408 = vector.extract_strided_slice %405 {offsets = [0, 32], sizes = [2, 32], strides = [1, 1]} : vector<2x128xf32> to vector<2x32xf32>
    %409 = vector.extract_strided_slice %406 {offsets = [0, 64], sizes = [2, 32], strides = [1, 1]} : vector<2x128xf32> to vector<2x32xf32>
    %410 = vector.extract_strided_slice %405 {offsets = [0, 96], sizes = [2, 32], strides = [1, 1]} : vector<2x128xf32> to vector<2x32xf32>
    %411 = arith.mulf %408, %324 : vector<2x32xf32>
    %412 = arith.mulf %407, %409 : vector<2x32xf32>
    %413 = arith.addf %411, %412 : vector<2x32xf32>
    %414 = math.tanh %413 : vector<2x32xf32>
    %415 = arith.mulf %410, %414 : vector<2x32xf32>
    %416 = arith.truncf %415 : vector<2x32xf32> to vector<2x32xbf16>
    %cst_83 = arith.constant dense<0.000000e+00> : vector<2x128xf32>
    %417 = tpu.matmul %416, %3, %cst_83 {dimension_numbers = #tpu.dot_dimension_numbers<[1], [0], [0], [1], [0, 0, 1, 1], [], []>} : vector<2x32xbf16>, vector<32x128xbf16>, vector<2x128xf32> -> vector<2x128xf32>
    %418 = arith.truncf %348 : vector<2x32xf32> to vector<2x32xbf16>
    %cst_84 = arith.constant dense<0.000000e+00> : vector<2x128xf32>
    %419 = tpu.matmul %418, %11, %cst_84 {dimension_numbers = #tpu.dot_dimension_numbers<[1], [0], [0], [1], [0, 0, 1, 1], [], []>} : vector<2x32xbf16>, vector<32x128xbf16>, vector<2x128xf32> -> vector<2x128xf32>
    %420 = arith.addf %417, %419 : vector<2x128xf32>
    %421 = vector.broadcast %17 : vector<1x128xf32> to vector<2x128xf32>
    %422 = arith.addf %420, %421 : vector<2x128xf32>
    %423 = arith.negf %422 : vector<2x128xf32>
    %424 = math.exp %423 : vector<2x128xf32>
    %cst_85 = arith.constant 1.000000e+00 : f32
    %425 = vector.broadcast %cst_85 : f32 to vector<2x128xf32>
    %426 = arith.addf %425, %424 : vector<2x128xf32>
    %427 = arith.divf %425, %426 : vector<2x128xf32>
    %428 = math.tanh %422 : vector<2x128xf32>
    %429 = vector.extract_strided_slice %427 {offsets = [0, 0], sizes = [2, 32], strides = [1, 1]} : vector<2x128xf32> to vector<2x32xf32>
    %430 = vector.extract_strided_slice %427 {offsets = [0, 32], sizes = [2, 32], strides = [1, 1]} : vector<2x128xf32> to vector<2x32xf32>
    %431 = vector.extract_strided_slice %428 {offsets = [0, 64], sizes = [2, 32], strides = [1, 1]} : vector<2x128xf32> to vector<2x32xf32>
    %432 = vector.extract_strided_slice %427 {offsets = [0, 96], sizes = [2, 32], strides = [1, 1]} : vector<2x128xf32> to vector<2x32xf32>
    %433 = arith.mulf %430, %346 : vector<2x32xf32>
    %434 = arith.mulf %429, %431 : vector<2x32xf32>
    %435 = arith.addf %433, %434 : vector<2x32xf32>
    %436 = math.tanh %435 : vector<2x32xf32>
    %437 = arith.mulf %432, %436 : vector<2x32xf32>
    %438 = arith.truncf %437 : vector<2x32xf32> to vector<2x32xbf16>
    %cst_86 = arith.constant dense<0.000000e+00> : vector<2x64xf32>
    %439 = tpu.matmul %438, %5, %cst_86 {dimension_numbers = #tpu.dot_dimension_numbers<[1], [0], [0], [1], [0, 0, 1, 1], [], []>} : vector<2x32xbf16>, vector<32x64xbf16>, vector<2x64xf32> -> vector<2x64xf32>
    %440 = arith.truncf %370 : vector<2x16xf32> to vector<2x16xbf16>
    %cst_87 = arith.constant dense<0.000000e+00> : vector<2x64xf32>
    %441 = tpu.matmul %440, %13, %cst_87 {dimension_numbers = #tpu.dot_dimension_numbers<[1], [0], [0], [1], [0, 0, 1, 1], [], []>} : vector<2x16xbf16>, vector<16x64xbf16>, vector<2x64xf32> -> vector<2x64xf32>
    %442 = arith.addf %439, %441 : vector<2x64xf32>
    %443 = vector.broadcast %18 : vector<1x64xf32> to vector<2x64xf32>
    %444 = arith.addf %442, %443 : vector<2x64xf32>
    %445 = arith.negf %444 : vector<2x64xf32>
    %446 = math.exp %445 : vector<2x64xf32>
    %cst_88 = arith.constant 1.000000e+00 : f32
    %447 = vector.broadcast %cst_88 : f32 to vector<2x64xf32>
    %448 = arith.addf %447, %446 : vector<2x64xf32>
    %449 = arith.divf %447, %448 : vector<2x64xf32>
    %450 = math.tanh %444 : vector<2x64xf32>
    %451 = vector.extract_strided_slice %449 {offsets = [0, 0], sizes = [2, 16], strides = [1, 1]} : vector<2x64xf32> to vector<2x16xf32>
    %452 = vector.extract_strided_slice %449 {offsets = [0, 16], sizes = [2, 16], strides = [1, 1]} : vector<2x64xf32> to vector<2x16xf32>
    %453 = vector.extract_strided_slice %450 {offsets = [0, 32], sizes = [2, 16], strides = [1, 1]} : vector<2x64xf32> to vector<2x16xf32>
    %454 = vector.extract_strided_slice %449 {offsets = [0, 48], sizes = [2, 16], strides = [1, 1]} : vector<2x64xf32> to vector<2x16xf32>
    %455 = arith.mulf %452, %368 : vector<2x16xf32>
    %456 = arith.mulf %451, %453 : vector<2x16xf32>
    %457 = arith.addf %455, %456 : vector<2x16xf32>
    %458 = math.tanh %457 : vector<2x16xf32>
    %459 = arith.mulf %454, %458 : vector<2x16xf32>
    %460 = arith.truncf %459 : vector<2x16xf32> to vector<2x16xbf16>
    %cst_89 = arith.constant dense<0.000000e+00> : vector<2x64xf32>
    %461 = tpu.matmul %460, %7, %cst_89 {dimension_numbers = #tpu.dot_dimension_numbers<[1], [0], [0], [1], [0, 0, 1, 1], [], []>} : vector<2x16xbf16>, vector<16x64xbf16>, vector<2x64xf32> -> vector<2x64xf32>
    %462 = arith.truncf %392 : vector<2x16xf32> to vector<2x16xbf16>
    %cst_90 = arith.constant dense<0.000000e+00> : vector<2x64xf32>
    %463 = tpu.matmul %462, %15, %cst_90 {dimension_numbers = #tpu.dot_dimension_numbers<[1], [0], [0], [1], [0, 0, 1, 1], [], []>} : vector<2x16xbf16>, vector<16x64xbf16>, vector<2x64xf32> -> vector<2x64xf32>
    %464 = arith.addf %461, %463 : vector<2x64xf32>
    %465 = vector.broadcast %19 : vector<1x64xf32> to vector<2x64xf32>
    %466 = arith.addf %464, %465 : vector<2x64xf32>
    %467 = arith.negf %466 : vector<2x64xf32>
    %468 = math.exp %467 : vector<2x64xf32>
    %cst_91 = arith.constant 1.000000e+00 : f32
    %469 = vector.broadcast %cst_91 : f32 to vector<2x64xf32>
    %470 = arith.addf %469, %468 : vector<2x64xf32>
    %471 = arith.divf %469, %470 : vector<2x64xf32>
    %472 = math.tanh %466 : vector<2x64xf32>
    %473 = vector.extract_strided_slice %471 {offsets = [0, 0], sizes = [2, 16], strides = [1, 1]} : vector<2x64xf32> to vector<2x16xf32>
    %474 = vector.extract_strided_slice %471 {offsets = [0, 16], sizes = [2, 16], strides = [1, 1]} : vector<2x64xf32> to vector<2x16xf32>
    %475 = vector.extract_strided_slice %472 {offsets = [0, 32], sizes = [2, 16], strides = [1, 1]} : vector<2x64xf32> to vector<2x16xf32>
    %476 = vector.extract_strided_slice %471 {offsets = [0, 48], sizes = [2, 16], strides = [1, 1]} : vector<2x64xf32> to vector<2x16xf32>
    %477 = arith.mulf %474, %390 : vector<2x16xf32>
    %478 = arith.mulf %473, %475 : vector<2x16xf32>
    %479 = arith.addf %477, %478 : vector<2x16xf32>
    %480 = math.tanh %479 : vector<2x16xf32>
    %481 = arith.mulf %476, %480 : vector<2x16xf32>
    %c0_92 = arith.constant 0 : index
    %c40_93 = arith.constant 40 : index
    %482 = vector.load %arg0[%c0_92, %c40_93] : memref<2x64xf32, #tpu.memory_space<vmem>>, vector<2x8xf32>
    %483 = arith.truncf %482 : vector<2x8xf32> to vector<2x8xbf16>
    %cst_94 = arith.constant dense<0.000000e+00> : vector<2x128xf32>
    %484 = tpu.matmul %483, %1, %cst_94 {dimension_numbers = #tpu.dot_dimension_numbers<[1], [0], [0], [1], [0, 0, 1, 1], [], []>} : vector<2x8xbf16>, vector<8x128xbf16>, vector<2x128xf32> -> vector<2x128xf32>
    %485 = arith.truncf %415 : vector<2x32xf32> to vector<2x32xbf16>
    %cst_95 = arith.constant dense<0.000000e+00> : vector<2x128xf32>
    %486 = tpu.matmul %485, %9, %cst_95 {dimension_numbers = #tpu.dot_dimension_numbers<[1], [0], [0], [1], [0, 0, 1, 1], [], []>} : vector<2x32xbf16>, vector<32x128xbf16>, vector<2x128xf32> -> vector<2x128xf32>
    %487 = arith.addf %484, %486 : vector<2x128xf32>
    %488 = vector.broadcast %16 : vector<1x128xf32> to vector<2x128xf32>
    %489 = arith.addf %487, %488 : vector<2x128xf32>
    %490 = arith.negf %489 : vector<2x128xf32>
    %491 = math.exp %490 : vector<2x128xf32>
    %cst_96 = arith.constant 1.000000e+00 : f32
    %492 = vector.broadcast %cst_96 : f32 to vector<2x128xf32>
    %493 = arith.addf %492, %491 : vector<2x128xf32>
    %494 = arith.divf %492, %493 : vector<2x128xf32>
    %495 = math.tanh %489 : vector<2x128xf32>
    %496 = vector.extract_strided_slice %494 {offsets = [0, 0], sizes = [2, 32], strides = [1, 1]} : vector<2x128xf32> to vector<2x32xf32>
    %497 = vector.extract_strided_slice %494 {offsets = [0, 32], sizes = [2, 32], strides = [1, 1]} : vector<2x128xf32> to vector<2x32xf32>
    %498 = vector.extract_strided_slice %495 {offsets = [0, 64], sizes = [2, 32], strides = [1, 1]} : vector<2x128xf32> to vector<2x32xf32>
    %499 = vector.extract_strided_slice %494 {offsets = [0, 96], sizes = [2, 32], strides = [1, 1]} : vector<2x128xf32> to vector<2x32xf32>
    %500 = arith.mulf %497, %413 : vector<2x32xf32>
    %501 = arith.mulf %496, %498 : vector<2x32xf32>
    %502 = arith.addf %500, %501 : vector<2x32xf32>
    %503 = math.tanh %502 : vector<2x32xf32>
    %504 = arith.mulf %499, %503 : vector<2x32xf32>
    %505 = arith.truncf %504 : vector<2x32xf32> to vector<2x32xbf16>
    %cst_97 = arith.constant dense<0.000000e+00> : vector<2x128xf32>
    %506 = tpu.matmul %505, %3, %cst_97 {dimension_numbers = #tpu.dot_dimension_numbers<[1], [0], [0], [1], [0, 0, 1, 1], [], []>} : vector<2x32xbf16>, vector<32x128xbf16>, vector<2x128xf32> -> vector<2x128xf32>
    %507 = arith.truncf %437 : vector<2x32xf32> to vector<2x32xbf16>
    %cst_98 = arith.constant dense<0.000000e+00> : vector<2x128xf32>
    %508 = tpu.matmul %507, %11, %cst_98 {dimension_numbers = #tpu.dot_dimension_numbers<[1], [0], [0], [1], [0, 0, 1, 1], [], []>} : vector<2x32xbf16>, vector<32x128xbf16>, vector<2x128xf32> -> vector<2x128xf32>
    %509 = arith.addf %506, %508 : vector<2x128xf32>
    %510 = vector.broadcast %17 : vector<1x128xf32> to vector<2x128xf32>
    %511 = arith.addf %509, %510 : vector<2x128xf32>
    %512 = arith.negf %511 : vector<2x128xf32>
    %513 = math.exp %512 : vector<2x128xf32>
    %cst_99 = arith.constant 1.000000e+00 : f32
    %514 = vector.broadcast %cst_99 : f32 to vector<2x128xf32>
    %515 = arith.addf %514, %513 : vector<2x128xf32>
    %516 = arith.divf %514, %515 : vector<2x128xf32>
    %517 = math.tanh %511 : vector<2x128xf32>
    %518 = vector.extract_strided_slice %516 {offsets = [0, 0], sizes = [2, 32], strides = [1, 1]} : vector<2x128xf32> to vector<2x32xf32>
    %519 = vector.extract_strided_slice %516 {offsets = [0, 32], sizes = [2, 32], strides = [1, 1]} : vector<2x128xf32> to vector<2x32xf32>
    %520 = vector.extract_strided_slice %517 {offsets = [0, 64], sizes = [2, 32], strides = [1, 1]} : vector<2x128xf32> to vector<2x32xf32>
    %521 = vector.extract_strided_slice %516 {offsets = [0, 96], sizes = [2, 32], strides = [1, 1]} : vector<2x128xf32> to vector<2x32xf32>
    %522 = arith.mulf %519, %435 : vector<2x32xf32>
    %523 = arith.mulf %518, %520 : vector<2x32xf32>
    %524 = arith.addf %522, %523 : vector<2x32xf32>
    %525 = math.tanh %524 : vector<2x32xf32>
    %526 = arith.mulf %521, %525 : vector<2x32xf32>
    %527 = arith.truncf %526 : vector<2x32xf32> to vector<2x32xbf16>
    %cst_100 = arith.constant dense<0.000000e+00> : vector<2x64xf32>
    %528 = tpu.matmul %527, %5, %cst_100 {dimension_numbers = #tpu.dot_dimension_numbers<[1], [0], [0], [1], [0, 0, 1, 1], [], []>} : vector<2x32xbf16>, vector<32x64xbf16>, vector<2x64xf32> -> vector<2x64xf32>
    %529 = arith.truncf %459 : vector<2x16xf32> to vector<2x16xbf16>
    %cst_101 = arith.constant dense<0.000000e+00> : vector<2x64xf32>
    %530 = tpu.matmul %529, %13, %cst_101 {dimension_numbers = #tpu.dot_dimension_numbers<[1], [0], [0], [1], [0, 0, 1, 1], [], []>} : vector<2x16xbf16>, vector<16x64xbf16>, vector<2x64xf32> -> vector<2x64xf32>
    %531 = arith.addf %528, %530 : vector<2x64xf32>
    %532 = vector.broadcast %18 : vector<1x64xf32> to vector<2x64xf32>
    %533 = arith.addf %531, %532 : vector<2x64xf32>
    %534 = arith.negf %533 : vector<2x64xf32>
    %535 = math.exp %534 : vector<2x64xf32>
    %cst_102 = arith.constant 1.000000e+00 : f32
    %536 = vector.broadcast %cst_102 : f32 to vector<2x64xf32>
    %537 = arith.addf %536, %535 : vector<2x64xf32>
    %538 = arith.divf %536, %537 : vector<2x64xf32>
    %539 = math.tanh %533 : vector<2x64xf32>
    %540 = vector.extract_strided_slice %538 {offsets = [0, 0], sizes = [2, 16], strides = [1, 1]} : vector<2x64xf32> to vector<2x16xf32>
    %541 = vector.extract_strided_slice %538 {offsets = [0, 16], sizes = [2, 16], strides = [1, 1]} : vector<2x64xf32> to vector<2x16xf32>
    %542 = vector.extract_strided_slice %539 {offsets = [0, 32], sizes = [2, 16], strides = [1, 1]} : vector<2x64xf32> to vector<2x16xf32>
    %543 = vector.extract_strided_slice %538 {offsets = [0, 48], sizes = [2, 16], strides = [1, 1]} : vector<2x64xf32> to vector<2x16xf32>
    %544 = arith.mulf %541, %457 : vector<2x16xf32>
    %545 = arith.mulf %540, %542 : vector<2x16xf32>
    %546 = arith.addf %544, %545 : vector<2x16xf32>
    %547 = math.tanh %546 : vector<2x16xf32>
    %548 = arith.mulf %543, %547 : vector<2x16xf32>
    %549 = arith.truncf %548 : vector<2x16xf32> to vector<2x16xbf16>
    %cst_103 = arith.constant dense<0.000000e+00> : vector<2x64xf32>
    %550 = tpu.matmul %549, %7, %cst_103 {dimension_numbers = #tpu.dot_dimension_numbers<[1], [0], [0], [1], [0, 0, 1, 1], [], []>} : vector<2x16xbf16>, vector<16x64xbf16>, vector<2x64xf32> -> vector<2x64xf32>
    %551 = arith.truncf %481 : vector<2x16xf32> to vector<2x16xbf16>
    %cst_104 = arith.constant dense<0.000000e+00> : vector<2x64xf32>
    %552 = tpu.matmul %551, %15, %cst_104 {dimension_numbers = #tpu.dot_dimension_numbers<[1], [0], [0], [1], [0, 0, 1, 1], [], []>} : vector<2x16xbf16>, vector<16x64xbf16>, vector<2x64xf32> -> vector<2x64xf32>
    %553 = arith.addf %550, %552 : vector<2x64xf32>
    %554 = vector.broadcast %19 : vector<1x64xf32> to vector<2x64xf32>
    %555 = arith.addf %553, %554 : vector<2x64xf32>
    %556 = arith.negf %555 : vector<2x64xf32>
    %557 = math.exp %556 : vector<2x64xf32>
    %cst_105 = arith.constant 1.000000e+00 : f32
    %558 = vector.broadcast %cst_105 : f32 to vector<2x64xf32>
    %559 = arith.addf %558, %557 : vector<2x64xf32>
    %560 = arith.divf %558, %559 : vector<2x64xf32>
    %561 = math.tanh %555 : vector<2x64xf32>
    %562 = vector.extract_strided_slice %560 {offsets = [0, 0], sizes = [2, 16], strides = [1, 1]} : vector<2x64xf32> to vector<2x16xf32>
    %563 = vector.extract_strided_slice %560 {offsets = [0, 16], sizes = [2, 16], strides = [1, 1]} : vector<2x64xf32> to vector<2x16xf32>
    %564 = vector.extract_strided_slice %561 {offsets = [0, 32], sizes = [2, 16], strides = [1, 1]} : vector<2x64xf32> to vector<2x16xf32>
    %565 = vector.extract_strided_slice %560 {offsets = [0, 48], sizes = [2, 16], strides = [1, 1]} : vector<2x64xf32> to vector<2x16xf32>
    %566 = arith.mulf %563, %479 : vector<2x16xf32>
    %567 = arith.mulf %562, %564 : vector<2x16xf32>
    %568 = arith.addf %566, %567 : vector<2x16xf32>
    %569 = math.tanh %568 : vector<2x16xf32>
    %570 = arith.mulf %565, %569 : vector<2x16xf32>
    %c0_106 = arith.constant 0 : index
    %c48_107 = arith.constant 48 : index
    %571 = vector.load %arg0[%c0_106, %c48_107] : memref<2x64xf32, #tpu.memory_space<vmem>>, vector<2x8xf32>
    %572 = arith.truncf %571 : vector<2x8xf32> to vector<2x8xbf16>
    %cst_108 = arith.constant dense<0.000000e+00> : vector<2x128xf32>
    %573 = tpu.matmul %572, %1, %cst_108 {dimension_numbers = #tpu.dot_dimension_numbers<[1], [0], [0], [1], [0, 0, 1, 1], [], []>} : vector<2x8xbf16>, vector<8x128xbf16>, vector<2x128xf32> -> vector<2x128xf32>
    %574 = arith.truncf %504 : vector<2x32xf32> to vector<2x32xbf16>
    %cst_109 = arith.constant dense<0.000000e+00> : vector<2x128xf32>
    %575 = tpu.matmul %574, %9, %cst_109 {dimension_numbers = #tpu.dot_dimension_numbers<[1], [0], [0], [1], [0, 0, 1, 1], [], []>} : vector<2x32xbf16>, vector<32x128xbf16>, vector<2x128xf32> -> vector<2x128xf32>
    %576 = arith.addf %573, %575 : vector<2x128xf32>
    %577 = vector.broadcast %16 : vector<1x128xf32> to vector<2x128xf32>
    %578 = arith.addf %576, %577 : vector<2x128xf32>
    %579 = arith.negf %578 : vector<2x128xf32>
    %580 = math.exp %579 : vector<2x128xf32>
    %cst_110 = arith.constant 1.000000e+00 : f32
    %581 = vector.broadcast %cst_110 : f32 to vector<2x128xf32>
    %582 = arith.addf %581, %580 : vector<2x128xf32>
    %583 = arith.divf %581, %582 : vector<2x128xf32>
    %584 = math.tanh %578 : vector<2x128xf32>
    %585 = vector.extract_strided_slice %583 {offsets = [0, 0], sizes = [2, 32], strides = [1, 1]} : vector<2x128xf32> to vector<2x32xf32>
    %586 = vector.extract_strided_slice %583 {offsets = [0, 32], sizes = [2, 32], strides = [1, 1]} : vector<2x128xf32> to vector<2x32xf32>
    %587 = vector.extract_strided_slice %584 {offsets = [0, 64], sizes = [2, 32], strides = [1, 1]} : vector<2x128xf32> to vector<2x32xf32>
    %588 = vector.extract_strided_slice %583 {offsets = [0, 96], sizes = [2, 32], strides = [1, 1]} : vector<2x128xf32> to vector<2x32xf32>
    %589 = arith.mulf %586, %502 : vector<2x32xf32>
    %590 = arith.mulf %585, %587 : vector<2x32xf32>
    %591 = arith.addf %589, %590 : vector<2x32xf32>
    %592 = math.tanh %591 : vector<2x32xf32>
    %593 = arith.mulf %588, %592 : vector<2x32xf32>
    %594 = arith.truncf %593 : vector<2x32xf32> to vector<2x32xbf16>
    %cst_111 = arith.constant dense<0.000000e+00> : vector<2x128xf32>
    %595 = tpu.matmul %594, %3, %cst_111 {dimension_numbers = #tpu.dot_dimension_numbers<[1], [0], [0], [1], [0, 0, 1, 1], [], []>} : vector<2x32xbf16>, vector<32x128xbf16>, vector<2x128xf32> -> vector<2x128xf32>
    %596 = arith.truncf %526 : vector<2x32xf32> to vector<2x32xbf16>
    %cst_112 = arith.constant dense<0.000000e+00> : vector<2x128xf32>
    %597 = tpu.matmul %596, %11, %cst_112 {dimension_numbers = #tpu.dot_dimension_numbers<[1], [0], [0], [1], [0, 0, 1, 1], [], []>} : vector<2x32xbf16>, vector<32x128xbf16>, vector<2x128xf32> -> vector<2x128xf32>
    %598 = arith.addf %595, %597 : vector<2x128xf32>
    %599 = vector.broadcast %17 : vector<1x128xf32> to vector<2x128xf32>
    %600 = arith.addf %598, %599 : vector<2x128xf32>
    %601 = arith.negf %600 : vector<2x128xf32>
    %602 = math.exp %601 : vector<2x128xf32>
    %cst_113 = arith.constant 1.000000e+00 : f32
    %603 = vector.broadcast %cst_113 : f32 to vector<2x128xf32>
    %604 = arith.addf %603, %602 : vector<2x128xf32>
    %605 = arith.divf %603, %604 : vector<2x128xf32>
    %606 = math.tanh %600 : vector<2x128xf32>
    %607 = vector.extract_strided_slice %605 {offsets = [0, 0], sizes = [2, 32], strides = [1, 1]} : vector<2x128xf32> to vector<2x32xf32>
    %608 = vector.extract_strided_slice %605 {offsets = [0, 32], sizes = [2, 32], strides = [1, 1]} : vector<2x128xf32> to vector<2x32xf32>
    %609 = vector.extract_strided_slice %606 {offsets = [0, 64], sizes = [2, 32], strides = [1, 1]} : vector<2x128xf32> to vector<2x32xf32>
    %610 = vector.extract_strided_slice %605 {offsets = [0, 96], sizes = [2, 32], strides = [1, 1]} : vector<2x128xf32> to vector<2x32xf32>
    %611 = arith.mulf %608, %524 : vector<2x32xf32>
    %612 = arith.mulf %607, %609 : vector<2x32xf32>
    %613 = arith.addf %611, %612 : vector<2x32xf32>
    %614 = math.tanh %613 : vector<2x32xf32>
    %615 = arith.mulf %610, %614 : vector<2x32xf32>
    %616 = arith.truncf %615 : vector<2x32xf32> to vector<2x32xbf16>
    %cst_114 = arith.constant dense<0.000000e+00> : vector<2x64xf32>
    %617 = tpu.matmul %616, %5, %cst_114 {dimension_numbers = #tpu.dot_dimension_numbers<[1], [0], [0], [1], [0, 0, 1, 1], [], []>} : vector<2x32xbf16>, vector<32x64xbf16>, vector<2x64xf32> -> vector<2x64xf32>
    %618 = arith.truncf %548 : vector<2x16xf32> to vector<2x16xbf16>
    %cst_115 = arith.constant dense<0.000000e+00> : vector<2x64xf32>
    %619 = tpu.matmul %618, %13, %cst_115 {dimension_numbers = #tpu.dot_dimension_numbers<[1], [0], [0], [1], [0, 0, 1, 1], [], []>} : vector<2x16xbf16>, vector<16x64xbf16>, vector<2x64xf32> -> vector<2x64xf32>
    %620 = arith.addf %617, %619 : vector<2x64xf32>
    %621 = vector.broadcast %18 : vector<1x64xf32> to vector<2x64xf32>
    %622 = arith.addf %620, %621 : vector<2x64xf32>
    %623 = arith.negf %622 : vector<2x64xf32>
    %624 = math.exp %623 : vector<2x64xf32>
    %cst_116 = arith.constant 1.000000e+00 : f32
    %625 = vector.broadcast %cst_116 : f32 to vector<2x64xf32>
    %626 = arith.addf %625, %624 : vector<2x64xf32>
    %627 = arith.divf %625, %626 : vector<2x64xf32>
    %628 = math.tanh %622 : vector<2x64xf32>
    %629 = vector.extract_strided_slice %627 {offsets = [0, 0], sizes = [2, 16], strides = [1, 1]} : vector<2x64xf32> to vector<2x16xf32>
    %630 = vector.extract_strided_slice %627 {offsets = [0, 16], sizes = [2, 16], strides = [1, 1]} : vector<2x64xf32> to vector<2x16xf32>
    %631 = vector.extract_strided_slice %628 {offsets = [0, 32], sizes = [2, 16], strides = [1, 1]} : vector<2x64xf32> to vector<2x16xf32>
    %632 = vector.extract_strided_slice %627 {offsets = [0, 48], sizes = [2, 16], strides = [1, 1]} : vector<2x64xf32> to vector<2x16xf32>
    %633 = arith.mulf %630, %546 : vector<2x16xf32>
    %634 = arith.mulf %629, %631 : vector<2x16xf32>
    %635 = arith.addf %633, %634 : vector<2x16xf32>
    %636 = math.tanh %635 : vector<2x16xf32>
    %637 = arith.mulf %632, %636 : vector<2x16xf32>
    %638 = arith.truncf %637 : vector<2x16xf32> to vector<2x16xbf16>
    %cst_117 = arith.constant dense<0.000000e+00> : vector<2x64xf32>
    %639 = tpu.matmul %638, %7, %cst_117 {dimension_numbers = #tpu.dot_dimension_numbers<[1], [0], [0], [1], [0, 0, 1, 1], [], []>} : vector<2x16xbf16>, vector<16x64xbf16>, vector<2x64xf32> -> vector<2x64xf32>
    %640 = arith.truncf %570 : vector<2x16xf32> to vector<2x16xbf16>
    %cst_118 = arith.constant dense<0.000000e+00> : vector<2x64xf32>
    %641 = tpu.matmul %640, %15, %cst_118 {dimension_numbers = #tpu.dot_dimension_numbers<[1], [0], [0], [1], [0, 0, 1, 1], [], []>} : vector<2x16xbf16>, vector<16x64xbf16>, vector<2x64xf32> -> vector<2x64xf32>
    %642 = arith.addf %639, %641 : vector<2x64xf32>
    %643 = vector.broadcast %19 : vector<1x64xf32> to vector<2x64xf32>
    %644 = arith.addf %642, %643 : vector<2x64xf32>
    %645 = arith.negf %644 : vector<2x64xf32>
    %646 = math.exp %645 : vector<2x64xf32>
    %cst_119 = arith.constant 1.000000e+00 : f32
    %647 = vector.broadcast %cst_119 : f32 to vector<2x64xf32>
    %648 = arith.addf %647, %646 : vector<2x64xf32>
    %649 = arith.divf %647, %648 : vector<2x64xf32>
    %650 = math.tanh %644 : vector<2x64xf32>
    %651 = vector.extract_strided_slice %649 {offsets = [0, 0], sizes = [2, 16], strides = [1, 1]} : vector<2x64xf32> to vector<2x16xf32>
    %652 = vector.extract_strided_slice %649 {offsets = [0, 16], sizes = [2, 16], strides = [1, 1]} : vector<2x64xf32> to vector<2x16xf32>
    %653 = vector.extract_strided_slice %650 {offsets = [0, 32], sizes = [2, 16], strides = [1, 1]} : vector<2x64xf32> to vector<2x16xf32>
    %654 = vector.extract_strided_slice %649 {offsets = [0, 48], sizes = [2, 16], strides = [1, 1]} : vector<2x64xf32> to vector<2x16xf32>
    %655 = arith.mulf %652, %568 : vector<2x16xf32>
    %656 = arith.mulf %651, %653 : vector<2x16xf32>
    %657 = arith.addf %655, %656 : vector<2x16xf32>
    %658 = math.tanh %657 : vector<2x16xf32>
    %659 = arith.mulf %654, %658 : vector<2x16xf32>
    %c0_120 = arith.constant 0 : index
    %c56 = arith.constant 56 : index
    %660 = vector.load %arg0[%c0_120, %c56] : memref<2x64xf32, #tpu.memory_space<vmem>>, vector<2x8xf32>
    %661 = arith.truncf %660 : vector<2x8xf32> to vector<2x8xbf16>
    %cst_121 = arith.constant dense<0.000000e+00> : vector<2x128xf32>
    %662 = tpu.matmul %661, %1, %cst_121 {dimension_numbers = #tpu.dot_dimension_numbers<[1], [0], [0], [1], [0, 0, 1, 1], [], []>} : vector<2x8xbf16>, vector<8x128xbf16>, vector<2x128xf32> -> vector<2x128xf32>
    %663 = arith.truncf %593 : vector<2x32xf32> to vector<2x32xbf16>
    %cst_122 = arith.constant dense<0.000000e+00> : vector<2x128xf32>
    %664 = tpu.matmul %663, %9, %cst_122 {dimension_numbers = #tpu.dot_dimension_numbers<[1], [0], [0], [1], [0, 0, 1, 1], [], []>} : vector<2x32xbf16>, vector<32x128xbf16>, vector<2x128xf32> -> vector<2x128xf32>
    %665 = arith.addf %662, %664 : vector<2x128xf32>
    %666 = vector.broadcast %16 : vector<1x128xf32> to vector<2x128xf32>
    %667 = arith.addf %665, %666 : vector<2x128xf32>
    %668 = arith.negf %667 : vector<2x128xf32>
    %669 = math.exp %668 : vector<2x128xf32>
    %cst_123 = arith.constant 1.000000e+00 : f32
    %670 = vector.broadcast %cst_123 : f32 to vector<2x128xf32>
    %671 = arith.addf %670, %669 : vector<2x128xf32>
    %672 = arith.divf %670, %671 : vector<2x128xf32>
    %673 = math.tanh %667 : vector<2x128xf32>
    %674 = vector.extract_strided_slice %672 {offsets = [0, 0], sizes = [2, 32], strides = [1, 1]} : vector<2x128xf32> to vector<2x32xf32>
    %675 = vector.extract_strided_slice %672 {offsets = [0, 32], sizes = [2, 32], strides = [1, 1]} : vector<2x128xf32> to vector<2x32xf32>
    %676 = vector.extract_strided_slice %673 {offsets = [0, 64], sizes = [2, 32], strides = [1, 1]} : vector<2x128xf32> to vector<2x32xf32>
    %677 = vector.extract_strided_slice %672 {offsets = [0, 96], sizes = [2, 32], strides = [1, 1]} : vector<2x128xf32> to vector<2x32xf32>
    %678 = arith.mulf %675, %591 : vector<2x32xf32>
    %679 = arith.mulf %674, %676 : vector<2x32xf32>
    %680 = arith.addf %678, %679 : vector<2x32xf32>
    %681 = math.tanh %680 : vector<2x32xf32>
    %682 = arith.mulf %677, %681 : vector<2x32xf32>
    %683 = arith.truncf %682 : vector<2x32xf32> to vector<2x32xbf16>
    %cst_124 = arith.constant dense<0.000000e+00> : vector<2x128xf32>
    %684 = tpu.matmul %683, %3, %cst_124 {dimension_numbers = #tpu.dot_dimension_numbers<[1], [0], [0], [1], [0, 0, 1, 1], [], []>} : vector<2x32xbf16>, vector<32x128xbf16>, vector<2x128xf32> -> vector<2x128xf32>
    %685 = arith.truncf %615 : vector<2x32xf32> to vector<2x32xbf16>
    %cst_125 = arith.constant dense<0.000000e+00> : vector<2x128xf32>
    %686 = tpu.matmul %685, %11, %cst_125 {dimension_numbers = #tpu.dot_dimension_numbers<[1], [0], [0], [1], [0, 0, 1, 1], [], []>} : vector<2x32xbf16>, vector<32x128xbf16>, vector<2x128xf32> -> vector<2x128xf32>
    %687 = arith.addf %684, %686 : vector<2x128xf32>
    %688 = vector.broadcast %17 : vector<1x128xf32> to vector<2x128xf32>
    %689 = arith.addf %687, %688 : vector<2x128xf32>
    %690 = arith.negf %689 : vector<2x128xf32>
    %691 = math.exp %690 : vector<2x128xf32>
    %cst_126 = arith.constant 1.000000e+00 : f32
    %692 = vector.broadcast %cst_126 : f32 to vector<2x128xf32>
    %693 = arith.addf %692, %691 : vector<2x128xf32>
    %694 = arith.divf %692, %693 : vector<2x128xf32>
    %695 = math.tanh %689 : vector<2x128xf32>
    %696 = vector.extract_strided_slice %694 {offsets = [0, 0], sizes = [2, 32], strides = [1, 1]} : vector<2x128xf32> to vector<2x32xf32>
    %697 = vector.extract_strided_slice %694 {offsets = [0, 32], sizes = [2, 32], strides = [1, 1]} : vector<2x128xf32> to vector<2x32xf32>
    %698 = vector.extract_strided_slice %695 {offsets = [0, 64], sizes = [2, 32], strides = [1, 1]} : vector<2x128xf32> to vector<2x32xf32>
    %699 = vector.extract_strided_slice %694 {offsets = [0, 96], sizes = [2, 32], strides = [1, 1]} : vector<2x128xf32> to vector<2x32xf32>
    %700 = arith.mulf %697, %613 : vector<2x32xf32>
    %701 = arith.mulf %696, %698 : vector<2x32xf32>
    %702 = arith.addf %700, %701 : vector<2x32xf32>
    %703 = math.tanh %702 : vector<2x32xf32>
    %704 = arith.mulf %699, %703 : vector<2x32xf32>
    %705 = arith.truncf %704 : vector<2x32xf32> to vector<2x32xbf16>
    %cst_127 = arith.constant dense<0.000000e+00> : vector<2x64xf32>
    %706 = tpu.matmul %705, %5, %cst_127 {dimension_numbers = #tpu.dot_dimension_numbers<[1], [0], [0], [1], [0, 0, 1, 1], [], []>} : vector<2x32xbf16>, vector<32x64xbf16>, vector<2x64xf32> -> vector<2x64xf32>
    %707 = arith.truncf %637 : vector<2x16xf32> to vector<2x16xbf16>
    %cst_128 = arith.constant dense<0.000000e+00> : vector<2x64xf32>
    %708 = tpu.matmul %707, %13, %cst_128 {dimension_numbers = #tpu.dot_dimension_numbers<[1], [0], [0], [1], [0, 0, 1, 1], [], []>} : vector<2x16xbf16>, vector<16x64xbf16>, vector<2x64xf32> -> vector<2x64xf32>
    %709 = arith.addf %706, %708 : vector<2x64xf32>
    %710 = vector.broadcast %18 : vector<1x64xf32> to vector<2x64xf32>
    %711 = arith.addf %709, %710 : vector<2x64xf32>
    %712 = arith.negf %711 : vector<2x64xf32>
    %713 = math.exp %712 : vector<2x64xf32>
    %cst_129 = arith.constant 1.000000e+00 : f32
    %714 = vector.broadcast %cst_129 : f32 to vector<2x64xf32>
    %715 = arith.addf %714, %713 : vector<2x64xf32>
    %716 = arith.divf %714, %715 : vector<2x64xf32>
    %717 = math.tanh %711 : vector<2x64xf32>
    %718 = vector.extract_strided_slice %716 {offsets = [0, 0], sizes = [2, 16], strides = [1, 1]} : vector<2x64xf32> to vector<2x16xf32>
    %719 = vector.extract_strided_slice %716 {offsets = [0, 16], sizes = [2, 16], strides = [1, 1]} : vector<2x64xf32> to vector<2x16xf32>
    %720 = vector.extract_strided_slice %717 {offsets = [0, 32], sizes = [2, 16], strides = [1, 1]} : vector<2x64xf32> to vector<2x16xf32>
    %721 = vector.extract_strided_slice %716 {offsets = [0, 48], sizes = [2, 16], strides = [1, 1]} : vector<2x64xf32> to vector<2x16xf32>
    %722 = arith.mulf %719, %635 : vector<2x16xf32>
    %723 = arith.mulf %718, %720 : vector<2x16xf32>
    %724 = arith.addf %722, %723 : vector<2x16xf32>
    %725 = math.tanh %724 : vector<2x16xf32>
    %726 = arith.mulf %721, %725 : vector<2x16xf32>
    %727 = arith.truncf %726 : vector<2x16xf32> to vector<2x16xbf16>
    %cst_130 = arith.constant dense<0.000000e+00> : vector<2x64xf32>
    %728 = tpu.matmul %727, %7, %cst_130 {dimension_numbers = #tpu.dot_dimension_numbers<[1], [0], [0], [1], [0, 0, 1, 1], [], []>} : vector<2x16xbf16>, vector<16x64xbf16>, vector<2x64xf32> -> vector<2x64xf32>
    %729 = arith.truncf %659 : vector<2x16xf32> to vector<2x16xbf16>
    %cst_131 = arith.constant dense<0.000000e+00> : vector<2x64xf32>
    %730 = tpu.matmul %729, %15, %cst_131 {dimension_numbers = #tpu.dot_dimension_numbers<[1], [0], [0], [1], [0, 0, 1, 1], [], []>} : vector<2x16xbf16>, vector<16x64xbf16>, vector<2x64xf32> -> vector<2x64xf32>
    %731 = arith.addf %728, %730 : vector<2x64xf32>
    %732 = vector.broadcast %19 : vector<1x64xf32> to vector<2x64xf32>
    %733 = arith.addf %731, %732 : vector<2x64xf32>
    %734 = arith.negf %733 : vector<2x64xf32>
    %735 = math.exp %734 : vector<2x64xf32>
    %cst_132 = arith.constant 1.000000e+00 : f32
    %736 = vector.broadcast %cst_132 : f32 to vector<2x64xf32>
    %737 = arith.addf %736, %735 : vector<2x64xf32>
    %738 = arith.divf %736, %737 : vector<2x64xf32>
    %739 = math.tanh %733 : vector<2x64xf32>
    %740 = vector.extract_strided_slice %738 {offsets = [0, 0], sizes = [2, 16], strides = [1, 1]} : vector<2x64xf32> to vector<2x16xf32>
    %741 = vector.extract_strided_slice %738 {offsets = [0, 16], sizes = [2, 16], strides = [1, 1]} : vector<2x64xf32> to vector<2x16xf32>
    %742 = vector.extract_strided_slice %739 {offsets = [0, 32], sizes = [2, 16], strides = [1, 1]} : vector<2x64xf32> to vector<2x16xf32>
    %743 = vector.extract_strided_slice %738 {offsets = [0, 48], sizes = [2, 16], strides = [1, 1]} : vector<2x64xf32> to vector<2x16xf32>
    %744 = arith.mulf %741, %657 : vector<2x16xf32>
    %745 = arith.mulf %740, %742 : vector<2x16xf32>
    %746 = arith.addf %744, %745 : vector<2x16xf32>
    %747 = math.tanh %746 : vector<2x16xf32>
    %748 = arith.mulf %743, %747 : vector<2x16xf32>
    %cst_133 = arith.constant 0.000000e+00 : f32
    %749 = vector.broadcast %cst_133 : f32 to vector<2x16xf32>
    %750 = arith.maximumf %726, %749 : vector<2x16xf32>
    %751 = arith.truncf %750 : vector<2x16xf32> to vector<2x16xbf16>
    %cst_134 = arith.constant dense<0.000000e+00> : vector<2x16xf32>
    %752 = tpu.matmul %751, %21, %cst_134 {dimension_numbers = #tpu.dot_dimension_numbers<[1], [0], [0], [1], [0, 0, 1, 1], [], []>} : vector<2x16xbf16>, vector<16x16xbf16>, vector<2x16xf32> -> vector<2x16xf32>
    %753 = vector.broadcast %22 : vector<1x16xf32> to vector<2x16xf32>
    %754 = arith.addf %752, %753 : vector<2x16xf32>
    %cst_135 = arith.constant 0.000000e+00 : f32
    %755 = vector.broadcast %cst_135 : f32 to vector<2x16xf32>
    %756 = arith.maximumf %754, %755 : vector<2x16xf32>
    %757 = arith.truncf %756 : vector<2x16xf32> to vector<2x16xbf16>
    %cst_136 = arith.constant dense<0.000000e+00> : vector<2x4xf32>
    %758 = tpu.matmul %757, %24, %cst_136 {dimension_numbers = #tpu.dot_dimension_numbers<[1], [0], [0], [1], [0, 0, 1, 1], [], []>} : vector<2x16xbf16>, vector<16x4xbf16>, vector<2x4xf32> -> vector<2x4xf32>
    %759 = vector.broadcast %25 : vector<1x4xf32> to vector<2x4xf32>
    %760 = arith.addf %758, %759 : vector<2x4xf32>
    %cst_137 = arith.constant 0.000000e+00 : f32
    %761 = vector.broadcast %cst_137 : f32 to vector<2x4xf32>
    %762 = arith.maximumf %760, %761 : vector<2x4xf32>
    %763 = arith.truncf %762 : vector<2x4xf32> to vector<2x4xbf16>
    %cst_138 = arith.constant dense<0.000000e+00> : vector<2x3xf32>
    %764 = tpu.matmul %763, %27, %cst_138 {dimension_numbers = #tpu.dot_dimension_numbers<[1], [0], [0], [1], [0, 0, 1, 1], [], []>} : vector<2x4xbf16>, vector<4x3xbf16>, vector<2x3xf32> -> vector<2x3xf32>
    %765 = vector.broadcast %28 : vector<1x3xf32> to vector<2x3xf32>
    %766 = arith.addf %764, %765 : vector<2x3xf32>
    %c0_139 = arith.constant 0 : index
    %c0_140 = arith.constant 0 : index
    %767 = vector.load %arg2[%c0_139, %c0_140] : memref<4x3xf32, #tpu.memory_space<vmem>>, vector<2x3xf32>
    tpu.vector_store %arg2[%c0_139, %c0_140], %766 {strides = array<i32>} : memref<4x3xf32, #tpu.memory_space<vmem>>, vector<2x3xf32>,
    %cst_141 = arith.constant 0.000000e+00 : f32
    %768 = vector.broadcast %cst_141 : f32 to vector<2x16xf32>
    %769 = arith.maximumf %748, %768 : vector<2x16xf32>
    %770 = arith.truncf %769 : vector<2x16xf32> to vector<2x16xbf16>
    %cst_142 = arith.constant dense<0.000000e+00> : vector<2x16xf32>
    %771 = tpu.matmul %770, %21, %cst_142 {dimension_numbers = #tpu.dot_dimension_numbers<[1], [0], [0], [1], [0, 0, 1, 1], [], []>} : vector<2x16xbf16>, vector<16x16xbf16>, vector<2x16xf32> -> vector<2x16xf32>
    %772 = vector.broadcast %22 : vector<1x16xf32> to vector<2x16xf32>
    %773 = arith.addf %771, %772 : vector<2x16xf32>
    %cst_143 = arith.constant 0.000000e+00 : f32
    %774 = vector.broadcast %cst_143 : f32 to vector<2x16xf32>
    %775 = arith.maximumf %773, %774 : vector<2x16xf32>
    %776 = arith.truncf %775 : vector<2x16xf32> to vector<2x16xbf16>
    %cst_144 = arith.constant dense<0.000000e+00> : vector<2x4xf32>
    %777 = tpu.matmul %776, %24, %cst_144 {dimension_numbers = #tpu.dot_dimension_numbers<[1], [0], [0], [1], [0, 0, 1, 1], [], []>} : vector<2x16xbf16>, vector<16x4xbf16>, vector<2x4xf32> -> vector<2x4xf32>
    %778 = vector.broadcast %25 : vector<1x4xf32> to vector<2x4xf32>
    %779 = arith.addf %777, %778 : vector<2x4xf32>
    %cst_145 = arith.constant 0.000000e+00 : f32
    %780 = vector.broadcast %cst_145 : f32 to vector<2x4xf32>
    %781 = arith.maximumf %779, %780 : vector<2x4xf32>
    %782 = arith.truncf %781 : vector<2x4xf32> to vector<2x4xbf16>
    %cst_146 = arith.constant dense<0.000000e+00> : vector<2x3xf32>
    %783 = tpu.matmul %782, %27, %cst_146 {dimension_numbers = #tpu.dot_dimension_numbers<[1], [0], [0], [1], [0, 0, 1, 1], [], []>} : vector<2x4xbf16>, vector<4x3xbf16>, vector<2x3xf32> -> vector<2x3xf32>
    %784 = vector.broadcast %28 : vector<1x3xf32> to vector<2x3xf32>
    %785 = arith.addf %783, %784 : vector<2x3xf32>
    %c2 = arith.constant 2 : index
    %c0_147 = arith.constant 0 : index
    %786 = vector.load %arg2[%c2, %c0_147] : memref<4x3xf32, #tpu.memory_space<vmem>>, vector<2x3xf32>
    tpu.vector_store %arg2[%c2, %c0_147], %785 {strides = array<i32>} : memref<4x3xf32, #tpu.memory_space<vmem>>, vector<2x3xf32>,
    return
  }
}

</mosaic_0001>

<llo_original>
// kernel: forward.1
$region0: #{forward.1}
  #allocation0 [shape = 'u32[]', space=smem, size = 0x4, offset = 0x4, fixed_abs, tag = 'smem constant byte address 0x4 - core index']
  #allocation1 [shape = 'u32[144,128]{1,0:T(1,128)}', space=vmem, size = 0x12000, scoped, tag = 'internal scratch']
  %s0 = inlined_call_operand.vmem [shape: f32[2,64], index: 0, kind: input, shape index: {}]
  %s1 = inlined_call_operand.hbm [shape: f32[280,128], index: 1, kind: input, shape index: {}]
  %s2 = inlined_call_operand.hbm [shape: f32[4,3], index: 2, kind: output, shape index: {}]
  %s3 = sld [smem:[#allocation0]]
  $region22: #{forward.1} parent=0
    _
  %s5 = ssub.s32 1, %s3
  %s6 = scalar_select 0, %s5, %s3
  $region1: #{forward.1} parent=0
    #allocation2 [shape = 'u8[143360]{0}', space=vmem, size = 0x23000, scoped, tag = 'input window, operand 1, single buffered']
    #allocation3 [shape = 's32[1]{0}', space=sflag, size = 0x4, scoped, tag = 'scoped memory for forward.1']
    #allocation4 [shape = 's32[1]{0}', space=sflag, size = 0x4, scoped, tag = 'scoped memory for forward.1']
    #allocation5 [shape = 'u8[2048]{0}', space=vmem, size = 0x800, scoped, tag = 'output window, operand 0, single buffered']
    %7 = vsyncpa [#allocation3], 0
    %8 = vsyncpa [#allocation4], 0
    // Predicated region
    $region2: #{forward.1} parent=1 // pred_check
      _
    $region3: #{forward.1} parent=1 // pred_check_branch
      %10 = sbr.rel (0) target = $region5
    $region4: #{forward.1} parent=1 // pred_region
      _
    $region5: #{forward.1} parent=1 // pred_fallthru
      _
    // Predicated region
    $region6: #{forward.1} parent=1 // pred_check
      _
    $region7: #{forward.1} parent=1 // pred_check_branch
      %12 = sbr.rel (0) target = $region9
    $region8: #{forward.1} parent=1 // pred_region
      %s14 = ssub.s32 4480, 4480
      %15 = vsyncadd [#allocation3], %s14
      %s16 = sshll.u32 [#allocation2], 4
      %s17 = int_to_ptr.vmem [resolvable:$true] %s16
      %22 = dma.hbm_to_vmem [thread:$0]  %s1, 4480, %s17, [#allocation3], 128, 128, 8
    $region9: #{forward.1} parent=1 // pred_fallthru
      _
    // Predicated region
    $region10: #{forward.1} parent=1 // pred_check
      _
    $region11: #{forward.1} parent=1 // pred_check_branch
      %24 = sbr.rel (0) target = $region13
    $region12: #{forward.1} parent=1 // pred_region
      %25 = dma.done [#allocation3], 4480
    $region13: #{forward.1} parent=1 // pred_fallthru
      _
    %v27 = vld [vmem:[#allocation2] sm:$0xff]
    %v28 = vpack.c.bf16 %v27, %v27
    %v29 = vld [vmem:[#allocation2 + $0x30] sm:$0xff]
    %v30 = vld [vmem:[#allocation2 + $0x38] sm:$0xff]
    %v31 = vld [vmem:[#allocation2 + $0x40] sm:$0xff]
    %v32 = vld [vmem:[#allocation2 + $0x48] sm:$0xff]
    %v33 = vpack.c.bf16 %v30, %v29
    %v34 = vpack.c.bf16 %v32, %v31
    %v35 = vld [vmem:[#allocation2 + $0x78] sm:$0xff]
    %v36 = vld [vmem:[#allocation2 + $0x80] sm:$0xff]
    %v37 = vld [vmem:[#allocation2 + $0x88] sm:$0xff]
    %v38 = vld [vmem:[#allocation2 + $0x90] sm:$0xff]
    %v39 = vpack.c.bf16 %v36, %v35
    %v40 = vpack.c.bf16 %v38, %v37
    %v41 = vld [vmem:[#allocation2 + $0xb0] sm:$0xff]
    %v42 = vld [vmem:[#allocation2 + $0xb8] sm:$0xff]
    %v43 = vpack.c.bf16 %v42, %v41
    %v44 = vld [vmem:[#allocation2 + $0x8] sm:$0xff]
    %v45 = vld [vmem:[#allocation2 + $0x10] sm:$0xff]
    %v46 = vld [vmem:[#allocation2 + $0x18] sm:$0xff]
    %v47 = vld [vmem:[#allocation2 + $0x20] sm:$0xff]
    %v48 = vpack.c.bf16 %v45, %v44
    %v49 = vpack.c.bf16 %v47, %v46
    %v50 = vld [vmem:[#allocation2 + $0x50] sm:$0xff]
    %v51 = vld [vmem:[#allocation2 + $0x58] sm:$0xff]
    %v52 = vld [vmem:[#allocation2 + $0x60] sm:$0xff]
    %v53 = vld [vmem:[#allocation2 + $0x68] sm:$0xff]
    %v54 = vpack.c.bf16 %v51, %v50
    %v55 = vpack.c.bf16 %v53, %v52
    %v56 = vld [vmem:[#allocation2 + $0x98] sm:$0xff]
    %v57 = vld [vmem:[#allocation2 + $0xa0] sm:$0xff]
    %v58 = vpack.c.bf16 %v57, %v56
    %v59 = vld [vmem:[#allocation2 + $0xc0] sm:$0xff]
    %v60 = vld [vmem:[#allocation2 + $0xc8] sm:$0xff]
    %v61 = vpack.c.bf16 %v60, %v59
    %v62 = vld [vmem:[#allocation2 + $0x28] sm:$0x1]
    %v63 = vld [vmem:[#allocation2 + $0x70] sm:$0x1]
    %v64 = vld [vmem:[#allocation2 + $0xa8] sm:$0x1]
    %v65 = vld [vmem:[#allocation2 + $0xd0] sm:$0x1]
    %v66 = vld [vmem:[#allocation2 + $0xd8] sm:$0xff]
    %v67 = vld [vmem:[#allocation2 + $0xe0] sm:$0xff]
    %v68 = vpack.c.bf16 %v67, %v66
    %v69 = vld [vmem:[#allocation2 + $0xe8] sm:$0x1]
    %v70 = vld [vmem:[#allocation2 + $0xf0] sm:$0xff]
    %v71 = vld [vmem:[#allocation2 + $0xf8] sm:$0xff]
    %v72 = vpack.c.bf16 %v71, %v70
    %v73 = vld [vmem:[#allocation2 + $0x100] sm:$0x1]
    %v74 = vld [vmem:[#allocation2 + $0x108] sm:$0xf]
    %v75 = vpack.c.bf16 %v74, %v74
    %v76 = vld [vmem:[#allocation2 + $0x110] sm:$0x1]
    %v77 = vld [vmem:[%s0] sm:$0x3]
    %v78 = vpack.c.bf16 %v77, %v77
    %vm79 = vcmask 261120
    %v81 = vsel %vm79, 0, 0
    %83 = vmatprep.subr.bf16.mxu0 0
    %84 = vmatpush1.bf16.msra.mxu0 0
    %85 = vmatprep.subr.bf16.mxu0 0
    %86 = vmatpush1.bf16.msra.mxu0 0
    %87 = vmatprep.subr.bf16.mxu0 0
    %88 = vmatpush1.bf16.msra.mxu0 0
    %89 = vmatprep.subr.bf16.mxu0 0
    %90 = vmatpush1.bf16.msra.mxu0 0
    %91 = vmatprep.subr.bf16.mxu0 0
    %92 = vmatpush1.bf16.msra.mxu0 0
    %93 = vmatprep.subr.bf16.mxu0 0
    %94 = vmatpush1.bf16.msra.mxu0 0
    %95 = vmatprep.subr.bf16.mxu0 0
    %96 = vmatpush1.bf16.msra.mxu0 %v49
    %97 = vmatprep.subr.bf16.mxu0 0
    %98 = vmatpush1.bf16.msra.mxu0 %v48
    %99 = vmatprep.subr.bf16.mxu0 0
    %100 = vmatpush2.bf16.msra.mxu0 0
    %101 = vmatprep.subr.bf16.mxu0 0
    %102 = vmatpush2.bf16.msra.mxu0 0
    %103 = vmatprep.subr.bf16.mxu0 0
    %104 = vmatpush2.bf16.msra.mxu0 0
    %105 = vmatprep.subr.bf16.mxu0 0
    %106 = vmatpush2.bf16.msra.mxu0 0
    %107 = vmatprep.subr.bf16.mxu0 0
    %108 = vmatpush2.bf16.msra.mxu0 0
    %109 = vmatprep.subr.bf16.mxu0 0
    %110 = vmatpush2.bf16.msra.mxu0 0
    %111 = vmatprep.subr.bf16.mxu0 0
    %112 = vmatpush2.bf16.msra.mxu0 0
    %113 = vmatprep.subr.bf16.mxu0 0
    %114 = vmatpush2.bf16.msra.mxu0 0
    %115 = vmatprep.mubr.bf16.mxu0 0
    %116 = vmatmul.mubr.bf16.gmra.mxu0 %v81
    %v117 = vpop.f32.mrf.mxu0
    %v118 = vadd.f32 0.0, %v117
    %v119 = vpop.f32.mrf.mxu0
    %v120 = vpop.f32.mrf.mxu0
    %v121 = vpop.f32.mrf.mxu0
    %122 = vdwg.mxu0
    %vm123 = vcmask 64512
    %v125 = vsel %vm123, %v78, 0
    %vm127 = vcmask 1043456
    %v129 = vsel %vm127, %v28, 0
    %131 = vmatprep.subr.bf16.mxu0 0
    %132 = vmatpush1.bf16.msra.mxu0 0
    %133 = vmatprep.subr.bf16.mxu0 0
    %134 = vmatpush1.bf16.msra.mxu0 0
    %135 = vmatprep.subr.bf16.mxu0 0
    %136 = vmatpush1.bf16.msra.mxu0 0
    %137 = vmatprep.subr.bf16.mxu0 0
    %138 = vmatpush1.bf16.msra.mxu0 0
    %139 = vmatprep.subr.bf16.mxu0 0
    %140 = vmatpush1.bf16.msra.mxu0 0
    %141 = vmatprep.subr.bf16.mxu0 0
    %142 = vmatpush1.bf16.msra.mxu0 0
    %143 = vmatprep.subr.bf16.mxu0 0
    %144 = vmatpush1.bf16.msra.mxu0 0
    %145 = vmatprep.subr.bf16.mxu0 0
    %146 = vmatpush1.bf16.msra.mxu0 %v129
    %147 = vmatprep.subr.bf16.mxu0 0
    %148 = vmatpush2.bf16.msra.mxu0 0
    %149 = vmatprep.subr.bf16.mxu0 0
    %150 = vmatpush2.bf16.msra.mxu0 0
    %151 = vmatprep.subr.bf16.mxu0 0
    %152 = vmatpush2.bf16.msra.mxu0 0
    %153 = vmatprep.subr.bf16.mxu0 0
    %154 = vmatpush2.bf16.msra.mxu0 0
    %155 = vmatprep.subr.bf16.mxu0 0
    %156 = vmatpush2.bf16.msra.mxu0 0
    %157 = vmatprep.subr.bf16.mxu0 0
    %158 = vmatpush2.bf16.msra.mxu0 0
    %159 = vmatprep.subr.bf16.mxu0 0
    %160 = vmatpush2.bf16.msra.mxu0 0
    %161 = vmatprep.subr.bf16.mxu0 0
    %162 = vmatpush2.bf16.msra.mxu0 0
    %163 = vmatprep.mubr.bf16.mxu0 0
    %164 = vmatmul.mubr.bf16.gmra.mxu0 %v125
    %v165 = vpop.f32.mrf.mxu0
    %v166 = vadd.f32 %v118, %v165
    %v167 = vpop.f32.mrf.mxu0
    %v168 = vpop.f32.mrf.mxu0
    %v169 = vpop.f32.mrf.mxu0
    %170 = vdwg.mxu0
    %v171 = vlaneseq
    %v172 = vshrl.u32 %v171, 7
    %v173 = vsub.s32 0, %v172
    %v174 = vrot.slane %v62, %v173
    %v175 = vadd.f32 %v166, %v174
    %v176 = vxor.u32 %v175, 2147483648
    %v177 = vmul.f32 %v176, 1.442695
    %v178 = vpow.pop %v177
    %v179 = vadd.f32 %v178, 1.0
    %v180 = vrcp.pop %v179
    %v181 = vmul.f32 1.0, %v180
    %v182 = vtanh.pop %v175
    %v183 = vmul.f32 %v181, 0.0
    %185 = vrot.lane.b32.xlu0 %v182, 64
    %v186 = vpop.permute.xlu0 %185
    %v188 = vmul.f32 %v181, %v186
    %190 = vrot.lane.b32.xlu0 %v188, 32
    %v191 = vpop.permute.xlu0 %190
    %v193 = vadd.f32 %v183, %v191
    %v194 = vtanh.pop %v193
    %196 = vrot.lane.b32.xlu0 %v194, 64
    %v197 = vpop.permute.xlu0 %196
    %v199 = vmul.f32 %v181, %v197
    %v200 = vpack.c.bf16 %v199, %v199
    %201 = vmatprep.subr.bf16.mxu0 0
    %202 = vmatpush1.bf16.msra.mxu0 0
    %203 = vmatprep.subr.bf16.mxu0 0
    %204 = vmatpush1.bf16.msra.mxu0 0
    %205 = vmatprep.subr.bf16.mxu0 0
    %206 = vmatpush1.bf16.msra.mxu0 0
    %207 = vmatprep.subr.bf16.mxu0 0
    %208 = vmatpush1.bf16.msra.mxu0 0
    %209 = vmatprep.subr.bf16.mxu0 0
    %210 = vmatpush1.bf16.msra.mxu0 0
    %211 = vmatprep.subr.bf16.mxu0 0
    %212 = vmatpush1.bf16.msra.mxu0 0
    %213 = vmatprep.subr.bf16.mxu0 0
    %214 = vmatpush1.bf16.msra.mxu0 %v55
    %215 = vmatprep.subr.bf16.mxu0 0
    %216 = vmatpush1.bf16.msra.mxu0 %v54
    %217 = vmatprep.subr.bf16.mxu0 0
    %218 = vmatpush2.bf16.msra.mxu0 0
    %219 = vmatprep.subr.bf16.mxu0 0
    %220 = vmatpush2.bf16.msra.mxu0 0
    %221 = vmatprep.subr.bf16.mxu0 0
    %222 = vmatpush2.bf16.msra.mxu0 0
    %223 = vmatprep.subr.bf16.mxu0 0
    %224 = vmatpush2.bf16.msra.mxu0 0
    %225 = vmatprep.subr.bf16.mxu0 0
    %226 = vmatpush2.bf16.msra.mxu0 0
    %227 = vmatprep.subr.bf16.mxu0 0
    %228 = vmatpush2.bf16.msra.mxu0 0
    %229 = vmatprep.subr.bf16.mxu0 0
    %230 = vmatpush2.bf16.msra.mxu0 0
    %231 = vmatprep.subr.bf16.mxu0 0
    %232 = vmatpush2.bf16.msra.mxu0 0
    %233 = vmatprep.mubr.bf16.mxu0 0
    %234 = vmatmul.mubr.bf16.gmra.mxu0 %v81
    %v235 = vpop.f32.mrf.mxu0
    %v236 = vadd.f32 0.0, %v235
    %v237 = vpop.f32.mrf.mxu0
    %v238 = vpop.f32.mrf.mxu0
    %v239 = vpop.f32.mrf.mxu0
    %240 = vdwg.mxu0
    %242 = vrot.lane.b32.xlu0 %v200, 32
    %v243 = vpop.permute.xlu0 %242
    %v245 = vsel %vm79, %v243, 0
    %247 = vmatprep.subr.bf16.mxu0 0
    %248 = vmatpush1.bf16.msra.mxu0 0
    %249 = vmatprep.subr.bf16.mxu0 0
    %250 = vmatpush1.bf16.msra.mxu0 0
    %251 = vmatprep.subr.bf16.mxu0 0
    %252 = vmatpush1.bf16.msra.mxu0 0
    %253 = vmatprep.subr.bf16.mxu0 0
    %254 = vmatpush1.bf16.msra.mxu0 0
    %255 = vmatprep.subr.bf16.mxu0 0
    %256 = vmatpush1.bf16.msra.mxu0 0
    %257 = vmatprep.subr.bf16.mxu0 0
    %258 = vmatpush1.bf16.msra.mxu0 0
    %259 = vmatprep.subr.bf16.mxu0 0
    %260 = vmatpush1.bf16.msra.mxu0 %v34
    %261 = vmatprep.subr.bf16.mxu0 0
    %262 = vmatpush1.bf16.msra.mxu0 %v33
    %263 = vmatprep.subr.bf16.mxu0 0
    %264 = vmatpush2.bf16.msra.mxu0 0
    %265 = vmatprep.subr.bf16.mxu0 0
    %266 = vmatpush2.bf16.msra.mxu0 0
    %267 = vmatprep.subr.bf16.mxu0 0
    %268 = vmatpush2.bf16.msra.mxu0 0
    %269 = vmatprep.subr.bf16.mxu0 0
    %270 = vmatpush2.bf16.msra.mxu0 0
    %271 = vmatprep.subr.bf16.mxu0 0
    %272 = vmatpush2.bf16.msra.mxu0 0
    %273 = vmatprep.subr.bf16.mxu0 0
    %274 = vmatpush2.bf16.msra.mxu0 0
    %275 = vmatprep.subr.bf16.mxu0 0
    %276 = vmatpush2.bf16.msra.mxu0 0
    %277 = vmatprep.subr.bf16.mxu0 0
    %278 = vmatpush2.bf16.msra.mxu0 0
    %279 = vmatprep.mubr.bf16.mxu0 0
    %280 = vmatmul.mubr.bf16.gmra.mxu0 %v245
    %v281 = vpop.f32.mrf.mxu0
    %v282 = vadd.f32 %v236, %v281
    %v283 = vpop.f32.mrf.mxu0
    %v284 = vpop.f32.mrf.mxu0
    %v285 = vpop.f32.mrf.mxu0
    %286 = vdwg.mxu0
    %v287 = vlaneseq
    %v288 = vshrl.u32 %v287, 7
    %v289 = vsub.s32 0, %v288
    %v290 = vrot.slane %v63, %v289
    %v291 = vadd.f32 %v282, %v290
    %v292 = vxor.u32 %v291, 2147483648
    %v293 = vmul.f32 %v292, 1.442695
    %v294 = vpow.pop %v293
    %v295 = vadd.f32 %v294, 1.0
    %v296 = vrcp.pop %v295
    %v297 = vmul.f32 1.0, %v296
    %v298 = vtanh.pop %v291
    %v299 = vmul.f32 %v297, 0.0
    %301 = vrot.lane.b32.xlu0 %v298, 64
    %v302 = vpop.permute.xlu0 %301
    %v304 = vmul.f32 %v297, %v302
    %306 = vrot.lane.b32.xlu0 %v304, 32
    %v307 = vpop.permute.xlu0 %306
    %v309 = vadd.f32 %v299, %v307
    %v310 = vtanh.pop %v309
    %312 = vrot.lane.b32.xlu0 %v310, 64
    %v313 = vpop.permute.xlu0 %312
    %v315 = vmul.f32 %v297, %v313
    %v316 = vpack.c.bf16 %v315, %v315
    %vm317 = vcmask 130048
    %v318 = vsel %vm317, 0, 0
    %320 = vmatprep.subr.bf16.mxu0 0
    %321 = vmatpush1.bf16.msra.mxu0 0
    %322 = vmatprep.subr.bf16.mxu0 0
    %323 = vmatpush1.bf16.msra.mxu0 0
    %324 = vmatprep.subr.bf16.mxu0 0
    %325 = vmatpush1.bf16.msra.mxu0 0
    %326 = vmatprep.subr.bf16.mxu0 0
    %327 = vmatpush1.bf16.msra.mxu0 0
    %328 = vmatprep.subr.bf16.mxu0 0
    %329 = vmatpush1.bf16.msra.mxu0 0
    %330 = vmatprep.subr.bf16.mxu0 0
    %331 = vmatpush1.bf16.msra.mxu0 0
    %332 = vmatprep.subr.bf16.mxu0 0
    %333 = vmatpush1.bf16.msra.mxu0 0
    %334 = vmatprep.subr.bf16.mxu0 0
    %335 = vmatpush1.bf16.msra.mxu0 %v58
    %336 = vmatprep.subr.bf16.mxu0 0
    %337 = vmatpush2.bf16.msra.mxu0 0
    %338 = vmatprep.subr.bf16.mxu0 0
    %339 = vmatpush2.bf16.msra.mxu0 0
    %340 = vmatprep.subr.bf16.mxu0 0
    %341 = vmatpush2.bf16.msra.mxu0 0
    %342 = vmatprep.subr.bf16.mxu0 0
    %343 = vmatpush2.bf16.msra.mxu0 0
    %344 = vmatprep.subr.bf16.mxu0 0
    %345 = vmatpush2.bf16.msra.mxu0 0
    %346 = vmatprep.subr.bf16.mxu0 0
    %347 = vmatpush2.bf16.msra.mxu0 0
    %348 = vmatprep.subr.bf16.mxu0 0
    %349 = vmatpush2.bf16.msra.mxu0 0
    %350 = vmatprep.subr.bf16.mxu0 0
    %351 = vmatpush2.bf16.msra.mxu0 0
    %352 = vmatprep.mubr.bf16.mxu0 0
    %353 = vmatmul.mubr.bf16.gmra.mxu0 %v318
    %v354 = vpop.f32.mrf.mxu0
    %v355 = vadd.f32 0.0, %v354
    %v356 = vpop.f32.mrf.mxu0
    %v357 = vpop.f32.mrf.mxu0
    %v358 = vpop.f32.mrf.mxu0
    %359 = vdwg.mxu0
    %361 = vrot.lane.b32.xlu0 %v316, 32
    %v362 = vpop.permute.xlu0 %361
    %v364 = vsel %vm79, %v362, 0
    %366 = vmatprep.subr.bf16.mxu0 0
    %367 = vmatpush1.bf16.msra.mxu0 0
    %368 = vmatprep.subr.bf16.mxu0 0
    %369 = vmatpush1.bf16.msra.mxu0 0
    %370 = vmatprep.subr.bf16.mxu0 0
    %371 = vmatpush1.bf16.msra.mxu0 0
    %372 = vmatprep.subr.bf16.mxu0 0
    %373 = vmatpush1.bf16.msra.mxu0 0
    %374 = vmatprep.subr.bf16.mxu0 0
    %375 = vmatpush1.bf16.msra.mxu0 0
    %376 = vmatprep.subr.bf16.mxu0 0
    %377 = vmatpush1.bf16.msra.mxu0 0
    %378 = vmatprep.subr.bf16.mxu0 0
    %379 = vmatpush1.bf16.msra.mxu0 %v40
    %380 = vmatprep.subr.bf16.mxu0 0
    %381 = vmatpush1.bf16.msra.mxu0 %v39
    %382 = vmatprep.subr.bf16.mxu0 0
    %383 = vmatpush2.bf16.msra.mxu0 0
    %384 = vmatprep.subr.bf16.mxu0 0
    %385 = vmatpush2.bf16.msra.mxu0 0
    %386 = vmatprep.subr.bf16.mxu0 0
    %387 = vmatpush2.bf16.msra.mxu0 0
    %388 = vmatprep.subr.bf16.mxu0 0
    %389 = vmatpush2.bf16.msra.mxu0 0
    %390 = vmatprep.subr.bf16.mxu0 0
    %391 = vmatpush2.bf16.msra.mxu0 0
    %392 = vmatprep.subr.bf16.mxu0 0
    %393 = vmatpush2.bf16.msra.mxu0 0
    %394 = vmatprep.subr.bf16.mxu0 0
    %395 = vmatpush2.bf16.msra.mxu0 0
    %396 = vmatprep.subr.bf16.mxu0 0
    %397 = vmatpush2.bf16.msra.mxu0 0
    %398 = vmatprep.mubr.bf16.mxu0 0
    %399 = vmatmul.mubr.bf16.gmra.mxu0 %v364
    %v400 = vpop.f32.mrf.mxu0
    %v401 = vadd.f32 %v355, %v400
    %v402 = vpop.f32.mrf.mxu0
    %v403 = vpop.f32.mrf.mxu0
    %v404 = vpop.f32.mrf.mxu0
    %405 = vdwg.mxu0
    %v406 = vlaneseq
    %v407 = vshrl.u32 %v406, 7
    %v408 = vsub.s32 0, %v407
    %v409 = vrot.slane %v64, %v408
    %v410 = vadd.f32 %v401, %v409
    %v411 = vxor.u32 %v410, 2147483648
    %v412 = vmul.f32 %v411, 1.442695
    %v413 = vpow.pop %v412
    %v414 = vadd.f32 %v413, 1.0
    %v415 = vrcp.pop %v414
    %v416 = vmul.f32 1.0, %v415
    %v417 = vtanh.pop %v410
    %v418 = vmul.f32 %v416, 0.0
    %420 = vrot.lane.b32.xlu0 %v417, 96
    %v421 = vpop.permute.xlu0 %420
    %v423 = vmul.f32 %v416, %v421
    %425 = vrot.lane.b32.xlu0 %v423, 16
    %v426 = vpop.permute.xlu0 %425
    %v428 = vadd.f32 %v418, %v426
    %v429 = vtanh.pop %v428
    %431 = vrot.lane.b32.xlu0 %v429, 32
    %v432 = vpop.permute.xlu0 %431
    %v434 = vmul.f32 %v416, %v432
    %v435 = vpack.c.bf16 %v434, %v434
    %436 = vmatprep.subr.bf16.mxu0 0
    %437 = vmatpush1.bf16.msra.mxu0 0
    %438 = vmatprep.subr.bf16.mxu0 0
    %439 = vmatpush1.bf16.msra.mxu0 0
    %440 = vmatprep.subr.bf16.mxu0 0
    %441 = vmatpush1.bf16.msra.mxu0 0
    %442 = vmatprep.subr.bf16.mxu0 0
    %443 = vmatpush1.bf16.msra.mxu0 0
    %444 = vmatprep.subr.bf16.mxu0 0
    %445 = vmatpush1.bf16.msra.mxu0 0
    %446 = vmatprep.subr.bf16.mxu0 0
    %447 = vmatpush1.bf16.msra.mxu0 0
    %448 = vmatprep.subr.bf16.mxu0 0
    %449 = vmatpush1.bf16.msra.mxu0 0
    %450 = vmatprep.subr.bf16.mxu0 0
    %451 = vmatpush1.bf16.msra.mxu0 %v61
    %452 = vmatprep.subr.bf16.mxu0 0
    %453 = vmatpush2.bf16.msra.mxu0 0
    %454 = vmatprep.subr.bf16.mxu0 0
    %455 = vmatpush2.bf16.msra.mxu0 0
    %456 = vmatprep.subr.bf16.mxu0 0
    %457 = vmatpush2.bf16.msra.mxu0 0
    %458 = vmatprep.subr.bf16.mxu0 0
    %459 = vmatpush2.bf16.msra.mxu0 0
    %460 = vmatprep.subr.bf16.mxu0 0
    %461 = vmatpush2.bf16.msra.mxu0 0
    %462 = vmatprep.subr.bf16.mxu0 0
    %463 = vmatpush2.bf16.msra.mxu0 0
    %464 = vmatprep.subr.bf16.mxu0 0
    %465 = vmatpush2.bf16.msra.mxu0 0
    %466 = vmatprep.subr.bf16.mxu0 0
    %467 = vmatpush2.bf16.msra.mxu0 0
    %468 = vmatprep.mubr.bf16.mxu0 0
    %469 = vmatmul.mubr.bf16.gmra.mxu0 %v318
    %v470 = vpop.f32.mrf.mxu0
    %v471 = vadd.f32 0.0, %v470
    %v472 = vpop.f32.mrf.mxu0
    %v473 = vpop.f32.mrf.mxu0
    %v474 = vpop.f32.mrf.mxu0
    %475 = vdwg.mxu0
    %477 = vrot.lane.b32.xlu0 %v435, 80
    %v478 = vpop.permute.xlu0 %477
    %v480 = vsel %vm317, %v478, 0
    %482 = vmatprep.subr.bf16.mxu0 0
    %483 = vmatpush1.bf16.msra.mxu0 0
    %484 = vmatprep.subr.bf16.mxu0 0
    %485 = vmatpush1.bf16.msra.mxu0 0
    %486 = vmatprep.subr.bf16.mxu0 0
    %487 = vmatpush1.bf16.msra.mxu0 0
    %488 = vmatprep.subr.bf16.mxu0 0
    %489 = vmatpush1.bf16.msra.mxu0 0
    %490 = vmatprep.subr.bf16.mxu0 0
    %491 = vmatpush1.bf16.msra.mxu0 0
    %492 = vmatprep.subr.bf16.mxu0 0
    %493 = vmatpush1.bf16.msra.mxu0 0
    %494 = vmatprep.subr.bf16.mxu0 0
    %495 = vmatpush1.bf16.msra.mxu0 0
    %496 = vmatprep.subr.bf16.mxu0 0
    %497 = vmatpush1.bf16.msra.mxu0 %v43
    %498 = vmatprep.subr.bf16.mxu0 0
    %499 = vmatpush2.bf16.msra.mxu0 0
    %500 = vmatprep.subr.bf16.mxu0 0
    %501 = vmatpush2.bf16.msra.mxu0 0
    %502 = vmatprep.subr.bf16.mxu0 0
    %503 = vmatpush2.bf16.msra.mxu0 0
    %504 = vmatprep.subr.bf16.mxu0 0
    %505 = vmatpush2.bf16.msra.mxu0 0
    %506 = vmatprep.subr.bf16.mxu0 0
    %507 = vmatpush2.bf16.msra.mxu0 0
    %508 = vmatprep.subr.bf16.mxu0 0
    %509 = vmatpush2.bf16.msra.mxu0 0
    %510 = vmatprep.subr.bf16.mxu0 0
    %511 = vmatpush2.bf16.msra.mxu0 0
    %512 = vmatprep.subr.bf16.mxu0 0
    %513 = vmatpush2.bf16.msra.mxu0 0
    %514 = vmatprep.mubr.bf16.mxu0 0
    %515 = vmatmul.mubr.bf16.gmra.mxu0 %v480
    %v516 = vpop.f32.mrf.mxu0
    %v517 = vadd.f32 %v471, %v516
    %v518 = vpop.f32.mrf.mxu0
    %v519 = vpop.f32.mrf.mxu0
    %v520 = vpop.f32.mrf.mxu0
    %521 = vdwg.mxu0
    %v522 = vlaneseq
    %v523 = vshrl.u32 %v522, 7
    %v524 = vsub.s32 0, %v523
    %v525 = vrot.slane %v65, %v524
    %v526 = vadd.f32 %v517, %v525
    %v527 = vxor.u32 %v526, 2147483648
    %v528 = vmul.f32 %v527, 1.442695
    %v529 = vpow.pop %v528
    %v530 = vadd.f32 %v529, 1.0
    %v531 = vrcp.pop %v530
    %v532 = vmul.f32 1.0, %v531
    %v533 = vtanh.pop %v526
    %v534 = vmul.f32 %v532, 0.0
    %536 = vrot.lane.b32.xlu0 %v533, 96
    %v537 = vpop.permute.xlu0 %536
    %v539 = vmul.f32 %v532, %v537
    %541 = vrot.lane.b32.xlu0 %v539, 16
    %v542 = vpop.permute.xlu0 %541
    %v544 = vadd.f32 %v534, %v542
    %v545 = vtanh.pop %v544
    %547 = vrot.lane.b32.xlu0 %v545, 32
    %v548 = vpop.permute.xlu0 %547
    %v550 = vmul.f32 %v532, %v548
    %551 = vmatprep.subr.bf16.mxu0 0
    %552 = vmatpush1.bf16.msra.mxu0 0
    %553 = vmatprep.subr.bf16.mxu0 0
    %554 = vmatpush1.bf16.msra.mxu0 0
    %555 = vmatprep.subr.bf16.mxu0 0
    %556 = vmatpush1.bf16.msra.mxu0 0
    %557 = vmatprep.subr.bf16.mxu0 0
    %558 = vmatpush1.bf16.msra.mxu0 0
    %559 = vmatprep.subr.bf16.mxu0 0
    %560 = vmatpush1.bf16.msra.mxu0 0
    %561 = vmatprep.subr.bf16.mxu0 0
    %562 = vmatpush1.bf16.msra.mxu0 0
    %563 = vmatprep.subr.bf16.mxu0 0
    %564 = vmatpush1.bf16.msra.mxu0 %v49
    %565 = vmatprep.subr.bf16.mxu0 0
    %566 = vmatpush1.bf16.msra.mxu0 %v48
    %567 = vmatprep.subr.bf16.mxu0 0
    %568 = vmatpush2.bf16.msra.mxu0 0
    %569 = vmatprep.subr.bf16.mxu0 0
    %570 = vmatpush2.bf16.msra.mxu0 0
    %571 = vmatprep.subr.bf16.mxu0 0
    %572 = vmatpush2.bf16.msra.mxu0 0
    %573 = vmatprep.subr.bf16.mxu0 0
    %574 = vmatpush2.bf16.msra.mxu0 0
    %575 = vmatprep.subr.bf16.mxu0 0
    %576 = vmatpush2.bf16.msra.mxu0 0
    %577 = vmatprep.subr.bf16.mxu0 0
    %578 = vmatpush2.bf16.msra.mxu0 0
    %579 = vmatprep.subr.bf16.mxu0 0
    %580 = vmatpush2.bf16.msra.mxu0 0
    %581 = vmatprep.subr.bf16.mxu0 0
    %582 = vmatpush2.bf16.msra.mxu0 0
    %583 = vmatprep.mubr.bf16.mxu0 0
    %584 = vmatmul.mubr.bf16.gmra.mxu0 %v245
    %v585 = vpop.f32.mrf.mxu0
    %v586 = vadd.f32 0.0, %v585
    %v587 = vpop.f32.mrf.mxu0
    %v588 = vpop.f32.mrf.mxu0
    %v589 = vpop.f32.mrf.mxu0
    %590 = vdwg.mxu0
    %592 = vrot.lane.b32.xlu0 %v78, 120
    %v593 = vpop.permute.xlu0 %592
    %v595 = vsel %vm123, %v593, 0
    %597 = vmatprep.subr.bf16.mxu0 0
    %598 = vmatpush1.bf16.msra.mxu0 0
    %599 = vmatprep.subr.bf16.mxu0 0
    %600 = vmatpush1.bf16.msra.mxu0 0
    %601 = vmatprep.subr.bf16.mxu0 0
    %602 = vmatpush1.bf16.msra.mxu0 0
    %603 = vmatprep.subr.bf16.mxu0 0
    %604 = vmatpush1.bf16.msra.mxu0 0
    %605 = vmatprep.subr.bf16.mxu0 0
    %606 = vmatpush1.bf16.msra.mxu0 0
    %607 = vmatprep.subr.bf16.mxu0 0
    %608 = vmatpush1.bf16.msra.mxu0 0
    %609 = vmatprep.subr.bf16.mxu0 0
    %610 = vmatpush1.bf16.msra.mxu0 0
    %611 = vmatprep.subr.bf16.mxu0 0
    %612 = vmatpush1.bf16.msra.mxu0 %v129
    %613 = vmatprep.subr.bf16.mxu0 0
    %614 = vmatpush2.bf16.msra.mxu0 0
    %615 = vmatprep.subr.bf16.mxu0 0
    %616 = vmatpush2.bf16.msra.mxu0 0
    %617 = vmatprep.subr.bf16.mxu0 0
    %618 = vmatpush2.bf16.msra.mxu0 0
    %619 = vmatprep.subr.bf16.mxu0 0
    %620 = vmatpush2.bf16.msra.mxu0 0
    %621 = vmatprep.subr.bf16.mxu0 0
    %622 = vmatpush2.bf16.msra.mxu0 0
    %623 = vmatprep.subr.bf16.mxu0 0
    %624 = vmatpush2.bf16.msra.mxu0 0
    %625 = vmatprep.subr.bf16.mxu0 0
    %626 = vmatpush2.bf16.msra.mxu0 0
    %627 = vmatprep.subr.bf16.mxu0 0
    %628 = vmatpush2.bf16.msra.mxu0 0
    %629 = vmatprep.mubr.bf16.mxu0 0
    %630 = vmatmul.mubr.bf16.gmra.mxu0 %v595
    %v631 = vpop.f32.mrf.mxu0
    %v632 = vadd.f32 %v586, %v631
    %v633 = vpop.f32.mrf.mxu0
    %v634 = vpop.f32.mrf.mxu0
    %v635 = vpop.f32.mrf.mxu0
    %636 = vdwg.mxu0
    %v637 = vadd.f32 %v632, %v174
    %v638 = vxor.u32 %v637, 2147483648
    %v639 = vmul.f32 %v638, 1.442695
    %v640 = vpow.pop %v639
    %v641 = vadd.f32 %v640, 1.0
    %v642 = vrcp.pop %v641
    %v643 = vmul.f32 1.0, %v642
    %v644 = vtanh.pop %v637
    %v645 = vmul.f32 %v643, %v193
    %647 = vrot.lane.b32.xlu0 %v644, 64
    %v648 = vpop.permute.xlu0 %647
    %v650 = vmul.f32 %v643, %v648
    %652 = vrot.lane.b32.xlu0 %v650, 32
    %v653 = vpop.permute.xlu0 %652
    %v655 = vadd.f32 %v645, %v653
    %v656 = vtanh.pop %v655
    %658 = vrot.lane.b32.xlu0 %v656, 64
    %v659 = vpop.permute.xlu0 %658
    %v661 = vmul.f32 %v643, %v659
    %v662 = vpack.c.bf16 %v661, %v661
    %663 = vmatprep.subr.bf16.mxu0 0
    %664 = vmatpush1.bf16.msra.mxu0 0
    %665 = vmatprep.subr.bf16.mxu0 0
    %666 = vmatpush1.bf16.msra.mxu0 0
    %667 = vmatprep.subr.bf16.mxu0 0
    %668 = vmatpush1.bf16.msra.mxu0 0
    %669 = vmatprep.subr.bf16.mxu0 0
    %670 = vmatpush1.bf16.msra.mxu0 0
    %671 = vmatprep.subr.bf16.mxu0 0
    %672 = vmatpush1.bf16.msra.mxu0 0
    %673 = vmatprep.subr.bf16.mxu0 0
    %674 = vmatpush1.bf16.msra.mxu0 0
    %675 = vmatprep.subr.bf16.mxu0 0
    %676 = vmatpush1.bf16.msra.mxu0 %v55
    %677 = vmatprep.subr.bf16.mxu0 0
    %678 = vmatpush1.bf16.msra.mxu0 %v54
    %679 = vmatprep.subr.bf16.mxu0 0
    %680 = vmatpush2.bf16.msra.mxu0 0
    %681 = vmatprep.subr.bf16.mxu0 0
    %682 = vmatpush2.bf16.msra.mxu0 0
    %683 = vmatprep.subr.bf16.mxu0 0
    %684 = vmatpush2.bf16.msra.mxu0 0
    %685 = vmatprep.subr.bf16.mxu0 0
    %686 = vmatpush2.bf16.msra.mxu0 0
    %687 = vmatprep.subr.bf16.mxu0 0
    %688 = vmatpush2.bf16.msra.mxu0 0
    %689 = vmatprep.subr.bf16.mxu0 0
    %690 = vmatpush2.bf16.msra.mxu0 0
    %691 = vmatprep.subr.bf16.mxu0 0
    %692 = vmatpush2.bf16.msra.mxu0 0
    %693 = vmatprep.subr.bf16.mxu0 0
    %694 = vmatpush2.bf16.msra.mxu0 0
    %695 = vmatprep.mubr.bf16.mxu0 0
    %696 = vmatmul.mubr.bf16.gmra.mxu0 %v364
    %v697 = vpop.f32.mrf.mxu0
    %v698 = vadd.f32 0.0, %v697
    %v699 = vpop.f32.mrf.mxu0
    %v700 = vpop.f32.mrf.mxu0
    %v701 = vpop.f32.mrf.mxu0
    %702 = vdwg.mxu0
    %704 = vrot.lane.b32.xlu0 %v662, 32
    %v705 = vpop.permute.xlu0 %704
    %v707 = vsel %vm79, %v705, 0
    %709 = vmatprep.subr.bf16.mxu0 0
    %710 = vmatpush1.bf16.msra.mxu0 0
    %711 = vmatprep.subr.bf16.mxu0 0
    %712 = vmatpush1.bf16.msra.mxu0 0
    %713 = vmatprep.subr.bf16.mxu0 0
    %714 = vmatpush1.bf16.msra.mxu0 0
    %715 = vmatprep.subr.bf16.mxu0 0
    %716 = vmatpush1.bf16.msra.mxu0 0
    %717 = vmatprep.subr.bf16.mxu0 0
    %718 = vmatpush1.bf16.msra.mxu0 0
    %719 = vmatprep.subr.bf16.mxu0 0
    %720 = vmatpush1.bf16.msra.mxu0 0
    %721 = vmatprep.subr.bf16.mxu0 0
    %722 = vmatpush1.bf16.msra.mxu0 %v34
    %723 = vmatprep.subr.bf16.mxu0 0
    %724 = vmatpush1.bf16.msra.mxu0 %v33
    %725 = vmatprep.subr.bf16.mxu0 0
    %726 = vmatpush2.bf16.msra.mxu0 0
    %727 = vmatprep.subr.bf16.mxu0 0
    %728 = vmatpush2.bf16.msra.mxu0 0
    %729 = vmatprep.subr.bf16.mxu0 0
    %730 = vmatpush2.bf16.msra.mxu0 0
    %731 = vmatprep.subr.bf16.mxu0 0
    %732 = vmatpush2.bf16.msra.mxu0 0
    %733 = vmatprep.subr.bf16.mxu0 0
    %734 = vmatpush2.bf16.msra.mxu0 0
    %735 = vmatprep.subr.bf16.mxu0 0
    %736 = vmatpush2.bf16.msra.mxu0 0
    %737 = vmatprep.subr.bf16.mxu0 0
    %738 = vmatpush2.bf16.msra.mxu0 0
    %739 = vmatprep.subr.bf16.mxu0 0
    %740 = vmatpush2.bf16.msra.mxu0 0
    %741 = vmatprep.mubr.bf16.mxu0 0
    %742 = vmatmul.mubr.bf16.gmra.mxu0 %v707
    %v743 = vpop.f32.mrf.mxu0
    %v744 = vadd.f32 %v698, %v743
    %v745 = vpop.f32.mrf.mxu0
    %v746 = vpop.f32.mrf.mxu0
    %v747 = vpop.f32.mrf.mxu0
    %748 = vdwg.mxu0
    %v749 = vadd.f32 %v744, %v290
    %v750 = vxor.u32 %v749, 2147483648
    %v751 = vmul.f32 %v750, 1.442695
    %v752 = vpow.pop %v751
    %v753 = vadd.f32 %v752, 1.0
    %v754 = vrcp.pop %v753
    %v755 = vmul.f32 1.0, %v754
    %v756 = vtanh.pop %v749
    %v757 = vmul.f32 %v755, %v309
    %759 = vrot.lane.b32.xlu0 %v756, 64
    %v760 = vpop.permute.xlu0 %759
    %v762 = vmul.f32 %v755, %v760
    %764 = vrot.lane.b32.xlu0 %v762, 32
    %v765 = vpop.permute.xlu0 %764
    %v767 = vadd.f32 %v757, %v765
    %v768 = vtanh.pop %v767
    %770 = vrot.lane.b32.xlu0 %v768, 64
    %v771 = vpop.permute.xlu0 %770
    %v773 = vmul.f32 %v755, %v771
    %v774 = vpack.c.bf16 %v773, %v773
    %775 = vmatprep.subr.bf16.mxu0 0
    %776 = vmatpush1.bf16.msra.mxu0 0
    %777 = vmatprep.subr.bf16.mxu0 0
    %778 = vmatpush1.bf16.msra.mxu0 0
    %779 = vmatprep.subr.bf16.mxu0 0
    %780 = vmatpush1.bf16.msra.mxu0 0
    %781 = vmatprep.subr.bf16.mxu0 0
    %782 = vmatpush1.bf16.msra.mxu0 0
    %783 = vmatprep.subr.bf16.mxu0 0
    %784 = vmatpush1.bf16.msra.mxu0 0
    %785 = vmatprep.subr.bf16.mxu0 0
    %786 = vmatpush1.bf16.msra.mxu0 0
    %787 = vmatprep.subr.bf16.mxu0 0
    %788 = vmatpush1.bf16.msra.mxu0 0
    %789 = vmatprep.subr.bf16.mxu0 0
    %790 = vmatpush1.bf16.msra.mxu0 %v58
    %791 = vmatprep.subr.bf16.mxu0 0
    %792 = vmatpush2.bf16.msra.mxu0 0
    %793 = vmatprep.subr.bf16.mxu0 0
    %794 = vmatpush2.bf16.msra.mxu0 0
    %795 = vmatprep.subr.bf16.mxu0 0
    %796 = vmatpush2.bf16.msra.mxu0 0
    %797 = vmatprep.subr.bf16.mxu0 0
    %798 = vmatpush2.bf16.msra.mxu0 0
    %799 = vmatprep.subr.bf16.mxu0 0
    %800 = vmatpush2.bf16.msra.mxu0 0
    %801 = vmatprep.subr.bf16.mxu0 0
    %802 = vmatpush2.bf16.msra.mxu0 0
    %803 = vmatprep.subr.bf16.mxu0 0
    %804 = vmatpush2.bf16.msra.mxu0 0
    %805 = vmatprep.subr.bf16.mxu0 0
    %806 = vmatpush2.bf16.msra.mxu0 0
    %807 = vmatprep.mubr.bf16.mxu0 0
    %808 = vmatmul.mubr.bf16.gmra.mxu0 %v480
    %v809 = vpop.f32.mrf.mxu0
    %v810 = vadd.f32 0.0, %v809
    %v811 = vpop.f32.mrf.mxu0
    %v812 = vpop.f32.mrf.mxu0
    %v813 = vpop.f32.mrf.mxu0
    %814 = vdwg.mxu0
    %816 = vrot.lane.b32.xlu0 %v774, 32
    %v817 = vpop.permute.xlu0 %816
    %v819 = vsel %vm79, %v817, 0
    %821 = vmatprep.subr.bf16.mxu0 0
    %822 = vmatpush1.bf16.msra.mxu0 0
    %823 = vmatprep.subr.bf16.mxu0 0
    %824 = vmatpush1.bf16.msra.mxu0 0
    %825 = vmatprep.subr.bf16.mxu0 0
    %826 = vmatpush1.bf16.msra.mxu0 0
    %827 = vmatprep.subr.bf16.mxu0 0
    %828 = vmatpush1.bf16.msra.mxu0 0
    %829 = vmatprep.subr.bf16.mxu0 0
    %830 = vmatpush1.bf16.msra.mxu0 0
    %831 = vmatprep.subr.bf16.mxu0 0
    %832 = vmatpush1.bf16.msra.mxu0 0
    %833 = vmatprep.subr.bf16.mxu0 0
    %834 = vmatpush1.bf16.msra.mxu0 %v40
    %835 = vmatprep.subr.bf16.mxu0 0
    %836 = vmatpush1.bf16.msra.mxu0 %v39
    %837 = vmatprep.subr.bf16.mxu0 0
    %838 = vmatpush2.bf16.msra.mxu0 0
    %839 = vmatprep.subr.bf16.mxu0 0
    %840 = vmatpush2.bf16.msra.mxu0 0
    %841 = vmatprep.subr.bf16.mxu0 0
    %842 = vmatpush2.bf16.msra.mxu0 0
    %843 = vmatprep.subr.bf16.mxu0 0
    %844 = vmatpush2.bf16.msra.mxu0 0
    %845 = vmatprep.subr.bf16.mxu0 0
    %846 = vmatpush2.bf16.msra.mxu0 0
    %847 = vmatprep.subr.bf16.mxu0 0
    %848 = vmatpush2.bf16.msra.mxu0 0
    %849 = vmatprep.subr.bf16.mxu0 0
    %850 = vmatpush2.bf16.msra.mxu0 0
    %851 = vmatprep.subr.bf16.mxu0 0
    %852 = vmatpush2.bf16.msra.mxu0 0
    %853 = vmatprep.mubr.bf16.mxu0 0
    %854 = vmatmul.mubr.bf16.gmra.mxu0 %v819
    %v855 = vpop.f32.mrf.mxu0
    %v856 = vadd.f32 %v810, %v855
    %v857 = vpop.f32.mrf.mxu0
    %v858 = vpop.f32.mrf.mxu0
    %v859 = vpop.f32.mrf.mxu0
    %860 = vdwg.mxu0
    %v861 = vadd.f32 %v856, %v409
    %v862 = vxor.u32 %v861, 2147483648
    %v863 = vmul.f32 %v862, 1.442695
    %v864 = vpow.pop %v863
    %v865 = vadd.f32 %v864, 1.0
    %v866 = vrcp.pop %v865
    %v867 = vmul.f32 1.0, %v866
    %v868 = vtanh.pop %v861
    %v869 = vmul.f32 %v867, %v428
    %871 = vrot.lane.b32.xlu0 %v868, 96
    %v872 = vpop.permute.xlu0 %871
    %v874 = vmul.f32 %v867, %v872
    %876 = vrot.lane.b32.xlu0 %v874, 16
    %v877 = vpop.permute.xlu0 %876
    %v879 = vadd.f32 %v869, %v877
    %v880 = vtanh.pop %v879
    %882 = vrot.lane.b32.xlu0 %v880, 32
    %v883 = vpop.permute.xlu0 %882
    %v885 = vmul.f32 %v867, %v883
    %v886 = vpack.c.bf16 %v885, %v885
    %v887 = vpack.c.bf16 %v550, %v550
    %889 = vrot.lane.b32.xlu0 %v887, 80
    %v890 = vpop.permute.xlu0 %889
    %v892 = vsel %vm317, %v890, 0
    %894 = vmatprep.subr.bf16.mxu0 0
    %895 = vmatpush1.bf16.msra.mxu0 0
    %896 = vmatprep.subr.bf16.mxu0 0
    %897 = vmatpush1.bf16.msra.mxu0 0
    %898 = vmatprep.subr.bf16.mxu0 0
    %899 = vmatpush1.bf16.msra.mxu0 0
    %900 = vmatprep.subr.bf16.mxu0 0
    %901 = vmatpush1.bf16.msra.mxu0 0
    %902 = vmatprep.subr.bf16.mxu0 0
    %903 = vmatpush1.bf16.msra.mxu0 0
    %904 = vmatprep.subr.bf16.mxu0 0
    %905 = vmatpush1.bf16.msra.mxu0 0
    %906 = vmatprep.subr.bf16.mxu0 0
    %907 = vmatpush1.bf16.msra.mxu0 0
    %908 = vmatprep.subr.bf16.mxu0 0
    %909 = vmatpush1.bf16.msra.mxu0 %v61
    %910 = vmatprep.subr.bf16.mxu0 0
    %911 = vmatpush2.bf16.msra.mxu0 0
    %912 = vmatprep.subr.bf16.mxu0 0
    %913 = vmatpush2.bf16.msra.mxu0 0
    %914 = vmatprep.subr.bf16.mxu0 0
    %915 = vmatpush2.bf16.msra.mxu0 0
    %916 = vmatprep.subr.bf16.mxu0 0
    %917 = vmatpush2.bf16.msra.mxu0 0
    %918 = vmatprep.subr.bf16.mxu0 0
    %919 = vmatpush2.bf16.msra.mxu0 0
    %920 = vmatprep.subr.bf16.mxu0 0
    %921 = vmatpush2.bf16.msra.mxu0 0
    %922 = vmatprep.subr.bf16.mxu0 0
    %923 = vmatpush2.bf16.msra.mxu0 0
    %924 = vmatprep.subr.bf16.mxu0 0
    %925 = vmatpush2.bf16.msra.mxu0 0
    %926 = vmatprep.mubr.bf16.mxu0 0
    %927 = vmatmul.mubr.bf16.gmra.mxu0 %v892
    %v928 = vpop.f32.mrf.mxu0
    %v929 = vadd.f32 0.0, %v928
    %v930 = vpop.f32.mrf.mxu0
    %v931 = vpop.f32.mrf.mxu0
    %v932 = vpop.f32.mrf.mxu0
    %933 = vdwg.mxu0
    %935 = vrot.lane.b32.xlu0 %v886, 80
    %v936 = vpop.permute.xlu0 %935
    %v938 = vsel %vm317, %v936, 0
    %940 = vmatprep.subr.bf16.mxu0 0
    %941 = vmatpush1.bf16.msra.mxu0 0
    %942 = vmatprep.subr.bf16.mxu0 0
    %943 = vmatpush1.bf16.msra.mxu0 0
    %944 = vmatprep.subr.bf16.mxu0 0
    %945 = vmatpush1.bf16.msra.mxu0 0
    %946 = vmatprep.subr.bf16.mxu0 0
    %947 = vmatpush1.bf16.msra.mxu0 0
    %948 = vmatprep.subr.bf16.mxu0 0
    %949 = vmatpush1.bf16.msra.mxu0 0
    %950 = vmatprep.subr.bf16.mxu0 0
    %951 = vmatpush1.bf16.msra.mxu0 0
    %952 = vmatprep.subr.bf16.mxu0 0
    %953 = vmatpush1.bf16.msra.mxu0 0
    %954 = vmatprep.subr.bf16.mxu0 0
    %955 = vmatpush1.bf16.msra.mxu0 %v43
    %956 = vmatprep.subr.bf16.mxu0 0
    %957 = vmatpush2.bf16.msra.mxu0 0
    %958 = vmatprep.subr.bf16.mxu0 0
    %959 = vmatpush2.bf16.msra.mxu0 0
    %960 = vmatprep.subr.bf16.mxu0 0
    %961 = vmatpush2.bf16.msra.mxu0 0
    %962 = vmatprep.subr.bf16.mxu0 0
    %963 = vmatpush2.bf16.msra.mxu0 0
    %964 = vmatprep.subr.bf16.mxu0 0
    %965 = vmatpush2.bf16.msra.mxu0 0
    %966 = vmatprep.subr.bf16.mxu0 0
    %967 = vmatpush2.bf16.msra.mxu0 0
    %968 = vmatprep.subr.bf16.mxu0 0
    %969 = vmatpush2.bf16.msra.mxu0 0
    %970 = vmatprep.subr.bf16.mxu0 0
    %971 = vmatpush2.bf16.msra.mxu0 0
    %972 = vmatprep.mubr.bf16.mxu0 0
    %973 = vmatmul.mubr.bf16.gmra.mxu0 %v938
    %v974 = vpop.f32.mrf.mxu0
    %v975 = vadd.f32 %v929, %v974
    %v976 = vpop.f32.mrf.mxu0
    %v977 = vpop.f32.mrf.mxu0
    %v978 = vpop.f32.mrf.mxu0
    %979 = vdwg.mxu0
    %v980 = vadd.f32 %v975, %v525
    %v981 = vxor.u32 %v980, 2147483648
    %v982 = vmul.f32 %v981, 1.442695
    %v983 = vpow.pop %v982
    %v984 = vadd.f32 %v983, 1.0
    %v985 = vrcp.pop %v984
    %v986 = vmul.f32 1.0, %v985
    %v987 = vtanh.pop %v980
    %v988 = vmul.f32 %v986, %v544
    %990 = vrot.lane.b32.xlu0 %v987, 96
    %v991 = vpop.permute.xlu0 %990
    %v993 = vmul.f32 %v986, %v991
    %995 = vrot.lane.b32.xlu0 %v993, 16
    %v996 = vpop.permute.xlu0 %995
    %v998 = vadd.f32 %v988, %v996
    %v999 = vtanh.pop %v998
    %1001 = vrot.lane.b32.xlu0 %v999, 32
    %v1002 = vpop.permute.xlu0 %1001
    %v1004 = vmul.f32 %v986, %v1002
    %1005 = vmatprep.subr.bf16.mxu0 0
    %1006 = vmatpush1.bf16.msra.mxu0 0
    %1007 = vmatprep.subr.bf16.mxu0 0
    %1008 = vmatpush1.bf16.msra.mxu0 0
    %1009 = vmatprep.subr.bf16.mxu0 0
    %1010 = vmatpush1.bf16.msra.mxu0 0
    %1011 = vmatprep.subr.bf16.mxu0 0
    %1012 = vmatpush1.bf16.msra.mxu0 0
    %1013 = vmatprep.subr.bf16.mxu0 0
    %1014 = vmatpush1.bf16.msra.mxu0 0
    %1015 = vmatprep.subr.bf16.mxu0 0
    %1016 = vmatpush1.bf16.msra.mxu0 0
    %1017 = vmatprep.subr.bf16.mxu0 0
    %1018 = vmatpush1.bf16.msra.mxu0 %v49
    %1019 = vmatprep.subr.bf16.mxu0 0
    %1020 = vmatpush1.bf16.msra.mxu0 %v48
    %1021 = vmatprep.subr.bf16.mxu0 0
    %1022 = vmatpush2.bf16.msra.mxu0 0
    %1023 = vmatprep.subr.bf16.mxu0 0
    %1024 = vmatpush2.bf16.msra.mxu0 0
    %1025 = vmatprep.subr.bf16.mxu0 0
    %1026 = vmatpush2.bf16.msra.mxu0 0
    %1027 = vmatprep.subr.bf16.mxu0 0
    %1028 = vmatpush2.bf16.msra.mxu0 0
    %1029 = vmatprep.subr.bf16.mxu0 0
    %1030 = vmatpush2.bf16.msra.mxu0 0
    %1031 = vmatprep.subr.bf16.mxu0 0
    %1032 = vmatpush2.bf16.msra.mxu0 0
    %1033 = vmatprep.subr.bf16.mxu0 0
    %1034 = vmatpush2.bf16.msra.mxu0 0
    %1035 = vmatprep.subr.bf16.mxu0 0
    %1036 = vmatpush2.bf16.msra.mxu0 0
    %1037 = vmatprep.mubr.bf16.mxu0 0
    %1038 = vmatmul.mubr.bf16.gmra.mxu0 %v707
    %v1039 = vpop.f32.mrf.mxu0
    %v1040 = vadd.f32 0.0, %v1039
    %v1041 = vpop.f32.mrf.mxu0
    %v1042 = vpop.f32.mrf.mxu0
    %v1043 = vpop.f32.mrf.mxu0
    %1044 = vdwg.mxu0
    %1045 = vrot.lane.b32.xlu0 %v78, 112
    %v1046 = vpop.permute.xlu0 %1045
    %v1048 = vsel %vm123, %v1046, 0
    %1050 = vmatprep.subr.bf16.mxu0 0
    %1051 = vmatpush1.bf16.msra.mxu0 0
    %1052 = vmatprep.subr.bf16.mxu0 0
    %1053 = vmatpush1.bf16.msra.mxu0 0
    %1054 = vmatprep.subr.bf16.mxu0 0
    %1055 = vmatpush1.bf16.msra.mxu0 0
    %1056 = vmatprep.subr.bf16.mxu0 0
    %1057 = vmatpush1.bf16.msra.mxu0 0
    %1058 = vmatprep.subr.bf16.mxu0 0
    %1059 = vmatpush1.bf16.msra.mxu0 0
    %1060 = vmatprep.subr.bf16.mxu0 0
    %1061 = vmatpush1.bf16.msra.mxu0 0
    %1062 = vmatprep.subr.bf16.mxu0 0
    %1063 = vmatpush1.bf16.msra.mxu0 0
    %1064 = vmatprep.subr.bf16.mxu0 0
    %1065 = vmatpush1.bf16.msra.mxu0 %v129
    %1066 = vmatprep.subr.bf16.mxu0 0
    %1067 = vmatpush2.bf16.msra.mxu0 0
    %1068 = vmatprep.subr.bf16.mxu0 0
    %1069 = vmatpush2.bf16.msra.mxu0 0
    %1070 = vmatprep.subr.bf16.mxu0 0
    %1071 = vmatpush2.bf16.msra.mxu0 0
    %1072 = vmatprep.subr.bf16.mxu0 0
    %1073 = vmatpush2.bf16.msra.mxu0 0
    %1074 = vmatprep.subr.bf16.mxu0 0
    %1075 = vmatpush2.bf16.msra.mxu0 0
    %1076 = vmatprep.subr.bf16.mxu0 0
    %1077 = vmatpush2.bf16.msra.mxu0 0
    %1078 = vmatprep.subr.bf16.mxu0 0
    %1079 = vmatpush2.bf16.msra.mxu0 0
    %1080 = vmatprep.subr.bf16.mxu0 0
    %1081 = vmatpush2.bf16.msra.mxu0 0
    %1082 = vmatprep.mubr.bf16.mxu0 0
    %1083 = vmatmul.mubr.bf16.gmra.mxu0 %v1048
    %v1084 = vpop.f32.mrf.mxu0
    %v1085 = vadd.f32 %v1040, %v1084
    %v1086 = vpop.f32.mrf.mxu0
    %v1087 = vpop.f32.mrf.mxu0
    %v1088 = vpop.f32.mrf.mxu0
    %1089 = vdwg.mxu0
    %v1090 = vadd.f32 %v1085, %v174
    %v1091 = vxor.u32 %v1090, 2147483648
    %v1092 = vmul.f32 %v1091, 1.442695
    %v1093 = vpow.pop %v1092
    %v1094 = vadd.f32 %v1093, 1.0
    %v1095 = vrcp.pop %v1094
    %v1096 = vmul.f32 1.0, %v1095
    %v1097 = vtanh.pop %v1090
    %v1098 = vmul.f32 %v1096, %v655
    %1100 = vrot.lane.b32.xlu0 %v1097, 64
    %v1101 = vpop.permute.xlu0 %1100
    %v1103 = vmul.f32 %v1096, %v1101
    %1105 = vrot.lane.b32.xlu0 %v1103, 32
    %v1106 = vpop.permute.xlu0 %1105
    %v1108 = vadd.f32 %v1098, %v1106
    %v1109 = vtanh.pop %v1108
    %1111 = vrot.lane.b32.xlu0 %v1109, 64
    %v1112 = vpop.permute.xlu0 %1111
    %v1114 = vmul.f32 %v1096, %v1112
    %v1115 = vpack.c.bf16 %v1114, %v1114
    %1116 = vmatprep.subr.bf16.mxu0 0
    %1117 = vmatpush1.bf16.msra.mxu0 0
    %1118 = vmatprep.subr.bf16.mxu0 0
    %1119 = vmatpush1.bf16.msra.mxu0 0
    %1120 = vmatprep.subr.bf16.mxu0 0
    %1121 = vmatpush1.bf16.msra.mxu0 0
    %1122 = vmatprep.subr.bf16.mxu0 0
    %1123 = vmatpush1.bf16.msra.mxu0 0
    %1124 = vmatprep.subr.bf16.mxu0 0
    %1125 = vmatpush1.bf16.msra.mxu0 0
    %1126 = vmatprep.subr.bf16.mxu0 0
    %1127 = vmatpush1.bf16.msra.mxu0 0
    %1128 = vmatprep.subr.bf16.mxu0 0
    %1129 = vmatpush1.bf16.msra.mxu0 %v55
    %1130 = vmatprep.subr.bf16.mxu0 0
    %1131 = vmatpush1.bf16.msra.mxu0 %v54
    %1132 = vmatprep.subr.bf16.mxu0 0
    %1133 = vmatpush2.bf16.msra.mxu0 0
    %1134 = vmatprep.subr.bf16.mxu0 0
    %1135 = vmatpush2.bf16.msra.mxu0 0
    %1136 = vmatprep.subr.bf16.mxu0 0
    %1137 = vmatpush2.bf16.msra.mxu0 0
    %1138 = vmatprep.subr.bf16.mxu0 0
    %1139 = vmatpush2.bf16.msra.mxu0 0
    %1140 = vmatprep.subr.bf16.mxu0 0
    %1141 = vmatpush2.bf16.msra.mxu0 0
    %1142 = vmatprep.subr.bf16.mxu0 0
    %1143 = vmatpush2.bf16.msra.mxu0 0
    %1144 = vmatprep.subr.bf16.mxu0 0
    %1145 = vmatpush2.bf16.msra.mxu0 0
    %1146 = vmatprep.subr.bf16.mxu0 0
    %1147 = vmatpush2.bf16.msra.mxu0 0
    %1148 = vmatprep.mubr.bf16.mxu0 0
    %1149 = vmatmul.mubr.bf16.gmra.mxu0 %v819
    %v1150 = vpop.f32.mrf.mxu0
    %v1151 = vadd.f32 0.0, %v1150
    %v1152 = vpop.f32.mrf.mxu0
    %v1153 = vpop.f32.mrf.mxu0
    %v1154 = vpop.f32.mrf.mxu0
    %1155 = vdwg.mxu0
    %1157 = vrot.lane.b32.xlu0 %v1115, 32
    %v1158 = vpop.permute.xlu0 %1157
    %v1160 = vsel %vm79, %v1158, 0
    %1162 = vmatprep.subr.bf16.mxu0 0
    %1163 = vmatpush1.bf16.msra.mxu0 0
    %1164 = vmatprep.subr.bf16.mxu0 0
    %1165 = vmatpush1.bf16.msra.mxu0 0
    %1166 = vmatprep.subr.bf16.mxu0 0
    %1167 = vmatpush1.bf16.msra.mxu0 0
    %1168 = vmatprep.subr.bf16.mxu0 0
    %1169 = vmatpush1.bf16.msra.mxu0 0
    %1170 = vmatprep.subr.bf16.mxu0 0
    %1171 = vmatpush1.bf16.msra.mxu0 0
    %1172 = vmatprep.subr.bf16.mxu0 0
    %1173 = vmatpush1.bf16.msra.mxu0 0
    %1174 = vmatprep.subr.bf16.mxu0 0
    %1175 = vmatpush1.bf16.msra.mxu0 %v34
    %1176 = vmatprep.subr.bf16.mxu0 0
    %1177 = vmatpush1.bf16.msra.mxu0 %v33
    %1178 = vmatprep.subr.bf16.mxu0 0
    %1179 = vmatpush2.bf16.msra.mxu0 0
    %1180 = vmatprep.subr.bf16.mxu0 0
    %1181 = vmatpush2.bf16.msra.mxu0 0
    %1182 = vmatprep.subr.bf16.mxu0 0
    %1183 = vmatpush2.bf16.msra.mxu0 0
    %1184 = vmatprep.subr.bf16.mxu0 0
    %1185 = vmatpush2.bf16.msra.mxu0 0
    %1186 = vmatprep.subr.bf16.mxu0 0
    %1187 = vmatpush2.bf16.msra.mxu0 0
    %1188 = vmatprep.subr.bf16.mxu0 0
    %1189 = vmatpush2.bf16.msra.mxu0 0
    %1190 = vmatprep.subr.bf16.mxu0 0
    %1191 = vmatpush2.bf16.msra.mxu0 0
    %1192 = vmatprep.subr.bf16.mxu0 0
    %1193 = vmatpush2.bf16.msra.mxu0 0
    %1194 = vmatprep.mubr.bf16.mxu0 0
    %1195 = vmatmul.mubr.bf16.gmra.mxu0 %v1160
    %v1196 = vpop.f32.mrf.mxu0
    %v1197 = vadd.f32 %v1151, %v1196
    %v1198 = vpop.f32.mrf.mxu0
    %v1199 = vpop.f32.mrf.mxu0
    %v1200 = vpop.f32.mrf.mxu0
    %1201 = vdwg.mxu0
    %v1202 = vadd.f32 %v1197, %v290
    %v1203 = vxor.u32 %v1202, 2147483648
    %v1204 = vmul.f32 %v1203, 1.442695
    %v1205 = vpow.pop %v1204
    %v1206 = vadd.f32 %v1205, 1.0
    %v1207 = vrcp.pop %v1206
    %v1208 = vmul.f32 1.0, %v1207
    %v1209 = vtanh.pop %v1202
    %v1210 = vmul.f32 %v1208, %v767
    %1212 = vrot.lane.b32.xlu0 %v1209, 64
    %v1213 = vpop.permute.xlu0 %1212
    %v1215 = vmul.f32 %v1208, %v1213
    %1217 = vrot.lane.b32.xlu0 %v1215, 32
    %v1218 = vpop.permute.xlu0 %1217
    %v1220 = vadd.f32 %v1210, %v1218
    %v1221 = vtanh.pop %v1220
    %1223 = vrot.lane.b32.xlu0 %v1221, 64
    %v1224 = vpop.permute.xlu0 %1223
    %v1226 = vmul.f32 %v1208, %v1224
    %v1227 = vpack.c.bf16 %v1226, %v1226
    %1228 = vmatprep.subr.bf16.mxu0 0
    %1229 = vmatpush1.bf16.msra.mxu0 0
    %1230 = vmatprep.subr.bf16.mxu0 0
    %1231 = vmatpush1.bf16.msra.mxu0 0
    %1232 = vmatprep.subr.bf16.mxu0 0
    %1233 = vmatpush1.bf16.msra.mxu0 0
    %1234 = vmatprep.subr.bf16.mxu0 0
    %1235 = vmatpush1.bf16.msra.mxu0 0
    %1236 = vmatprep.subr.bf16.mxu0 0
    %1237 = vmatpush1.bf16.msra.mxu0 0
    %1238 = vmatprep.subr.bf16.mxu0 0
    %1239 = vmatpush1.bf16.msra.mxu0 0
    %1240 = vmatprep.subr.bf16.mxu0 0
    %1241 = vmatpush1.bf16.msra.mxu0 0
    %1242 = vmatprep.subr.bf16.mxu0 0
    %1243 = vmatpush1.bf16.msra.mxu0 %v58
    %1244 = vmatprep.subr.bf16.mxu0 0
    %1245 = vmatpush2.bf16.msra.mxu0 0
    %1246 = vmatprep.subr.bf16.mxu0 0
    %1247 = vmatpush2.bf16.msra.mxu0 0
    %1248 = vmatprep.subr.bf16.mxu0 0
    %1249 = vmatpush2.bf16.msra.mxu0 0
    %1250 = vmatprep.subr.bf16.mxu0 0
    %1251 = vmatpush2.bf16.msra.mxu0 0
    %1252 = vmatprep.subr.bf16.mxu0 0
    %1253 = vmatpush2.bf16.msra.mxu0 0
    %1254 = vmatprep.subr.bf16.mxu0 0
    %1255 = vmatpush2.bf16.msra.mxu0 0
    %1256 = vmatprep.subr.bf16.mxu0 0
    %1257 = vmatpush2.bf16.msra.mxu0 0
    %1258 = vmatprep.subr.bf16.mxu0 0
    %1259 = vmatpush2.bf16.msra.mxu0 0
    %1260 = vmatprep.mubr.bf16.mxu0 0
    %1261 = vmatmul.mubr.bf16.gmra.mxu0 %v938
    %v1262 = vpop.f32.mrf.mxu0
    %v1263 = vadd.f32 0.0, %v1262
    %v1264 = vpop.f32.mrf.mxu0
    %v1265 = vpop.f32.mrf.mxu0
    %v1266 = vpop.f32.mrf.mxu0
    %1267 = vdwg.mxu0
    %1269 = vrot.lane.b32.xlu0 %v1227, 32
    %v1270 = vpop.permute.xlu0 %1269
    %v1272 = vsel %vm79, %v1270, 0
    %1274 = vmatprep.subr.bf16.mxu0 0
    %1275 = vmatpush1.bf16.msra.mxu0 0
    %1276 = vmatprep.subr.bf16.mxu0 0
    %1277 = vmatpush1.bf16.msra.mxu0 0
    %1278 = vmatprep.subr.bf16.mxu0 0
    %1279 = vmatpush1.bf16.msra.mxu0 0
    %1280 = vmatprep.subr.bf16.mxu0 0
    %1281 = vmatpush1.bf16.msra.mxu0 0
    %1282 = vmatprep.subr.bf16.mxu0 0
    %1283 = vmatpush1.bf16.msra.mxu0 0
    %1284 = vmatprep.subr.bf16.mxu0 0
    %1285 = vmatpush1.bf16.msra.mxu0 0
    %1286 = vmatprep.subr.bf16.mxu0 0
    %1287 = vmatpush1.bf16.msra.mxu0 %v40
    %1288 = vmatprep.subr.bf16.mxu0 0
    %1289 = vmatpush1.bf16.msra.mxu0 %v39
    %1290 = vmatprep.subr.bf16.mxu0 0
    %1291 = vmatpush2.bf16.msra.mxu0 0
    %1292 = vmatprep.subr.bf16.mxu0 0
    %1293 = vmatpush2.bf16.msra.mxu0 0
    %1294 = vmatprep.subr.bf16.mxu0 0
    %1295 = vmatpush2.bf16.msra.mxu0 0
    %1296 = vmatprep.subr.bf16.mxu0 0
    %1297 = vmatpush2.bf16.msra.mxu0 0
    %1298 = vmatprep.subr.bf16.mxu0 0
    %1299 = vmatpush2.bf16.msra.mxu0 0
    %1300 = vmatprep.subr.bf16.mxu0 0
    %1301 = vmatpush2.bf16.msra.mxu0 0
    %1302 = vmatprep.subr.bf16.mxu0 0
    %1303 = vmatpush2.bf16.msra.mxu0 0
    %1304 = vmatprep.subr.bf16.mxu0 0
    %1305 = vmatpush2.bf16.msra.mxu0 0
    %1306 = vmatprep.mubr.bf16.mxu0 0
    %1307 = vmatmul.mubr.bf16.gmra.mxu0 %v1272
    %v1308 = vpop.f32.mrf.mxu0
    %v1309 = vadd.f32 %v1263, %v1308
    %v1310 = vpop.f32.mrf.mxu0
    %v1311 = vpop.f32.mrf.mxu0
    %v1312 = vpop.f32.mrf.mxu0
    %1313 = vdwg.mxu0
    %v1314 = vadd.f32 %v1309, %v409
    %v1315 = vxor.u32 %v1314, 2147483648
    %v1316 = vmul.f32 %v1315, 1.442695
    %v1317 = vpow.pop %v1316
    %v1318 = vadd.f32 %v1317, 1.0
    %v1319 = vrcp.pop %v1318
    %v1320 = vmul.f32 1.0, %v1319
    %v1321 = vtanh.pop %v1314
    %v1322 = vmul.f32 %v1320, %v879
    %1324 = vrot.lane.b32.xlu0 %v1321, 96
    %v1325 = vpop.permute.xlu0 %1324
    %v1327 = vmul.f32 %v1320, %v1325
    %1329 = vrot.lane.b32.xlu0 %v1327, 16
    %v1330 = vpop.permute.xlu0 %1329
    %v1332 = vadd.f32 %v1322, %v1330
    %v1333 = vtanh.pop %v1332
    %1335 = vrot.lane.b32.xlu0 %v1333, 32
    %v1336 = vpop.permute.xlu0 %1335
    %v1338 = vmul.f32 %v1320, %v1336
    %v1339 = vpack.c.bf16 %v1338, %v1338
    %v1340 = vpack.c.bf16 %v1004, %v1004
    %1342 = vrot.lane.b32.xlu0 %v1340, 80
    %v1343 = vpop.permute.xlu0 %1342
    %v1345 = vsel %vm317, %v1343, 0
    %1347 = vmatprep.subr.bf16.mxu0 0
    %1348 = vmatpush1.bf16.msra.mxu0 0
    %1349 = vmatprep.subr.bf16.mxu0 0
    %1350 = vmatpush1.bf16.msra.mxu0 0
    %1351 = vmatprep.subr.bf16.mxu0 0
    %1352 = vmatpush1.bf16.msra.mxu0 0
    %1353 = vmatprep.subr.bf16.mxu0 0
    %1354 = vmatpush1.bf16.msra.mxu0 0
    %1355 = vmatprep.subr.bf16.mxu0 0
    %1356 = vmatpush1.bf16.msra.mxu0 0
    %1357 = vmatprep.subr.bf16.mxu0 0
    %1358 = vmatpush1.bf16.msra.mxu0 0
    %1359 = vmatprep.subr.bf16.mxu0 0
    %1360 = vmatpush1.bf16.msra.mxu0 0
    %1361 = vmatprep.subr.bf16.mxu0 0
    %1362 = vmatpush1.bf16.msra.mxu0 %v61
    %1363 = vmatprep.subr.bf16.mxu0 0
    %1364 = vmatpush2.bf16.msra.mxu0 0
    %1365 = vmatprep.subr.bf16.mxu0 0
    %1366 = vmatpush2.bf16.msra.mxu0 0
    %1367 = vmatprep.subr.bf16.mxu0 0
    %1368 = vmatpush2.bf16.msra.mxu0 0
    %1369 = vmatprep.subr.bf16.mxu0 0
    %1370 = vmatpush2.bf16.msra.mxu0 0
    %1371 = vmatprep.subr.bf16.mxu0 0
    %1372 = vmatpush2.bf16.msra.mxu0 0
    %1373 = vmatprep.subr.bf16.mxu0 0
    %1374 = vmatpush2.bf16.msra.mxu0 0
    %1375 = vmatprep.subr.bf16.mxu0 0
    %1376 = vmatpush2.bf16.msra.mxu0 0
    %1377 = vmatprep.subr.bf16.mxu0 0
    %1378 = vmatpush2.bf16.msra.mxu0 0
    %1379 = vmatprep.mubr.bf16.mxu0 0
    %1380 = vmatmul.mubr.bf16.gmra.mxu0 %v1345
    %v1381 = vpop.f32.mrf.mxu0
    %v1382 = vadd.f32 0.0, %v1381
    %v1383 = vpop.f32.mrf.mxu0
    %v1384 = vpop.f32.mrf.mxu0
    %v1385 = vpop.f32.mrf.mxu0
    %1386 = vdwg.mxu0
    %1388 = vrot.lane.b32.xlu0 %v1339, 80
    %v1389 = vpop.permute.xlu0 %1388
    %v1391 = vsel %vm317, %v1389, 0
    %1393 = vmatprep.subr.bf16.mxu0 0
    %1394 = vmatpush1.bf16.msra.mxu0 0
    %1395 = vmatprep.subr.bf16.mxu0 0
    %1396 = vmatpush1.bf16.msra.mxu0 0
    %1397 = vmatprep.subr.bf16.mxu0 0
    %1398 = vmatpush1.bf16.msra.mxu0 0
    %1399 = vmatprep.subr.bf16.mxu0 0
    %1400 = vmatpush1.bf16.msra.mxu0 0
    %1401 = vmatprep.subr.bf16.mxu0 0
    %1402 = vmatpush1.bf16.msra.mxu0 0
    %1403 = vmatprep.subr.bf16.mxu0 0
    %1404 = vmatpush1.bf16.msra.mxu0 0
    %1405 = vmatprep.subr.bf16.mxu0 0
    %1406 = vmatpush1.bf16.msra.mxu0 0
    %1407 = vmatprep.subr.bf16.mxu0 0
    %1408 = vmatpush1.bf16.msra.mxu0 %v43
    %1409 = vmatprep.subr.bf16.mxu0 0
    %1410 = vmatpush2.bf16.msra.mxu0 0
    %1411 = vmatprep.subr.bf16.mxu0 0
    %1412 = vmatpush2.bf16.msra.mxu0 0
    %1413 = vmatprep.subr.bf16.mxu0 0
    %1414 = vmatpush2.bf16.msra.mxu0 0
    %1415 = vmatprep.subr.bf16.mxu0 0
    %1416 = vmatpush2.bf16.msra.mxu0 0
    %1417 = vmatprep.subr.bf16.mxu0 0
    %1418 = vmatpush2.bf16.msra.mxu0 0
    %1419 = vmatprep.subr.bf16.mxu0 0
    %1420 = vmatpush2.bf16.msra.mxu0 0
    %1421 = vmatprep.subr.bf16.mxu0 0
    %1422 = vmatpush2.bf16.msra.mxu0 0
    %1423 = vmatprep.subr.bf16.mxu0 0
    %1424 = vmatpush2.bf16.msra.mxu0 0
    %1425 = vmatprep.mubr.bf16.mxu0 0
    %1426 = vmatmul.mubr.bf16.gmra.mxu0 %v1391
    %v1427 = vpop.f32.mrf.mxu0
    %v1428 = vadd.f32 %v1382, %v1427
    %v1429 = vpop.f32.mrf.mxu0
    %v1430 = vpop.f32.mrf.mxu0
    %v1431 = vpop.f32.mrf.mxu0
    %1432 = vdwg.mxu0
    %v1433 = vadd.f32 %v1428, %v525
    %v1434 = vxor.u32 %v1433, 2147483648
    %v1435 = vmul.f32 %v1434, 1.442695
    %v1436 = vpow.pop %v1435
    %v1437 = vadd.f32 %v1436, 1.0
    %v1438 = vrcp.pop %v1437
    %v1439 = vmul.f32 1.0, %v1438
    %v1440 = vtanh.pop %v1433
    %v1441 = vmul.f32 %v1439, %v998
    %1443 = vrot.lane.b32.xlu0 %v1440, 96
    %v1444 = vpop.permute.xlu0 %1443
    %v1446 = vmul.f32 %v1439, %v1444
    %1448 = vrot.lane.b32.xlu0 %v1446, 16
    %v1449 = vpop.permute.xlu0 %1448
    %v1451 = vadd.f32 %v1441, %v1449
    %v1452 = vtanh.pop %v1451
    %1454 = vrot.lane.b32.xlu0 %v1452, 32
    %v1455 = vpop.permute.xlu0 %1454
    %v1457 = vmul.f32 %v1439, %v1455
    %1458 = vmatprep.subr.bf16.mxu0 0
    %1459 = vmatpush1.bf16.msra.mxu0 0
    %1460 = vmatprep.subr.bf16.mxu0 0
    %1461 = vmatpush1.bf16.msra.mxu0 0
    %1462 = vmatprep.subr.bf16.mxu0 0
    %1463 = vmatpush1.bf16.msra.mxu0 0
    %1464 = vmatprep.subr.bf16.mxu0 0
    %1465 = vmatpush1.bf16.msra.mxu0 0
    %1466 = vmatprep.subr.bf16.mxu0 0
    %1467 = vmatpush1.bf16.msra.mxu0 0
    %1468 = vmatprep.subr.bf16.mxu0 0
    %1469 = vmatpush1.bf16.msra.mxu0 0
    %1470 = vmatprep.subr.bf16.mxu0 0
    %1471 = vmatpush1.bf16.msra.mxu0 %v49
    %1472 = vmatprep.subr.bf16.mxu0 0
    %1473 = vmatpush1.bf16.msra.mxu0 %v48
    %1474 = vmatprep.subr.bf16.mxu0 0
    %1475 = vmatpush2.bf16.msra.mxu0 0
    %1476 = vmatprep.subr.bf16.mxu0 0
    %1477 = vmatpush2.bf16.msra.mxu0 0
    %1478 = vmatprep.subr.bf16.mxu0 0
    %1479 = vmatpush2.bf16.msra.mxu0 0
    %1480 = vmatprep.subr.bf16.mxu0 0
    %1481 = vmatpush2.bf16.msra.mxu0 0
    %1482 = vmatprep.subr.bf16.mxu0 0
    %1483 = vmatpush2.bf16.msra.mxu0 0
    %1484 = vmatprep.subr.bf16.mxu0 0
    %1485 = vmatpush2.bf16.msra.mxu0 0
    %1486 = vmatprep.subr.bf16.mxu0 0
    %1487 = vmatpush2.bf16.msra.mxu0 0
    %1488 = vmatprep.subr.bf16.mxu0 0
    %1489 = vmatpush2.bf16.msra.mxu0 0
    %1490 = vmatprep.mubr.bf16.mxu0 0
    %1491 = vmatmul.mubr.bf16.gmra.mxu0 %v1160
    %v1492 = vpop.f32.mrf.mxu0
    %v1493 = vadd.f32 0.0, %v1492
    %v1494 = vpop.f32.mrf.mxu0
    %v1495 = vpop.f32.mrf.mxu0
    %v1496 = vpop.f32.mrf.mxu0
    %1497 = vdwg.mxu0
    %1498 = vrot.lane.b32.xlu0 %v78, 104
    %v1499 = vpop.permute.xlu0 %1498
    %v1501 = vsel %vm123, %v1499, 0
    %1503 = vmatprep.subr.bf16.mxu0 0
    %1504 = vmatpush1.bf16.msra.mxu0 0
    %1505 = vmatprep.subr.bf16.mxu0 0
    %1506 = vmatpush1.bf16.msra.mxu0 0
    %1507 = vmatprep.subr.bf16.mxu0 0
    %1508 = vmatpush1.bf16.msra.mxu0 0
    %1509 = vmatprep.subr.bf16.mxu0 0
    %1510 = vmatpush1.bf16.msra.mxu0 0
    %1511 = vmatprep.subr.bf16.mxu0 0
    %1512 = vmatpush1.bf16.msra.mxu0 0
    %1513 = vmatprep.subr.bf16.mxu0 0
    %1514 = vmatpush1.bf16.msra.mxu0 0
    %1515 = vmatprep.subr.bf16.mxu0 0
    %1516 = vmatpush1.bf16.msra.mxu0 0
    %1517 = vmatprep.subr.bf16.mxu0 0
    %1518 = vmatpush1.bf16.msra.mxu0 %v129
    %1519 = vmatprep.subr.bf16.mxu0 0
    %1520 = vmatpush2.bf16.msra.mxu0 0
    %1521 = vmatprep.subr.bf16.mxu0 0
    %1522 = vmatpush2.bf16.msra.mxu0 0
    %1523 = vmatprep.subr.bf16.mxu0 0
    %1524 = vmatpush2.bf16.msra.mxu0 0
    %1525 = vmatprep.subr.bf16.mxu0 0
    %1526 = vmatpush2.bf16.msra.mxu0 0
    %1527 = vmatprep.subr.bf16.mxu0 0
    %1528 = vmatpush2.bf16.msra.mxu0 0
    %1529 = vmatprep.subr.bf16.mxu0 0
    %1530 = vmatpush2.bf16.msra.mxu0 0
    %1531 = vmatprep.subr.bf16.mxu0 0
    %1532 = vmatpush2.bf16.msra.mxu0 0
    %1533 = vmatprep.subr.bf16.mxu0 0
    %1534 = vmatpush2.bf16.msra.mxu0 0
    %1535 = vmatprep.mubr.bf16.mxu0 0
    %1536 = vmatmul.mubr.bf16.gmra.mxu0 %v1501
    %v1537 = vpop.f32.mrf.mxu0
    %v1538 = vadd.f32 %v1493, %v1537
    %v1539 = vpop.f32.mrf.mxu0
    %v1540 = vpop.f32.mrf.mxu0
    %v1541 = vpop.f32.mrf.mxu0
    %1542 = vdwg.mxu0
    %v1543 = vadd.f32 %v1538, %v174
    %v1544 = vxor.u32 %v1543, 2147483648
    %v1545 = vmul.f32 %v1544, 1.442695
    %v1546 = vpow.pop %v1545
    %v1547 = vadd.f32 %v1546, 1.0
    %v1548 = vrcp.pop %v1547
    %v1549 = vmul.f32 1.0, %v1548
    %v1550 = vtanh.pop %v1543
    %v1551 = vmul.f32 %v1549, %v1108
    %1553 = vrot.lane.b32.xlu0 %v1550, 64
    %v1554 = vpop.permute.xlu0 %1553
    %v1556 = vmul.f32 %v1549, %v1554
    %1558 = vrot.lane.b32.xlu0 %v1556, 32
    %v1559 = vpop.permute.xlu0 %1558
    %v1561 = vadd.f32 %v1551, %v1559
    %v1562 = vtanh.pop %v1561
    %1564 = vrot.lane.b32.xlu0 %v1562, 64
    %v1565 = vpop.permute.xlu0 %1564
    %v1567 = vmul.f32 %v1549, %v1565
    %v1568 = vpack.c.bf16 %v1567, %v1567
    %1569 = vmatprep.subr.bf16.mxu0 0
    %1570 = vmatpush1.bf16.msra.mxu0 0
    %1571 = vmatprep.subr.bf16.mxu0 0
    %1572 = vmatpush1.bf16.msra.mxu0 0
    %1573 = vmatprep.subr.bf16.mxu0 0
    %1574 = vmatpush1.bf16.msra.mxu0 0
    %1575 = vmatprep.subr.bf16.mxu0 0
    %1576 = vmatpush1.bf16.msra.mxu0 0
    %1577 = vmatprep.subr.bf16.mxu0 0
    %1578 = vmatpush1.bf16.msra.mxu0 0
    %1579 = vmatprep.subr.bf16.mxu0 0
    %1580 = vmatpush1.bf16.msra.mxu0 0
    %1581 = vmatprep.subr.bf16.mxu0 0
    %1582 = vmatpush1.bf16.msra.mxu0 %v55
    %1583 = vmatprep.subr.bf16.mxu0 0
    %1584 = vmatpush1.bf16.msra.mxu0 %v54
    %1585 = vmatprep.subr.bf16.mxu0 0
    %1586 = vmatpush2.bf16.msra.mxu0 0
    %1587 = vmatprep.subr.bf16.mxu0 0
    %1588 = vmatpush2.bf16.msra.mxu0 0
    %1589 = vmatprep.subr.bf16.mxu0 0
    %1590 = vmatpush2.bf16.msra.mxu0 0
    %1591 = vmatprep.subr.bf16.mxu0 0
    %1592 = vmatpush2.bf16.msra.mxu0 0
    %1593 = vmatprep.subr.bf16.mxu0 0
    %1594 = vmatpush2.bf16.msra.mxu0 0
    %1595 = vmatprep.subr.bf16.mxu0 0
    %1596 = vmatpush2.bf16.msra.mxu0 0
    %1597 = vmatprep.subr.bf16.mxu0 0
    %1598 = vmatpush2.bf16.msra.mxu0 0
    %1599 = vmatprep.subr.bf16.mxu0 0
    %1600 = vmatpush2.bf16.msra.mxu0 0
    %1601 = vmatprep.mubr.bf16.mxu0 0
    %1602 = vmatmul.mubr.bf16.gmra.mxu0 %v1272
    %v1603 = vpop.f32.mrf.mxu0
    %v1604 = vadd.f32 0.0, %v1603
    %v1605 = vpop.f32.mrf.mxu0
    %v1606 = vpop.f32.mrf.mxu0
    %v1607 = vpop.f32.mrf.mxu0
    %1608 = vdwg.mxu0
    %1610 = vrot.lane.b32.xlu0 %v1568, 32
    %v1611 = vpop.permute.xlu0 %1610
    %v1613 = vsel %vm79, %v1611, 0
    %1615 = vmatprep.subr.bf16.mxu0 0
    %1616 = vmatpush1.bf16.msra.mxu0 0
    %1617 = vmatprep.subr.bf16.mxu0 0
    %1618 = vmatpush1.bf16.msra.mxu0 0
    %1619 = vmatprep.subr.bf16.mxu0 0
    %1620 = vmatpush1.bf16.msra.mxu0 0
    %1621 = vmatprep.subr.bf16.mxu0 0
    %1622 = vmatpush1.bf16.msra.mxu0 0
    %1623 = vmatprep.subr.bf16.mxu0 0
    %1624 = vmatpush1.bf16.msra.mxu0 0
    %1625 = vmatprep.subr.bf16.mxu0 0
    %1626 = vmatpush1.bf16.msra.mxu0 0
    %1627 = vmatprep.subr.bf16.mxu0 0
    %1628 = vmatpush1.bf16.msra.mxu0 %v34
    %1629 = vmatprep.subr.bf16.mxu0 0
    %1630 = vmatpush1.bf16.msra.mxu0 %v33
    %1631 = vmatprep.subr.bf16.mxu0 0
    %1632 = vmatpush2.bf16.msra.mxu0 0
    %1633 = vmatprep.subr.bf16.mxu0 0
    %1634 = vmatpush2.bf16.msra.mxu0 0
    %1635 = vmatprep.subr.bf16.mxu0 0
    %1636 = vmatpush2.bf16.msra.mxu0 0
    %1637 = vmatprep.subr.bf16.mxu0 0
    %1638 = vmatpush2.bf16.msra.mxu0 0
    %1639 = vmatprep.subr.bf16.mxu0 0
    %1640 = vmatpush2.bf16.msra.mxu0 0
    %1641 = vmatprep.subr.bf16.mxu0 0
    %1642 = vmatpush2.bf16.msra.mxu0 0
    %1643 = vmatprep.subr.bf16.mxu0 0
    %1644 = vmatpush2.bf16.msra.mxu0 0
    %1645 = vmatprep.subr.bf16.mxu0 0
    %1646 = vmatpush2.bf16.msra.mxu0 0
    %1647 = vmatprep.mubr.bf16.mxu0 0
    %1648 = vmatmul.mubr.bf16.gmra.mxu0 %v1613
    %v1649 = vpop.f32.mrf.mxu0
    %v1650 = vadd.f32 %v1604, %v1649
    %v1651 = vpop.f32.mrf.mxu0
    %v1652 = vpop.f32.mrf.mxu0
    %v1653 = vpop.f32.mrf.mxu0
    %1654 = vdwg.mxu0
    %v1655 = vadd.f32 %v1650, %v290
    %v1656 = vxor.u32 %v1655, 2147483648
    %v1657 = vmul.f32 %v1656, 1.442695
    %v1658 = vpow.pop %v1657
    %v1659 = vadd.f32 %v1658, 1.0
    %v1660 = vrcp.pop %v1659
    %v1661 = vmul.f32 1.0, %v1660
    %v1662 = vtanh.pop %v1655
    %v1663 = vmul.f32 %v1661, %v1220
    %1665 = vrot.lane.b32.xlu0 %v1662, 64
    %v1666 = vpop.permute.xlu0 %1665
    %v1668 = vmul.f32 %v1661, %v1666
    %1670 = vrot.lane.b32.xlu0 %v1668, 32
    %v1671 = vpop.permute.xlu0 %1670
    %v1673 = vadd.f32 %v1663, %v1671
    %v1674 = vtanh.pop %v1673
    %1676 = vrot.lane.b32.xlu0 %v1674, 64
    %v1677 = vpop.permute.xlu0 %1676
    %v1679 = vmul.f32 %v1661, %v1677
    %v1680 = vpack.c.bf16 %v1679, %v1679
    %1681 = vmatprep.subr.bf16.mxu0 0
    %1682 = vmatpush1.bf16.msra.mxu0 0
    %1683 = vmatprep.subr.bf16.mxu0 0
    %1684 = vmatpush1.bf16.msra.mxu0 0
    %1685 = vmatprep.subr.bf16.mxu0 0
    %1686 = vmatpush1.bf16.msra.mxu0 0
    %1687 = vmatprep.subr.bf16.mxu0 0
    %1688 = vmatpush1.bf16.msra.mxu0 0
    %1689 = vmatprep.subr.bf16.mxu0 0
    %1690 = vmatpush1.bf16.msra.mxu0 0
    %1691 = vmatprep.subr.bf16.mxu0 0
    %1692 = vmatpush1.bf16.msra.mxu0 0
    %1693 = vmatprep.subr.bf16.mxu0 0
    %1694 = vmatpush1.bf16.msra.mxu0 0
    %1695 = vmatprep.subr.bf16.mxu0 0
    %1696 = vmatpush1.bf16.msra.mxu0 %v58
    %1697 = vmatprep.subr.bf16.mxu0 0
    %1698 = vmatpush2.bf16.msra.mxu0 0
    %1699 = vmatprep.subr.bf16.mxu0 0
    %1700 = vmatpush2.bf16.msra.mxu0 0
    %1701 = vmatprep.subr.bf16.mxu0 0
    %1702 = vmatpush2.bf16.msra.mxu0 0
    %1703 = vmatprep.subr.bf16.mxu0 0
    %1704 = vmatpush2.bf16.msra.mxu0 0
    %1705 = vmatprep.subr.bf16.mxu0 0
    %1706 = vmatpush2.bf16.msra.mxu0 0
    %1707 = vmatprep.subr.bf16.mxu0 0
    %1708 = vmatpush2.bf16.msra.mxu0 0
    %1709 = vmatprep.subr.bf16.mxu0 0
    %1710 = vmatpush2.bf16.msra.mxu0 0
    %1711 = vmatprep.subr.bf16.mxu0 0
    %1712 = vmatpush2.bf16.msra.mxu0 0
    %1713 = vmatprep.mubr.bf16.mxu0 0
    %1714 = vmatmul.mubr.bf16.gmra.mxu0 %v1391
    %v1715 = vpop.f32.mrf.mxu0
    %v1716 = vadd.f32 0.0, %v1715
    %v1717 = vpop.f32.mrf.mxu0
    %v1718 = vpop.f32.mrf.mxu0
    %v1719 = vpop.f32.mrf.mxu0
    %1720 = vdwg.mxu0
    %1722 = vrot.lane.b32.xlu0 %v1680, 32
    %v1723 = vpop.permute.xlu0 %1722
    %v1725 = vsel %vm79, %v1723, 0
    %1727 = vmatprep.subr.bf16.mxu0 0
    %1728 = vmatpush1.bf16.msra.mxu0 0
    %1729 = vmatprep.subr.bf16.mxu0 0
    %1730 = vmatpush1.bf16.msra.mxu0 0
    %1731 = vmatprep.subr.bf16.mxu0 0
    %1732 = vmatpush1.bf16.msra.mxu0 0
    %1733 = vmatprep.subr.bf16.mxu0 0
    %1734 = vmatpush1.bf16.msra.mxu0 0
    %1735 = vmatprep.subr.bf16.mxu0 0
    %1736 = vmatpush1.bf16.msra.mxu0 0
    %1737 = vmatprep.subr.bf16.mxu0 0
    %1738 = vmatpush1.bf16.msra.mxu0 0
    %1739 = vmatprep.subr.bf16.mxu0 0
    %1740 = vmatpush1.bf16.msra.mxu0 %v40
    %1741 = vmatprep.subr.bf16.mxu0 0
    %1742 = vmatpush1.bf16.msra.mxu0 %v39
    %1743 = vmatprep.subr.bf16.mxu0 0
    %1744 = vmatpush2.bf16.msra.mxu0 0
    %1745 = vmatprep.subr.bf16.mxu0 0
    %1746 = vmatpush2.bf16.msra.mxu0 0
    %1747 = vmatprep.subr.bf16.mxu0 0
    %1748 = vmatpush2.bf16.msra.mxu0 0
    %1749 = vmatprep.subr.bf16.mxu0 0
    %1750 = vmatpush2.bf16.msra.mxu0 0
    %1751 = vmatprep.subr.bf16.mxu0 0
    %1752 = vmatpush2.bf16.msra.mxu0 0
    %1753 = vmatprep.subr.bf16.mxu0 0
    %1754 = vmatpush2.bf16.msra.mxu0 0
    %1755 = vmatprep.subr.bf16.mxu0 0
    %1756 = vmatpush2.bf16.msra.mxu0 0
    %1757 = vmatprep.subr.bf16.mxu0 0
    %1758 = vmatpush2.bf16.msra.mxu0 0
    %1759 = vmatprep.mubr.bf16.mxu0 0
    %1760 = vmatmul.mubr.bf16.gmra.mxu0 %v1725
    %v1761 = vpop.f32.mrf.mxu0
    %v1762 = vadd.f32 %v1716, %v1761
    %v1763 = vpop.f32.mrf.mxu0
    %v1764 = vpop.f32.mrf.mxu0
    %v1765 = vpop.f32.mrf.mxu0
    %1766 = vdwg.mxu0
    %v1767 = vadd.f32 %v1762, %v409
    %v1768 = vxor.u32 %v1767, 2147483648
    %v1769 = vmul.f32 %v1768, 1.442695
    %v1770 = vpow.pop %v1769
    %v1771 = vadd.f32 %v1770, 1.0
    %v1772 = vrcp.pop %v1771
    %v1773 = vmul.f32 1.0, %v1772
    %v1774 = vtanh.pop %v1767
    %v1775 = vmul.f32 %v1773, %v1332
    %1777 = vrot.lane.b32.xlu0 %v1774, 96
    %v1778 = vpop.permute.xlu0 %1777
    %v1780 = vmul.f32 %v1773, %v1778
    %1782 = vrot.lane.b32.xlu0 %v1780, 16
    %v1783 = vpop.permute.xlu0 %1782
    %v1785 = vadd.f32 %v1775, %v1783
    %v1786 = vtanh.pop %v1785
    %1788 = vrot.lane.b32.xlu0 %v1786, 32
    %v1789 = vpop.permute.xlu0 %1788
    %v1791 = vmul.f32 %v1773, %v1789
    %v1792 = vpack.c.bf16 %v1791, %v1791
    %v1793 = vpack.c.bf16 %v1457, %v1457
    %1795 = vrot.lane.b32.xlu0 %v1793, 80
    %v1796 = vpop.permute.xlu0 %1795
    %v1798 = vsel %vm317, %v1796, 0
    %1800 = vmatprep.subr.bf16.mxu0 0
    %1801 = vmatpush1.bf16.msra.mxu0 0
    %1802 = vmatprep.subr.bf16.mxu0 0
    %1803 = vmatpush1.bf16.msra.mxu0 0
    %1804 = vmatprep.subr.bf16.mxu0 0
    %1805 = vmatpush1.bf16.msra.mxu0 0
    %1806 = vmatprep.subr.bf16.mxu0 0
    %1807 = vmatpush1.bf16.msra.mxu0 0
    %1808 = vmatprep.subr.bf16.mxu0 0
    %1809 = vmatpush1.bf16.msra.mxu0 0
    %1810 = vmatprep.subr.bf16.mxu0 0
    %1811 = vmatpush1.bf16.msra.mxu0 0
    %1812 = vmatprep.subr.bf16.mxu0 0
    %1813 = vmatpush1.bf16.msra.mxu0 0
    %1814 = vmatprep.subr.bf16.mxu0 0
    %1815 = vmatpush1.bf16.msra.mxu0 %v61
    %1816 = vmatprep.subr.bf16.mxu0 0
    %1817 = vmatpush2.bf16.msra.mxu0 0
    %1818 = vmatprep.subr.bf16.mxu0 0
    %1819 = vmatpush2.bf16.msra.mxu0 0
    %1820 = vmatprep.subr.bf16.mxu0 0
    %1821 = vmatpush2.bf16.msra.mxu0 0
    %1822 = vmatprep.subr.bf16.mxu0 0
    %1823 = vmatpush2.bf16.msra.mxu0 0
    %1824 = vmatprep.subr.bf16.mxu0 0
    %1825 = vmatpush2.bf16.msra.mxu0 0
    %1826 = vmatprep.subr.bf16.mxu0 0
    %1827 = vmatpush2.bf16.msra.mxu0 0
    %1828 = vmatprep.subr.bf16.mxu0 0
    %1829 = vmatpush2.bf16.msra.mxu0 0
    %1830 = vmatprep.subr.bf16.mxu0 0
    %1831 = vmatpush2.bf16.msra.mxu0 0
    %1832 = vmatprep.mubr.bf16.mxu0 0
    %1833 = vmatmul.mubr.bf16.gmra.mxu0 %v1798
    %v1834 = vpop.f32.mrf.mxu0
    %v1835 = vadd.f32 0.0, %v1834
    %v1836 = vpop.f32.mrf.mxu0
    %v1837 = vpop.f32.mrf.mxu0
    %v1838 = vpop.f32.mrf.mxu0
    %1839 = vdwg.mxu0
    %1841 = vrot.lane.b32.xlu0 %v1792, 80
    %v1842 = vpop.permute.xlu0 %1841
    %v1844 = vsel %vm317, %v1842, 0
    %1846 = vmatprep.subr.bf16.mxu0 0
    %1847 = vmatpush1.bf16.msra.mxu0 0
    %1848 = vmatprep.subr.bf16.mxu0 0
    %1849 = vmatpush1.bf16.msra.mxu0 0
    %1850 = vmatprep.subr.bf16.mxu0 0
    %1851 = vmatpush1.bf16.msra.mxu0 0
    %1852 = vmatprep.subr.bf16.mxu0 0
    %1853 = vmatpush1.bf16.msra.mxu0 0
    %1854 = vmatprep.subr.bf16.mxu0 0
    %1855 = vmatpush1.bf16.msra.mxu0 0
    %1856 = vmatprep.subr.bf16.mxu0 0
    %1857 = vmatpush1.bf16.msra.mxu0 0
    %1858 = vmatprep.subr.bf16.mxu0 0
    %1859 = vmatpush1.bf16.msra.mxu0 0
    %1860 = vmatprep.subr.bf16.mxu0 0
    %1861 = vmatpush1.bf16.msra.mxu0 %v43
    %1862 = vmatprep.subr.bf16.mxu0 0
    %1863 = vmatpush2.bf16.msra.mxu0 0
    %1864 = vmatprep.subr.bf16.mxu0 0
    %1865 = vmatpush2.bf16.msra.mxu0 0
    %1866 = vmatprep.subr.bf16.mxu0 0
    %1867 = vmatpush2.bf16.msra.mxu0 0
    %1868 = vmatprep.subr.bf16.mxu0 0
    %1869 = vmatpush2.bf16.msra.mxu0 0
    %1870 = vmatprep.subr.bf16.mxu0 0
    %1871 = vmatpush2.bf16.msra.mxu0 0
    %1872 = vmatprep.subr.bf16.mxu0 0
    %1873 = vmatpush2.bf16.msra.mxu0 0
    %1874 = vmatprep.subr.bf16.mxu0 0
    %1875 = vmatpush2.bf16.msra.mxu0 0
    %1876 = vmatprep.subr.bf16.mxu0 0
    %1877 = vmatpush2.bf16.msra.mxu0 0
    %1878 = vmatprep.mubr.bf16.mxu0 0
    %1879 = vmatmul.mubr.bf16.gmra.mxu0 %v1844
    %v1880 = vpop.f32.mrf.mxu0
    %v1881 = vadd.f32 %v1835, %v1880
    %v1882 = vpop.f32.mrf.mxu0
    %v1883 = vpop.f32.mrf.mxu0
    %v1884 = vpop.f32.mrf.mxu0
    %1885 = vdwg.mxu0
    %v1886 = vadd.f32 %v1881, %v525
    %v1887 = vxor.u32 %v1886, 2147483648
    %v1888 = vmul.f32 %v1887, 1.442695
    %v1889 = vpow.pop %v1888
    %v1890 = vadd.f32 %v1889, 1.0
    %v1891 = vrcp.pop %v1890
    %v1892 = vmul.f32 1.0, %v1891
    %v1893 = vtanh.pop %v1886
    %v1894 = vmul.f32 %v1892, %v1451
    %1896 = vrot.lane.b32.xlu0 %v1893, 96
    %v1897 = vpop.permute.xlu0 %1896
    %v1899 = vmul.f32 %v1892, %v1897
    %1901 = vrot.lane.b32.xlu0 %v1899, 16
    %v1902 = vpop.permute.xlu0 %1901
    %v1904 = vadd.f32 %v1894, %v1902
    %v1905 = vtanh.pop %v1904
    %1907 = vrot.lane.b32.xlu0 %v1905, 32
    %v1908 = vpop.permute.xlu0 %1907
    %v1910 = vmul.f32 %v1892, %v1908
    %1911 = vmatprep.subr.bf16.mxu0 0
    %1912 = vmatpush1.bf16.msra.mxu0 0
    %1913 = vmatprep.subr.bf16.mxu0 0
    %1914 = vmatpush1.bf16.msra.mxu0 0
    %1915 = vmatprep.subr.bf16.mxu0 0
    %1916 = vmatpush1.bf16.msra.mxu0 0
    %1917 = vmatprep.subr.bf16.mxu0 0
    %1918 = vmatpush1.bf16.msra.mxu0 0
    %1919 = vmatprep.subr.bf16.mxu0 0
    %1920 = vmatpush1.bf16.msra.mxu0 0
    %1921 = vmatprep.subr.bf16.mxu0 0
    %1922 = vmatpush1.bf16.msra.mxu0 0
    %1923 = vmatprep.subr.bf16.mxu0 0
    %1924 = vmatpush1.bf16.msra.mxu0 %v49
    %1925 = vmatprep.subr.bf16.mxu0 0
    %1926 = vmatpush1.bf16.msra.mxu0 %v48
    %1927 = vmatprep.subr.bf16.mxu0 0
    %1928 = vmatpush2.bf16.msra.mxu0 0
    %1929 = vmatprep.subr.bf16.mxu0 0
    %1930 = vmatpush2.bf16.msra.mxu0 0
    %1931 = vmatprep.subr.bf16.mxu0 0
    %1932 = vmatpush2.bf16.msra.mxu0 0
    %1933 = vmatprep.subr.bf16.mxu0 0
    %1934 = vmatpush2.bf16.msra.mxu0 0
    %1935 = vmatprep.subr.bf16.mxu0 0
    %1936 = vmatpush2.bf16.msra.mxu0 0
    %1937 = vmatprep.subr.bf16.mxu0 0
    %1938 = vmatpush2.bf16.msra.mxu0 0
    %1939 = vmatprep.subr.bf16.mxu0 0
    %1940 = vmatpush2.bf16.msra.mxu0 0
    %1941 = vmatprep.subr.bf16.mxu0 0
    %1942 = vmatpush2.bf16.msra.mxu0 0
    %1943 = vmatprep.mubr.bf16.mxu0 0
    %1944 = vmatmul.mubr.bf16.gmra.mxu0 %v1613
    %v1945 = vpop.f32.mrf.mxu0
    %v1946 = vadd.f32 0.0, %v1945
    %v1947 = vpop.f32.mrf.mxu0
    %v1948 = vpop.f32.mrf.mxu0
    %v1949 = vpop.f32.mrf.mxu0
    %1950 = vdwg.mxu0
    %1951 = vrot.lane.b32.xlu0 %v78, 96
    %v1952 = vpop.permute.xlu0 %1951
    %v1954 = vsel %vm123, %v1952, 0
    %1956 = vmatprep.subr.bf16.mxu0 0
    %1957 = vmatpush1.bf16.msra.mxu0 0
    %1958 = vmatprep.subr.bf16.mxu0 0
    %1959 = vmatpush1.bf16.msra.mxu0 0
    %1960 = vmatprep.subr.bf16.mxu0 0
    %1961 = vmatpush1.bf16.msra.mxu0 0
    %1962 = vmatprep.subr.bf16.mxu0 0
    %1963 = vmatpush1.bf16.msra.mxu0 0
    %1964 = vmatprep.subr.bf16.mxu0 0
    %1965 = vmatpush1.bf16.msra.mxu0 0
    %1966 = vmatprep.subr.bf16.mxu0 0
    %1967 = vmatpush1.bf16.msra.mxu0 0
    %1968 = vmatprep.subr.bf16.mxu0 0
    %1969 = vmatpush1.bf16.msra.mxu0 0
    %1970 = vmatprep.subr.bf16.mxu0 0
    %1971 = vmatpush1.bf16.msra.mxu0 %v129
    %1972 = vmatprep.subr.bf16.mxu0 0
    %1973 = vmatpush2.bf16.msra.mxu0 0
    %1974 = vmatprep.subr.bf16.mxu0 0
    %1975 = vmatpush2.bf16.msra.mxu0 0
    %1976 = vmatprep.subr.bf16.mxu0 0
    %1977 = vmatpush2.bf16.msra.mxu0 0
    %1978 = vmatprep.subr.bf16.mxu0 0
    %1979 = vmatpush2.bf16.msra.mxu0 0
    %1980 = vmatprep.subr.bf16.mxu0 0
    %1981 = vmatpush2.bf16.msra.mxu0 0
    %1982 = vmatprep.subr.bf16.mxu0 0
    %1983 = vmatpush2.bf16.msra.mxu0 0
    %1984 = vmatprep.subr.bf16.mxu0 0
    %1985 = vmatpush2.bf16.msra.mxu0 0
    %1986 = vmatprep.subr.bf16.mxu0 0
    %1987 = vmatpush2.bf16.msra.mxu0 0
    %1988 = vmatprep.mubr.bf16.mxu0 0
    %1989 = vmatmul.mubr.bf16.gmra.mxu0 %v1954
    %v1990 = vpop.f32.mrf.mxu0
    %v1991 = vadd.f32 %v1946, %v1990
    %v1992 = vpop.f32.mrf.mxu0
    %v1993 = vpop.f32.mrf.mxu0
    %v1994 = vpop.f32.mrf.mxu0
    %1995 = vdwg.mxu0
    %v1996 = vadd.f32 %v1991, %v174
    %v1997 = vxor.u32 %v1996, 2147483648
    %v1998 = vmul.f32 %v1997, 1.442695
    %v1999 = vpow.pop %v1998
    %v2000 = vadd.f32 %v1999, 1.0
    %v2001 = vrcp.pop %v2000
    %v2002 = vmul.f32 1.0, %v2001
    %v2003 = vtanh.pop %v1996
    %v2004 = vmul.f32 %v2002, %v1561
    %2006 = vrot.lane.b32.xlu0 %v2003, 64
    %v2007 = vpop.permute.xlu0 %2006
    %v2009 = vmul.f32 %v2002, %v2007
    %2011 = vrot.lane.b32.xlu0 %v2009, 32
    %v2012 = vpop.permute.xlu0 %2011
    %v2014 = vadd.f32 %v2004, %v2012
    %v2015 = vtanh.pop %v2014
    %2017 = vrot.lane.b32.xlu0 %v2015, 64
    %v2018 = vpop.permute.xlu0 %2017
    %v2020 = vmul.f32 %v2002, %v2018
    %v2021 = vpack.c.bf16 %v2020, %v2020
    %2022 = vmatprep.subr.bf16.mxu0 0
    %2023 = vmatpush1.bf16.msra.mxu0 0
    %2024 = vmatprep.subr.bf16.mxu0 0
    %2025 = vmatpush1.bf16.msra.mxu0 0
    %2026 = vmatprep.subr.bf16.mxu0 0
    %2027 = vmatpush1.bf16.msra.mxu0 0
    %2028 = vmatprep.subr.bf16.mxu0 0
    %2029 = vmatpush1.bf16.msra.mxu0 0
    %2030 = vmatprep.subr.bf16.mxu0 0
    %2031 = vmatpush1.bf16.msra.mxu0 0
    %2032 = vmatprep.subr.bf16.mxu0 0
    %2033 = vmatpush1.bf16.msra.mxu0 0
    %2034 = vmatprep.subr.bf16.mxu0 0
    %2035 = vmatpush1.bf16.msra.mxu0 %v55
    %2036 = vmatprep.subr.bf16.mxu0 0
    %2037 = vmatpush1.bf16.msra.mxu0 %v54
    %2038 = vmatprep.subr.bf16.mxu0 0
    %2039 = vmatpush2.bf16.msra.mxu0 0
    %2040 = vmatprep.subr.bf16.mxu0 0
    %2041 = vmatpush2.bf16.msra.mxu0 0
    %2042 = vmatprep.subr.bf16.mxu0 0
    %2043 = vmatpush2.bf16.msra.mxu0 0
    %2044 = vmatprep.subr.bf16.mxu0 0
    %2045 = vmatpush2.bf16.msra.mxu0 0
    %2046 = vmatprep.subr.bf16.mxu0 0
    %2047 = vmatpush2.bf16.msra.mxu0 0
    %2048 = vmatprep.subr.bf16.mxu0 0
    %2049 = vmatpush2.bf16.msra.mxu0 0
    %2050 = vmatprep.subr.bf16.mxu0 0
    %2051 = vmatpush2.bf16.msra.mxu0 0
    %2052 = vmatprep.subr.bf16.mxu0 0
    %2053 = vmatpush2.bf16.msra.mxu0 0
    %2054 = vmatprep.mubr.bf16.mxu0 0
    %2055 = vmatmul.mubr.bf16.gmra.mxu0 %v1725
    %v2056 = vpop.f32.mrf.mxu0
    %v2057 = vadd.f32 0.0, %v2056
    %v2058 = vpop.f32.mrf.mxu0
    %v2059 = vpop.f32.mrf.mxu0
    %v2060 = vpop.f32.mrf.mxu0
    %2061 = vdwg.mxu0
    %2063 = vrot.lane.b32.xlu0 %v2021, 32
    %v2064 = vpop.permute.xlu0 %2063
    %v2066 = vsel %vm79, %v2064, 0
    %2068 = vmatprep.subr.bf16.mxu0 0
    %2069 = vmatpush1.bf16.msra.mxu0 0
    %2070 = vmatprep.subr.bf16.mxu0 0
    %2071 = vmatpush1.bf16.msra.mxu0 0
    %2072 = vmatprep.subr.bf16.mxu0 0
    %2073 = vmatpush1.bf16.msra.mxu0 0
    %2074 = vmatprep.subr.bf16.mxu0 0
    %2075 = vmatpush1.bf16.msra.mxu0 0
    %2076 = vmatprep.subr.bf16.mxu0 0
    %2077 = vmatpush1.bf16.msra.mxu0 0
    %2078 = vmatprep.subr.bf16.mxu0 0
    %2079 = vmatpush1.bf16.msra.mxu0 0
    %2080 = vmatprep.subr.bf16.mxu0 0
    %2081 = vmatpush1.bf16.msra.mxu0 %v34
    %2082 = vmatprep.subr.bf16.mxu0 0
    %2083 = vmatpush1.bf16.msra.mxu0 %v33
    %2084 = vmatprep.subr.bf16.mxu0 0
    %2085 = vmatpush2.bf16.msra.mxu0 0
    %2086 = vmatprep.subr.bf16.mxu0 0
    %2087 = vmatpush2.bf16.msra.mxu0 0
    %2088 = vmatprep.subr.bf16.mxu0 0
    %2089 = vmatpush2.bf16.msra.mxu0 0
    %2090 = vmatprep.subr.bf16.mxu0 0
    %2091 = vmatpush2.bf16.msra.mxu0 0
    %2092 = vmatprep.subr.bf16.mxu0 0
    %2093 = vmatpush2.bf16.msra.mxu0 0
    %2094 = vmatprep.subr.bf16.mxu0 0
    %2095 = vmatpush2.bf16.msra.mxu0 0
    %2096 = vmatprep.subr.bf16.mxu0 0
    %2097 = vmatpush2.bf16.msra.mxu0 0
    %2098 = vmatprep.subr.bf16.mxu0 0
    %2099 = vmatpush2.bf16.msra.mxu0 0
    %2100 = vmatprep.mubr.bf16.mxu0 0
    %2101 = vmatmul.mubr.bf16.gmra.mxu0 %v2066
    %v2102 = vpop.f32.mrf.mxu0
    %v2103 = vadd.f32 %v2057, %v2102
    %v2104 = vpop.f32.mrf.mxu0
    %v2105 = vpop.f32.mrf.mxu0
    %v2106 = vpop.f32.mrf.mxu0
    %2107 = vdwg.mxu0
    %v2108 = vadd.f32 %v2103, %v290
    %v2109 = vxor.u32 %v2108, 2147483648
    %v2110 = vmul.f32 %v2109, 1.442695
    %v2111 = vpow.pop %v2110
    %v2112 = vadd.f32 %v2111, 1.0
    %v2113 = vrcp.pop %v2112
    %v2114 = vmul.f32 1.0, %v2113
    %v2115 = vtanh.pop %v2108
    %v2116 = vmul.f32 %v2114, %v1673
    %2118 = vrot.lane.b32.xlu0 %v2115, 64
    %v2119 = vpop.permute.xlu0 %2118
    %v2121 = vmul.f32 %v2114, %v2119
    %2123 = vrot.lane.b32.xlu0 %v2121, 32
    %v2124 = vpop.permute.xlu0 %2123
    %v2126 = vadd.f32 %v2116, %v2124
    %v2127 = vtanh.pop %v2126
    %2129 = vrot.lane.b32.xlu0 %v2127, 64
    %v2130 = vpop.permute.xlu0 %2129
    %v2132 = vmul.f32 %v2114, %v2130
    %v2133 = vpack.c.bf16 %v2132, %v2132
    %2134 = vmatprep.subr.bf16.mxu0 0
    %2135 = vmatpush1.bf16.msra.mxu0 0
    %2136 = vmatprep.subr.bf16.mxu0 0
    %2137 = vmatpush1.bf16.msra.mxu0 0
    %2138 = vmatprep.subr.bf16.mxu0 0
    %2139 = vmatpush1.bf16.msra.mxu0 0
    %2140 = vmatprep.subr.bf16.mxu0 0
    %2141 = vmatpush1.bf16.msra.mxu0 0
    %2142 = vmatprep.subr.bf16.mxu0 0
    %2143 = vmatpush1.bf16.msra.mxu0 0
    %2144 = vmatprep.subr.bf16.mxu0 0
    %2145 = vmatpush1.bf16.msra.mxu0 0
    %2146 = vmatprep.subr.bf16.mxu0 0
    %2147 = vmatpush1.bf16.msra.mxu0 0
    %2148 = vmatprep.subr.bf16.mxu0 0
    %2149 = vmatpush1.bf16.msra.mxu0 %v58
    %2150 = vmatprep.subr.bf16.mxu0 0
    %2151 = vmatpush2.bf16.msra.mxu0 0
    %2152 = vmatprep.subr.bf16.mxu0 0
    %2153 = vmatpush2.bf16.msra.mxu0 0
    %2154 = vmatprep.subr.bf16.mxu0 0
    %2155 = vmatpush2.bf16.msra.mxu0 0
    %2156 = vmatprep.subr.bf16.mxu0 0
    %2157 = vmatpush2.bf16.msra.mxu0 0
    %2158 = vmatprep.subr.bf16.mxu0 0
    %2159 = vmatpush2.bf16.msra.mxu0 0
    %2160 = vmatprep.subr.bf16.mxu0 0
    %2161 = vmatpush2.bf16.msra.mxu0 0
    %2162 = vmatprep.subr.bf16.mxu0 0
    %2163 = vmatpush2.bf16.msra.mxu0 0
    %2164 = vmatprep.subr.bf16.mxu0 0
    %2165 = vmatpush2.bf16.msra.mxu0 0
    %2166 = vmatprep.mubr.bf16.mxu0 0
    %2167 = vmatmul.mubr.bf16.gmra.mxu0 %v1844
    %v2168 = vpop.f32.mrf.mxu0
    %v2169 = vadd.f32 0.0, %v2168
    %v2170 = vpop.f32.mrf.mxu0
    %v2171 = vpop.f32.mrf.mxu0
    %v2172 = vpop.f32.mrf.mxu0
    %2173 = vdwg.mxu0
    %2175 = vrot.lane.b32.xlu0 %v2133, 32
    %v2176 = vpop.permute.xlu0 %2175
    %v2178 = vsel %vm79, %v2176, 0
    %2180 = vmatprep.subr.bf16.mxu0 0
    %2181 = vmatpush1.bf16.msra.mxu0 0
    %2182 = vmatprep.subr.bf16.mxu0 0
    %2183 = vmatpush1.bf16.msra.mxu0 0
    %2184 = vmatprep.subr.bf16.mxu0 0
    %2185 = vmatpush1.bf16.msra.mxu0 0
    %2186 = vmatprep.subr.bf16.mxu0 0
    %2187 = vmatpush1.bf16.msra.mxu0 0
    %2188 = vmatprep.subr.bf16.mxu0 0
    %2189 = vmatpush1.bf16.msra.mxu0 0
    %2190 = vmatprep.subr.bf16.mxu0 0
    %2191 = vmatpush1.bf16.msra.mxu0 0
    %2192 = vmatprep.subr.bf16.mxu0 0
    %2193 = vmatpush1.bf16.msra.mxu0 %v40
    %2194 = vmatprep.subr.bf16.mxu0 0
    %2195 = vmatpush1.bf16.msra.mxu0 %v39
    %2196 = vmatprep.subr.bf16.mxu0 0
    %2197 = vmatpush2.bf16.msra.mxu0 0
    %2198 = vmatprep.subr.bf16.mxu0 0
    %2199 = vmatpush2.bf16.msra.mxu0 0
    %2200 = vmatprep.subr.bf16.mxu0 0
    %2201 = vmatpush2.bf16.msra.mxu0 0
    %2202 = vmatprep.subr.bf16.mxu0 0
    %2203 = vmatpush2.bf16.msra.mxu0 0
    %2204 = vmatprep.subr.bf16.mxu0 0
    %2205 = vmatpush2.bf16.msra.mxu0 0
    %2206 = vmatprep.subr.bf16.mxu0 0
    %2207 = vmatpush2.bf16.msra.mxu0 0
    %2208 = vmatprep.subr.bf16.mxu0 0
    %2209 = vmatpush2.bf16.msra.mxu0 0
    %2210 = vmatprep.subr.bf16.mxu0 0
    %2211 = vmatpush2.bf16.msra.mxu0 0
    %2212 = vmatprep.mubr.bf16.mxu0 0
    %2213 = vmatmul.mubr.bf16.gmra.mxu0 %v2178
    %v2214 = vpop.f32.mrf.mxu0
    %v2215 = vadd.f32 %v2169, %v2214
    %v2216 = vpop.f32.mrf.mxu0
    %v2217 = vpop.f32.mrf.mxu0
    %v2218 = vpop.f32.mrf.mxu0
    %2219 = vdwg.mxu0
    %v2220 = vadd.f32 %v2215, %v409
    %v2221 = vxor.u32 %v2220, 2147483648
    %v2222 = vmul.f32 %v2221, 1.442695
    %v2223 = vpow.pop %v2222
    %v2224 = vadd.f32 %v2223, 1.0
    %v2225 = vrcp.pop %v2224
    %v2226 = vmul.f32 1.0, %v2225
    %v2227 = vtanh.pop %v2220
    %v2228 = vmul.f32 %v2226, %v1785
    %2230 = vrot.lane.b32.xlu0 %v2227, 96
    %v2231 = vpop.permute.xlu0 %2230
    %v2233 = vmul.f32 %v2226, %v2231
    %2235 = vrot.lane.b32.xlu0 %v2233, 16
    %v2236 = vpop.permute.xlu0 %2235
    %v2238 = vadd.f32 %v2228, %v2236
    %v2239 = vtanh.pop %v2238
    %2241 = vrot.lane.b32.xlu0 %v2239, 32
    %v2242 = vpop.permute.xlu0 %2241
    %v2244 = vmul.f32 %v2226, %v2242
    %v2245 = vpack.c.bf16 %v2244, %v2244
    %v2246 = vpack.c.bf16 %v1910, %v1910
    %2248 = vrot.lane.b32.xlu0 %v2246, 80
    %v2249 = vpop.permute.xlu0 %2248
    %v2251 = vsel %vm317, %v2249, 0
    %2253 = vmatprep.subr.bf16.mxu0 0
    %2254 = vmatpush1.bf16.msra.mxu0 0
    %2255 = vmatprep.subr.bf16.mxu0 0
    %2256 = vmatpush1.bf16.msra.mxu0 0
    %2257 = vmatprep.subr.bf16.mxu0 0
    %2258 = vmatpush1.bf16.msra.mxu0 0
    %2259 = vmatprep.subr.bf16.mxu0 0
    %2260 = vmatpush1.bf16.msra.mxu0 0
    %2261 = vmatprep.subr.bf16.mxu0 0
    %2262 = vmatpush1.bf16.msra.mxu0 0
    %2263 = vmatprep.subr.bf16.mxu0 0
    %2264 = vmatpush1.bf16.msra.mxu0 0
    %2265 = vmatprep.subr.bf16.mxu0 0
    %2266 = vmatpush1.bf16.msra.mxu0 0
    %2267 = vmatprep.subr.bf16.mxu0 0
    %2268 = vmatpush1.bf16.msra.mxu0 %v61
    %2269 = vmatprep.subr.bf16.mxu0 0
    %2270 = vmatpush2.bf16.msra.mxu0 0
    %2271 = vmatprep.subr.bf16.mxu0 0
    %2272 = vmatpush2.bf16.msra.mxu0 0
    %2273 = vmatprep.subr.bf16.mxu0 0
    %2274 = vmatpush2.bf16.msra.mxu0 0
    %2275 = vmatprep.subr.bf16.mxu0 0
    %2276 = vmatpush2.bf16.msra.mxu0 0
    %2277 = vmatprep.subr.bf16.mxu0 0
    %2278 = vmatpush2.bf16.msra.mxu0 0
    %2279 = vmatprep.subr.bf16.mxu0 0
    %2280 = vmatpush2.bf16.msra.mxu0 0
    %2281 = vmatprep.subr.bf16.mxu0 0
    %2282 = vmatpush2.bf16.msra.mxu0 0
    %2283 = vmatprep.subr.bf16.mxu0 0
    %2284 = vmatpush2.bf16.msra.mxu0 0
    %2285 = vmatprep.mubr.bf16.mxu0 0
    %2286 = vmatmul.mubr.bf16.gmra.mxu0 %v2251
    %v2287 = vpop.f32.mrf.mxu0
    %v2288 = vadd.f32 0.0, %v2287
    %v2289 = vpop.f32.mrf.mxu0
    %v2290 = vpop.f32.mrf.mxu0
    %v2291 = vpop.f32.mrf.mxu0
    %2292 = vdwg.mxu0
    %2294 = vrot.lane.b32.xlu0 %v2245, 80
    %v2295 = vpop.permute.xlu0 %2294
    %v2297 = vsel %vm317, %v2295, 0
    %2299 = vmatprep.subr.bf16.mxu0 0
    %2300 = vmatpush1.bf16.msra.mxu0 0
    %2301 = vmatprep.subr.bf16.mxu0 0
    %2302 = vmatpush1.bf16.msra.mxu0 0
    %2303 = vmatprep.subr.bf16.mxu0 0
    %2304 = vmatpush1.bf16.msra.mxu0 0
    %2305 = vmatprep.subr.bf16.mxu0 0
    %2306 = vmatpush1.bf16.msra.mxu0 0
    %2307 = vmatprep.subr.bf16.mxu0 0
    %2308 = vmatpush1.bf16.msra.mxu0 0
    %2309 = vmatprep.subr.bf16.mxu0 0
    %2310 = vmatpush1.bf16.msra.mxu0 0
    %2311 = vmatprep.subr.bf16.mxu0 0
    %2312 = vmatpush1.bf16.msra.mxu0 0
    %2313 = vmatprep.subr.bf16.mxu0 0
    %2314 = vmatpush1.bf16.msra.mxu0 %v43
    %2315 = vmatprep.subr.bf16.mxu0 0
    %2316 = vmatpush2.bf16.msra.mxu0 0
    %2317 = vmatprep.subr.bf16.mxu0 0
    %2318 = vmatpush2.bf16.msra.mxu0 0
    %2319 = vmatprep.subr.bf16.mxu0 0
    %2320 = vmatpush2.bf16.msra.mxu0 0
    %2321 = vmatprep.subr.bf16.mxu0 0
    %2322 = vmatpush2.bf16.msra.mxu0 0
    %2323 = vmatprep.subr.bf16.mxu0 0
    %2324 = vmatpush2.bf16.msra.mxu0 0
    %2325 = vmatprep.subr.bf16.mxu0 0
    %2326 = vmatpush2.bf16.msra.mxu0 0
    %2327 = vmatprep.subr.bf16.mxu0 0
    %2328 = vmatpush2.bf16.msra.mxu0 0
    %2329 = vmatprep.subr.bf16.mxu0 0
    %2330 = vmatpush2.bf16.msra.mxu0 0
    %2331 = vmatprep.mubr.bf16.mxu0 0
    %2332 = vmatmul.mubr.bf16.gmra.mxu0 %v2297
    %v2333 = vpop.f32.mrf.mxu0
    %v2334 = vadd.f32 %v2288, %v2333
    %v2335 = vpop.f32.mrf.mxu0
    %v2336 = vpop.f32.mrf.mxu0
    %v2337 = vpop.f32.mrf.mxu0
    %2338 = vdwg.mxu0
    %v2339 = vadd.f32 %v2334, %v525
    %v2340 = vxor.u32 %v2339, 2147483648
    %v2341 = vmul.f32 %v2340, 1.442695
    %v2342 = vpow.pop %v2341
    %v2343 = vadd.f32 %v2342, 1.0
    %v2344 = vrcp.pop %v2343
    %v2345 = vmul.f32 1.0, %v2344
    %v2346 = vtanh.pop %v2339
    %v2347 = vmul.f32 %v2345, %v1904
    %2349 = vrot.lane.b32.xlu0 %v2346, 96
    %v2350 = vpop.permute.xlu0 %2349
    %v2352 = vmul.f32 %v2345, %v2350
    %2354 = vrot.lane.b32.xlu0 %v2352, 16
    %v2355 = vpop.permute.xlu0 %2354
    %v2357 = vadd.f32 %v2347, %v2355
    %v2358 = vtanh.pop %v2357
    %2360 = vrot.lane.b32.xlu0 %v2358, 32
    %v2361 = vpop.permute.xlu0 %2360
    %v2363 = vmul.f32 %v2345, %v2361
    %2364 = vmatprep.subr.bf16.mxu0 0
    %2365 = vmatpush1.bf16.msra.mxu0 0
    %2366 = vmatprep.subr.bf16.mxu0 0
    %2367 = vmatpush1.bf16.msra.mxu0 0
    %2368 = vmatprep.subr.bf16.mxu0 0
    %2369 = vmatpush1.bf16.msra.mxu0 0
    %2370 = vmatprep.subr.bf16.mxu0 0
    %2371 = vmatpush1.bf16.msra.mxu0 0
    %2372 = vmatprep.subr.bf16.mxu0 0
    %2373 = vmatpush1.bf16.msra.mxu0 0
    %2374 = vmatprep.subr.bf16.mxu0 0
    %2375 = vmatpush1.bf16.msra.mxu0 0
    %2376 = vmatprep.subr.bf16.mxu0 0
    %2377 = vmatpush1.bf16.msra.mxu0 %v49
    %2378 = vmatprep.subr.bf16.mxu0 0
    %2379 = vmatpush1.bf16.msra.mxu0 %v48
    %2380 = vmatprep.subr.bf16.mxu0 0
    %2381 = vmatpush2.bf16.msra.mxu0 0
    %2382 = vmatprep.subr.bf16.mxu0 0
    %2383 = vmatpush2.bf16.msra.mxu0 0
    %2384 = vmatprep.subr.bf16.mxu0 0
    %2385 = vmatpush2.bf16.msra.mxu0 0
    %2386 = vmatprep.subr.bf16.mxu0 0
    %2387 = vmatpush2.bf16.msra.mxu0 0
    %2388 = vmatprep.subr.bf16.mxu0 0
    %2389 = vmatpush2.bf16.msra.mxu0 0
    %2390 = vmatprep.subr.bf16.mxu0 0
    %2391 = vmatpush2.bf16.msra.mxu0 0
    %2392 = vmatprep.subr.bf16.mxu0 0
    %2393 = vmatpush2.bf16.msra.mxu0 0
    %2394 = vmatprep.subr.bf16.mxu0 0
    %2395 = vmatpush2.bf16.msra.mxu0 0
    %2396 = vmatprep.mubr.bf16.mxu0 0
    %2397 = vmatmul.mubr.bf16.gmra.mxu0 %v2066
    %v2398 = vpop.f32.mrf.mxu0
    %v2399 = vadd.f32 0.0, %v2398
    %v2400 = vpop.f32.mrf.mxu0
    %v2401 = vpop.f32.mrf.mxu0
    %v2402 = vpop.f32.mrf.mxu0
    %2403 = vdwg.mxu0
    %2404 = vrot.lane.b32.xlu0 %v78, 88
    %v2405 = vpop.permute.xlu0 %2404
    %v2407 = vsel %vm123, %v2405, 0
    %2409 = vmatprep.subr.bf16.mxu0 0
    %2410 = vmatpush1.bf16.msra.mxu0 0
    %2411 = vmatprep.subr.bf16.mxu0 0
    %2412 = vmatpush1.bf16.msra.mxu0 0
    %2413 = vmatprep.subr.bf16.mxu0 0
    %2414 = vmatpush1.bf16.msra.mxu0 0
    %2415 = vmatprep.subr.bf16.mxu0 0
    %2416 = vmatpush1.bf16.msra.mxu0 0
    %2417 = vmatprep.subr.bf16.mxu0 0
    %2418 = vmatpush1.bf16.msra.mxu0 0
    %2419 = vmatprep.subr.bf16.mxu0 0
    %2420 = vmatpush1.bf16.msra.mxu0 0
    %2421 = vmatprep.subr.bf16.mxu0 0
    %2422 = vmatpush1.bf16.msra.mxu0 0
    %2423 = vmatprep.subr.bf16.mxu0 0
    %2424 = vmatpush1.bf16.msra.mxu0 %v129
    %2425 = vmatprep.subr.bf16.mxu0 0
    %2426 = vmatpush2.bf16.msra.mxu0 0
    %2427 = vmatprep.subr.bf16.mxu0 0
    %2428 = vmatpush2.bf16.msra.mxu0 0
    %2429 = vmatprep.subr.bf16.mxu0 0
    %2430 = vmatpush2.bf16.msra.mxu0 0
    %2431 = vmatprep.subr.bf16.mxu0 0
    %2432 = vmatpush2.bf16.msra.mxu0 0
    %2433 = vmatprep.subr.bf16.mxu0 0
    %2434 = vmatpush2.bf16.msra.mxu0 0
    %2435 = vmatprep.subr.bf16.mxu0 0
    %2436 = vmatpush2.bf16.msra.mxu0 0
    %2437 = vmatprep.subr.bf16.mxu0 0
    %2438 = vmatpush2.bf16.msra.mxu0 0
    %2439 = vmatprep.subr.bf16.mxu0 0
    %2440 = vmatpush2.bf16.msra.mxu0 0
    %2441 = vmatprep.mubr.bf16.mxu0 0
    %2442 = vmatmul.mubr.bf16.gmra.mxu0 %v2407
    %v2443 = vpop.f32.mrf.mxu0
    %v2444 = vadd.f32 %v2399, %v2443
    %v2445 = vpop.f32.mrf.mxu0
    %v2446 = vpop.f32.mrf.mxu0
    %v2447 = vpop.f32.mrf.mxu0
    %2448 = vdwg.mxu0
    %v2449 = vadd.f32 %v2444, %v174
    %v2450 = vxor.u32 %v2449, 2147483648
    %v2451 = vmul.f32 %v2450, 1.442695
    %v2452 = vpow.pop %v2451
    %v2453 = vadd.f32 %v2452, 1.0
    %v2454 = vrcp.pop %v2453
    %v2455 = vmul.f32 1.0, %v2454
    %v2456 = vtanh.pop %v2449
    %v2457 = vmul.f32 %v2455, %v2014
    %2459 = vrot.lane.b32.xlu0 %v2456, 64
    %v2460 = vpop.permute.xlu0 %2459
    %v2462 = vmul.f32 %v2455, %v2460
    %2464 = vrot.lane.b32.xlu0 %v2462, 32
    %v2465 = vpop.permute.xlu0 %2464
    %v2467 = vadd.f32 %v2457, %v2465
    %v2468 = vtanh.pop %v2467
    %2470 = vrot.lane.b32.xlu0 %v2468, 64
    %v2471 = vpop.permute.xlu0 %2470
    %v2473 = vmul.f32 %v2455, %v2471
    %v2474 = vpack.c.bf16 %v2473, %v2473
    %2475 = vmatprep.subr.bf16.mxu0 0
    %2476 = vmatpush1.bf16.msra.mxu0 0
    %2477 = vmatprep.subr.bf16.mxu0 0
    %2478 = vmatpush1.bf16.msra.mxu0 0
    %2479 = vmatprep.subr.bf16.mxu0 0
    %2480 = vmatpush1.bf16.msra.mxu0 0
    %2481 = vmatprep.subr.bf16.mxu0 0
    %2482 = vmatpush1.bf16.msra.mxu0 0
    %2483 = vmatprep.subr.bf16.mxu0 0
    %2484 = vmatpush1.bf16.msra.mxu0 0
    %2485 = vmatprep.subr.bf16.mxu0 0
    %2486 = vmatpush1.bf16.msra.mxu0 0
    %2487 = vmatprep.subr.bf16.mxu0 0
    %2488 = vmatpush1.bf16.msra.mxu0 %v55
    %2489 = vmatprep.subr.bf16.mxu0 0
    %2490 = vmatpush1.bf16.msra.mxu0 %v54
    %2491 = vmatprep.subr.bf16.mxu0 0
    %2492 = vmatpush2.bf16.msra.mxu0 0
    %2493 = vmatprep.subr.bf16.mxu0 0
    %2494 = vmatpush2.bf16.msra.mxu0 0
    %2495 = vmatprep.subr.bf16.mxu0 0
    %2496 = vmatpush2.bf16.msra.mxu0 0
    %2497 = vmatprep.subr.bf16.mxu0 0
    %2498 = vmatpush2.bf16.msra.mxu0 0
    %2499 = vmatprep.subr.bf16.mxu0 0
    %2500 = vmatpush2.bf16.msra.mxu0 0
    %2501 = vmatprep.subr.bf16.mxu0 0
    %2502 = vmatpush2.bf16.msra.mxu0 0
    %2503 = vmatprep.subr.bf16.mxu0 0
    %2504 = vmatpush2.bf16.msra.mxu0 0
    %2505 = vmatprep.subr.bf16.mxu0 0
    %2506 = vmatpush2.bf16.msra.mxu0 0
    %2507 = vmatprep.mubr.bf16.mxu0 0
    %2508 = vmatmul.mubr.bf16.gmra.mxu0 %v2178
    %v2509 = vpop.f32.mrf.mxu0
    %v2510 = vadd.f32 0.0, %v2509
    %v2511 = vpop.f32.mrf.mxu0
    %v2512 = vpop.f32.mrf.mxu0
    %v2513 = vpop.f32.mrf.mxu0
    %2514 = vdwg.mxu0
    %2516 = vrot.lane.b32.xlu0 %v2474, 32
    %v2517 = vpop.permute.xlu0 %2516
    %v2519 = vsel %vm79, %v2517, 0
    %2521 = vmatprep.subr.bf16.mxu0 0
    %2522 = vmatpush1.bf16.msra.mxu0 0
    %2523 = vmatprep.subr.bf16.mxu0 0
    %2524 = vmatpush1.bf16.msra.mxu0 0
    %2525 = vmatprep.subr.bf16.mxu0 0
    %2526 = vmatpush1.bf16.msra.mxu0 0
    %2527 = vmatprep.subr.bf16.mxu0 0
    %2528 = vmatpush1.bf16.msra.mxu0 0
    %2529 = vmatprep.subr.bf16.mxu0 0
    %2530 = vmatpush1.bf16.msra.mxu0 0
    %2531 = vmatprep.subr.bf16.mxu0 0
    %2532 = vmatpush1.bf16.msra.mxu0 0
    %2533 = vmatprep.subr.bf16.mxu0 0
    %2534 = vmatpush1.bf16.msra.mxu0 %v34
    %2535 = vmatprep.subr.bf16.mxu0 0
    %2536 = vmatpush1.bf16.msra.mxu0 %v33
    %2537 = vmatprep.subr.bf16.mxu0 0
    %2538 = vmatpush2.bf16.msra.mxu0 0
    %2539 = vmatprep.subr.bf16.mxu0 0
    %2540 = vmatpush2.bf16.msra.mxu0 0
    %2541 = vmatprep.subr.bf16.mxu0 0
    %2542 = vmatpush2.bf16.msra.mxu0 0
    %2543 = vmatprep.subr.bf16.mxu0 0
    %2544 = vmatpush2.bf16.msra.mxu0 0
    %2545 = vmatprep.subr.bf16.mxu0 0
    %2546 = vmatpush2.bf16.msra.mxu0 0
    %2547 = vmatprep.subr.bf16.mxu0 0
    %2548 = vmatpush2.bf16.msra.mxu0 0
    %2549 = vmatprep.subr.bf16.mxu0 0
    %2550 = vmatpush2.bf16.msra.mxu0 0
    %2551 = vmatprep.subr.bf16.mxu0 0
    %2552 = vmatpush2.bf16.msra.mxu0 0
    %2553 = vmatprep.mubr.bf16.mxu0 0
    %2554 = vmatmul.mubr.bf16.gmra.mxu0 %v2519
    %v2555 = vpop.f32.mrf.mxu0
    %v2556 = vadd.f32 %v2510, %v2555
    %v2557 = vpop.f32.mrf.mxu0
    %v2558 = vpop.f32.mrf.mxu0
    %v2559 = vpop.f32.mrf.mxu0
    %2560 = vdwg.mxu0
    %v2561 = vadd.f32 %v2556, %v290
    %v2562 = vxor.u32 %v2561, 2147483648
    %v2563 = vmul.f32 %v2562, 1.442695
    %v2564 = vpow.pop %v2563
    %v2565 = vadd.f32 %v2564, 1.0
    %v2566 = vrcp.pop %v2565
    %v2567 = vmul.f32 1.0, %v2566
    %v2568 = vtanh.pop %v2561
    %v2569 = vmul.f32 %v2567, %v2126
    %2571 = vrot.lane.b32.xlu0 %v2568, 64
    %v2572 = vpop.permute.xlu0 %2571
    %v2574 = vmul.f32 %v2567, %v2572
    %2576 = vrot.lane.b32.xlu0 %v2574, 32
    %v2577 = vpop.permute.xlu0 %2576
    %v2579 = vadd.f32 %v2569, %v2577
    %v2580 = vtanh.pop %v2579
    %2582 = vrot.lane.b32.xlu0 %v2580, 64
    %v2583 = vpop.permute.xlu0 %2582
    %v2585 = vmul.f32 %v2567, %v2583
    %v2586 = vpack.c.bf16 %v2585, %v2585
    %2587 = vmatprep.subr.bf16.mxu0 0
    %2588 = vmatpush1.bf16.msra.mxu0 0
    %2589 = vmatprep.subr.bf16.mxu0 0
    %2590 = vmatpush1.bf16.msra.mxu0 0
    %2591 = vmatprep.subr.bf16.mxu0 0
    %2592 = vmatpush1.bf16.msra.mxu0 0
    %2593 = vmatprep.subr.bf16.mxu0 0
    %2594 = vmatpush1.bf16.msra.mxu0 0
    %2595 = vmatprep.subr.bf16.mxu0 0
    %2596 = vmatpush1.bf16.msra.mxu0 0
    %2597 = vmatprep.subr.bf16.mxu0 0
    %2598 = vmatpush1.bf16.msra.mxu0 0
    %2599 = vmatprep.subr.bf16.mxu0 0
    %2600 = vmatpush1.bf16.msra.mxu0 0
    %2601 = vmatprep.subr.bf16.mxu0 0
    %2602 = vmatpush1.bf16.msra.mxu0 %v58
    %2603 = vmatprep.subr.bf16.mxu0 0
    %2604 = vmatpush2.bf16.msra.mxu0 0
    %2605 = vmatprep.subr.bf16.mxu0 0
    %2606 = vmatpush2.bf16.msra.mxu0 0
    %2607 = vmatprep.subr.bf16.mxu0 0
    %2608 = vmatpush2.bf16.msra.mxu0 0
    %2609 = vmatprep.subr.bf16.mxu0 0
    %2610 = vmatpush2.bf16.msra.mxu0 0
    %2611 = vmatprep.subr.bf16.mxu0 0
    %2612 = vmatpush2.bf16.msra.mxu0 0
    %2613 = vmatprep.subr.bf16.mxu0 0
    %2614 = vmatpush2.bf16.msra.mxu0 0
    %2615 = vmatprep.subr.bf16.mxu0 0
    %2616 = vmatpush2.bf16.msra.mxu0 0
    %2617 = vmatprep.subr.bf16.mxu0 0
    %2618 = vmatpush2.bf16.msra.mxu0 0
    %2619 = vmatprep.mubr.bf16.mxu0 0
    %2620 = vmatmul.mubr.bf16.gmra.mxu0 %v2297
    %v2621 = vpop.f32.mrf.mxu0
    %v2622 = vadd.f32 0.0, %v2621
    %v2623 = vpop.f32.mrf.mxu0
    %v2624 = vpop.f32.mrf.mxu0
    %v2625 = vpop.f32.mrf.mxu0
    %2626 = vdwg.mxu0
    %2628 = vrot.lane.b32.xlu0 %v2586, 32
    %v2629 = vpop.permute.xlu0 %2628
    %v2631 = vsel %vm79, %v2629, 0
    %2633 = vmatprep.subr.bf16.mxu0 0
    %2634 = vmatpush1.bf16.msra.mxu0 0
    %2635 = vmatprep.subr.bf16.mxu0 0
    %2636 = vmatpush1.bf16.msra.mxu0 0
    %2637 = vmatprep.subr.bf16.mxu0 0
    %2638 = vmatpush1.bf16.msra.mxu0 0
    %2639 = vmatprep.subr.bf16.mxu0 0
    %2640 = vmatpush1.bf16.msra.mxu0 0
    %2641 = vmatprep.subr.bf16.mxu0 0
    %2642 = vmatpush1.bf16.msra.mxu0 0
    %2643 = vmatprep.subr.bf16.mxu0 0
    %2644 = vmatpush1.bf16.msra.mxu0 0
    %2645 = vmatprep.subr.bf16.mxu0 0
    %2646 = vmatpush1.bf16.msra.mxu0 %v40
    %2647 = vmatprep.subr.bf16.mxu0 0
    %2648 = vmatpush1.bf16.msra.mxu0 %v39
    %2649 = vmatprep.subr.bf16.mxu0 0
    %2650 = vmatpush2.bf16.msra.mxu0 0
    %2651 = vmatprep.subr.bf16.mxu0 0
    %2652 = vmatpush2.bf16.msra.mxu0 0
    %2653 = vmatprep.subr.bf16.mxu0 0
    %2654 = vmatpush2.bf16.msra.mxu0 0
    %2655 = vmatprep.subr.bf16.mxu0 0
    %2656 = vmatpush2.bf16.msra.mxu0 0
    %2657 = vmatprep.subr.bf16.mxu0 0
    %2658 = vmatpush2.bf16.msra.mxu0 0
    %2659 = vmatprep.subr.bf16.mxu0 0
    %2660 = vmatpush2.bf16.msra.mxu0 0
    %2661 = vmatprep.subr.bf16.mxu0 0
    %2662 = vmatpush2.bf16.msra.mxu0 0
    %2663 = vmatprep.subr.bf16.mxu0 0
    %2664 = vmatpush2.bf16.msra.mxu0 0
    %2665 = vmatprep.mubr.bf16.mxu0 0
    %2666 = vmatmul.mubr.bf16.gmra.mxu0 %v2631
    %v2667 = vpop.f32.mrf.mxu0
    %v2668 = vadd.f32 %v2622, %v2667
    %v2669 = vpop.f32.mrf.mxu0
    %v2670 = vpop.f32.mrf.mxu0
    %v2671 = vpop.f32.mrf.mxu0
    %2672 = vdwg.mxu0
    %v2673 = vadd.f32 %v2668, %v409
    %v2674 = vxor.u32 %v2673, 2147483648
    %v2675 = vmul.f32 %v2674, 1.442695
    %v2676 = vpow.pop %v2675
    %v2677 = vadd.f32 %v2676, 1.0
    %v2678 = vrcp.pop %v2677
    %v2679 = vmul.f32 1.0, %v2678
    %v2680 = vtanh.pop %v2673
    %v2681 = vmul.f32 %v2679, %v2238
    %2683 = vrot.lane.b32.xlu0 %v2680, 96
    %v2684 = vpop.permute.xlu0 %2683
    %v2686 = vmul.f32 %v2679, %v2684
    %2688 = vrot.lane.b32.xlu0 %v2686, 16
    %v2689 = vpop.permute.xlu0 %2688
    %v2691 = vadd.f32 %v2681, %v2689
    %v2692 = vtanh.pop %v2691
    %2694 = vrot.lane.b32.xlu0 %v2692, 32
    %v2695 = vpop.permute.xlu0 %2694
    %v2697 = vmul.f32 %v2679, %v2695
    %v2698 = vpack.c.bf16 %v2697, %v2697
    %v2699 = vpack.c.bf16 %v2363, %v2363
    %2701 = vrot.lane.b32.xlu0 %v2699, 80
    %v2702 = vpop.permute.xlu0 %2701
    %v2704 = vsel %vm317, %v2702, 0
    %2706 = vmatprep.subr.bf16.mxu0 0
    %2707 = vmatpush1.bf16.msra.mxu0 0
    %2708 = vmatprep.subr.bf16.mxu0 0
    %2709 = vmatpush1.bf16.msra.mxu0 0
    %2710 = vmatprep.subr.bf16.mxu0 0
    %2711 = vmatpush1.bf16.msra.mxu0 0
    %2712 = vmatprep.subr.bf16.mxu0 0
    %2713 = vmatpush1.bf16.msra.mxu0 0
    %2714 = vmatprep.subr.bf16.mxu0 0
    %2715 = vmatpush1.bf16.msra.mxu0 0
    %2716 = vmatprep.subr.bf16.mxu0 0
    %2717 = vmatpush1.bf16.msra.mxu0 0
    %2718 = vmatprep.subr.bf16.mxu0 0
    %2719 = vmatpush1.bf16.msra.mxu0 0
    %2720 = vmatprep.subr.bf16.mxu0 0
    %2721 = vmatpush1.bf16.msra.mxu0 %v61
    %2722 = vmatprep.subr.bf16.mxu0 0
    %2723 = vmatpush2.bf16.msra.mxu0 0
    %2724 = vmatprep.subr.bf16.mxu0 0
    %2725 = vmatpush2.bf16.msra.mxu0 0
    %2726 = vmatprep.subr.bf16.mxu0 0
    %2727 = vmatpush2.bf16.msra.mxu0 0
    %2728 = vmatprep.subr.bf16.mxu0 0
    %2729 = vmatpush2.bf16.msra.mxu0 0
    %2730 = vmatprep.subr.bf16.mxu0 0
    %2731 = vmatpush2.bf16.msra.mxu0 0
    %2732 = vmatprep.subr.bf16.mxu0 0
    %2733 = vmatpush2.bf16.msra.mxu0 0
    %2734 = vmatprep.subr.bf16.mxu0 0
    %2735 = vmatpush2.bf16.msra.mxu0 0
    %2736 = vmatprep.subr.bf16.mxu0 0
    %2737 = vmatpush2.bf16.msra.mxu0 0
    %2738 = vmatprep.mubr.bf16.mxu0 0
    %2739 = vmatmul.mubr.bf16.gmra.mxu0 %v2704
    %v2740 = vpop.f32.mrf.mxu0
    %v2741 = vadd.f32 0.0, %v2740
    %v2742 = vpop.f32.mrf.mxu0
    %v2743 = vpop.f32.mrf.mxu0
    %v2744 = vpop.f32.mrf.mxu0
    %2745 = vdwg.mxu0
    %2747 = vrot.lane.b32.xlu0 %v2698, 80
    %v2748 = vpop.permute.xlu0 %2747
    %v2750 = vsel %vm317, %v2748, 0
    %2752 = vmatprep.subr.bf16.mxu0 0
    %2753 = vmatpush1.bf16.msra.mxu0 0
    %2754 = vmatprep.subr.bf16.mxu0 0
    %2755 = vmatpush1.bf16.msra.mxu0 0
    %2756 = vmatprep.subr.bf16.mxu0 0
    %2757 = vmatpush1.bf16.msra.mxu0 0
    %2758 = vmatprep.subr.bf16.mxu0 0
    %2759 = vmatpush1.bf16.msra.mxu0 0
    %2760 = vmatprep.subr.bf16.mxu0 0
    %2761 = vmatpush1.bf16.msra.mxu0 0
    %2762 = vmatprep.subr.bf16.mxu0 0
    %2763 = vmatpush1.bf16.msra.mxu0 0
    %2764 = vmatprep.subr.bf16.mxu0 0
    %2765 = vmatpush1.bf16.msra.mxu0 0
    %2766 = vmatprep.subr.bf16.mxu0 0
    %2767 = vmatpush1.bf16.msra.mxu0 %v43
    %2768 = vmatprep.subr.bf16.mxu0 0
    %2769 = vmatpush2.bf16.msra.mxu0 0
    %2770 = vmatprep.subr.bf16.mxu0 0
    %2771 = vmatpush2.bf16.msra.mxu0 0
    %2772 = vmatprep.subr.bf16.mxu0 0
    %2773 = vmatpush2.bf16.msra.mxu0 0
    %2774 = vmatprep.subr.bf16.mxu0 0
    %2775 = vmatpush2.bf16.msra.mxu0 0
    %2776 = vmatprep.subr.bf16.mxu0 0
    %2777 = vmatpush2.bf16.msra.mxu0 0
    %2778 = vmatprep.subr.bf16.mxu0 0
    %2779 = vmatpush2.bf16.msra.mxu0 0
    %2780 = vmatprep.subr.bf16.mxu0 0
    %2781 = vmatpush2.bf16.msra.mxu0 0
    %2782 = vmatprep.subr.bf16.mxu0 0
    %2783 = vmatpush2.bf16.msra.mxu0 0
    %2784 = vmatprep.mubr.bf16.mxu0 0
    %2785 = vmatmul.mubr.bf16.gmra.mxu0 %v2750
    %v2786 = vpop.f32.mrf.mxu0
    %v2787 = vadd.f32 %v2741, %v2786
    %v2788 = vpop.f32.mrf.mxu0
    %v2789 = vpop.f32.mrf.mxu0
    %v2790 = vpop.f32.mrf.mxu0
    %2791 = vdwg.mxu0
    %v2792 = vadd.f32 %v2787, %v525
    %v2793 = vxor.u32 %v2792, 2147483648
    %v2794 = vmul.f32 %v2793, 1.442695
    %v2795 = vpow.pop %v2794
    %v2796 = vadd.f32 %v2795, 1.0
    %v2797 = vrcp.pop %v2796
    %v2798 = vmul.f32 1.0, %v2797
    %v2799 = vtanh.pop %v2792
    %v2800 = vmul.f32 %v2798, %v2357
    %2802 = vrot.lane.b32.xlu0 %v2799, 96
    %v2803 = vpop.permute.xlu0 %2802
    %v2805 = vmul.f32 %v2798, %v2803
    %2807 = vrot.lane.b32.xlu0 %v2805, 16
    %v2808 = vpop.permute.xlu0 %2807
    %v2810 = vadd.f32 %v2800, %v2808
    %v2811 = vtanh.pop %v2810
    %2813 = vrot.lane.b32.xlu0 %v2811, 32
    %v2814 = vpop.permute.xlu0 %2813
    %v2816 = vmul.f32 %v2798, %v2814
    %2817 = vmatprep.subr.bf16.mxu0 0
    %2818 = vmatpush1.bf16.msra.mxu0 0
    %2819 = vmatprep.subr.bf16.mxu0 0
    %2820 = vmatpush1.bf16.msra.mxu0 0
    %2821 = vmatprep.subr.bf16.mxu0 0
    %2822 = vmatpush1.bf16.msra.mxu0 0
    %2823 = vmatprep.subr.bf16.mxu0 0
    %2824 = vmatpush1.bf16.msra.mxu0 0
    %2825 = vmatprep.subr.bf16.mxu0 0
    %2826 = vmatpush1.bf16.msra.mxu0 0
    %2827 = vmatprep.subr.bf16.mxu0 0
    %2828 = vmatpush1.bf16.msra.mxu0 0
    %2829 = vmatprep.subr.bf16.mxu0 0
    %2830 = vmatpush1.bf16.msra.mxu0 %v49
    %2831 = vmatprep.subr.bf16.mxu0 0
    %2832 = vmatpush1.bf16.msra.mxu0 %v48
    %2833 = vmatprep.subr.bf16.mxu0 0
    %2834 = vmatpush2.bf16.msra.mxu0 0
    %2835 = vmatprep.subr.bf16.mxu0 0
    %2836 = vmatpush2.bf16.msra.mxu0 0
    %2837 = vmatprep.subr.bf16.mxu0 0
    %2838 = vmatpush2.bf16.msra.mxu0 0
    %2839 = vmatprep.subr.bf16.mxu0 0
    %2840 = vmatpush2.bf16.msra.mxu0 0
    %2841 = vmatprep.subr.bf16.mxu0 0
    %2842 = vmatpush2.bf16.msra.mxu0 0
    %2843 = vmatprep.subr.bf16.mxu0 0
    %2844 = vmatpush2.bf16.msra.mxu0 0
    %2845 = vmatprep.subr.bf16.mxu0 0
    %2846 = vmatpush2.bf16.msra.mxu0 0
    %2847 = vmatprep.subr.bf16.mxu0 0
    %2848 = vmatpush2.bf16.msra.mxu0 0
    %2849 = vmatprep.mubr.bf16.mxu0 0
    %2850 = vmatmul.mubr.bf16.gmra.mxu0 %v2519
    %v2851 = vpop.f32.mrf.mxu0
    %v2852 = vadd.f32 0.0, %v2851
    %v2853 = vpop.f32.mrf.mxu0
    %v2854 = vpop.f32.mrf.mxu0
    %v2855 = vpop.f32.mrf.mxu0
    %2856 = vdwg.mxu0
    %2857 = vrot.lane.b32.xlu0 %v78, 80
    %v2858 = vpop.permute.xlu0 %2857
    %v2860 = vsel %vm123, %v2858, 0
    %2862 = vmatprep.subr.bf16.mxu0 0
    %2863 = vmatpush1.bf16.msra.mxu0 0
    %2864 = vmatprep.subr.bf16.mxu0 0
    %2865 = vmatpush1.bf16.msra.mxu0 0
    %2866 = vmatprep.subr.bf16.mxu0 0
    %2867 = vmatpush1.bf16.msra.mxu0 0
    %2868 = vmatprep.subr.bf16.mxu0 0
    %2869 = vmatpush1.bf16.msra.mxu0 0
    %2870 = vmatprep.subr.bf16.mxu0 0
    %2871 = vmatpush1.bf16.msra.mxu0 0
    %2872 = vmatprep.subr.bf16.mxu0 0
    %2873 = vmatpush1.bf16.msra.mxu0 0
    %2874 = vmatprep.subr.bf16.mxu0 0
    %2875 = vmatpush1.bf16.msra.mxu0 0
    %2876 = vmatprep.subr.bf16.mxu0 0
    %2877 = vmatpush1.bf16.msra.mxu0 %v129
    %2878 = vmatprep.subr.bf16.mxu0 0
    %2879 = vmatpush2.bf16.msra.mxu0 0
    %2880 = vmatprep.subr.bf16.mxu0 0
    %2881 = vmatpush2.bf16.msra.mxu0 0
    %2882 = vmatprep.subr.bf16.mxu0 0
    %2883 = vmatpush2.bf16.msra.mxu0 0
    %2884 = vmatprep.subr.bf16.mxu0 0
    %2885 = vmatpush2.bf16.msra.mxu0 0
    %2886 = vmatprep.subr.bf16.mxu0 0
    %2887 = vmatpush2.bf16.msra.mxu0 0
    %2888 = vmatprep.subr.bf16.mxu0 0
    %2889 = vmatpush2.bf16.msra.mxu0 0
    %2890 = vmatprep.subr.bf16.mxu0 0
    %2891 = vmatpush2.bf16.msra.mxu0 0
    %2892 = vmatprep.subr.bf16.mxu0 0
    %2893 = vmatpush2.bf16.msra.mxu0 0
    %2894 = vmatprep.mubr.bf16.mxu0 0
    %2895 = vmatmul.mubr.bf16.gmra.mxu0 %v2860
    %v2896 = vpop.f32.mrf.mxu0
    %v2897 = vadd.f32 %v2852, %v2896
    %v2898 = vpop.f32.mrf.mxu0
    %v2899 = vpop.f32.mrf.mxu0
    %v2900 = vpop.f32.mrf.mxu0
    %2901 = vdwg.mxu0
    %v2902 = vadd.f32 %v2897, %v174
    %v2903 = vxor.u32 %v2902, 2147483648
    %v2904 = vmul.f32 %v2903, 1.442695
    %v2905 = vpow.pop %v2904
    %v2906 = vadd.f32 %v2905, 1.0
    %v2907 = vrcp.pop %v2906
    %v2908 = vmul.f32 1.0, %v2907
    %v2909 = vtanh.pop %v2902
    %v2910 = vmul.f32 %v2908, %v2467
    %2912 = vrot.lane.b32.xlu0 %v2909, 64
    %v2913 = vpop.permute.xlu0 %2912
    %v2915 = vmul.f32 %v2908, %v2913
    %2917 = vrot.lane.b32.xlu0 %v2915, 32
    %v2918 = vpop.permute.xlu0 %2917
    %v2920 = vadd.f32 %v2910, %v2918
    %v2921 = vtanh.pop %v2920
    %2923 = vrot.lane.b32.xlu0 %v2921, 64
    %v2924 = vpop.permute.xlu0 %2923
    %v2926 = vmul.f32 %v2908, %v2924
    %v2927 = vpack.c.bf16 %v2926, %v2926
    %2928 = vmatprep.subr.bf16.mxu0 0
    %2929 = vmatpush1.bf16.msra.mxu0 0
    %2930 = vmatprep.subr.bf16.mxu0 0
    %2931 = vmatpush1.bf16.msra.mxu0 0
    %2932 = vmatprep.subr.bf16.mxu0 0
    %2933 = vmatpush1.bf16.msra.mxu0 0
    %2934 = vmatprep.subr.bf16.mxu0 0
    %2935 = vmatpush1.bf16.msra.mxu0 0
    %2936 = vmatprep.subr.bf16.mxu0 0
    %2937 = vmatpush1.bf16.msra.mxu0 0
    %2938 = vmatprep.subr.bf16.mxu0 0
    %2939 = vmatpush1.bf16.msra.mxu0 0
    %2940 = vmatprep.subr.bf16.mxu0 0
    %2941 = vmatpush1.bf16.msra.mxu0 %v55
    %2942 = vmatprep.subr.bf16.mxu0 0
    %2943 = vmatpush1.bf16.msra.mxu0 %v54
    %2944 = vmatprep.subr.bf16.mxu0 0
    %2945 = vmatpush2.bf16.msra.mxu0 0
    %2946 = vmatprep.subr.bf16.mxu0 0
    %2947 = vmatpush2.bf16.msra.mxu0 0
    %2948 = vmatprep.subr.bf16.mxu0 0
    %2949 = vmatpush2.bf16.msra.mxu0 0
    %2950 = vmatprep.subr.bf16.mxu0 0
    %2951 = vmatpush2.bf16.msra.mxu0 0
    %2952 = vmatprep.subr.bf16.mxu0 0
    %2953 = vmatpush2.bf16.msra.mxu0 0
    %2954 = vmatprep.subr.bf16.mxu0 0
    %2955 = vmatpush2.bf16.msra.mxu0 0
    %2956 = vmatprep.subr.bf16.mxu0 0
    %2957 = vmatpush2.bf16.msra.mxu0 0
    %2958 = vmatprep.subr.bf16.mxu0 0
    %2959 = vmatpush2.bf16.msra.mxu0 0
    %2960 = vmatprep.mubr.bf16.mxu0 0
    %2961 = vmatmul.mubr.bf16.gmra.mxu0 %v2631
    %v2962 = vpop.f32.mrf.mxu0
    %v2963 = vadd.f32 0.0, %v2962
    %v2964 = vpop.f32.mrf.mxu0
    %v2965 = vpop.f32.mrf.mxu0
    %v2966 = vpop.f32.mrf.mxu0
    %2967 = vdwg.mxu0
    %2969 = vrot.lane.b32.xlu0 %v2927, 32
    %v2970 = vpop.permute.xlu0 %2969
    %v2972 = vsel %vm79, %v2970, 0
    %2974 = vmatprep.subr.bf16.mxu0 0
    %2975 = vmatpush1.bf16.msra.mxu0 0
    %2976 = vmatprep.subr.bf16.mxu0 0
    %2977 = vmatpush1.bf16.msra.mxu0 0
    %2978 = vmatprep.subr.bf16.mxu0 0
    %2979 = vmatpush1.bf16.msra.mxu0 0
    %2980 = vmatprep.subr.bf16.mxu0 0
    %2981 = vmatpush1.bf16.msra.mxu0 0
    %2982 = vmatprep.subr.bf16.mxu0 0
    %2983 = vmatpush1.bf16.msra.mxu0 0
    %2984 = vmatprep.subr.bf16.mxu0 0
    %2985 = vmatpush1.bf16.msra.mxu0 0
    %2986 = vmatprep.subr.bf16.mxu0 0
    %2987 = vmatpush1.bf16.msra.mxu0 %v34
    %2988 = vmatprep.subr.bf16.mxu0 0
    %2989 = vmatpush1.bf16.msra.mxu0 %v33
    %2990 = vmatprep.subr.bf16.mxu0 0
    %2991 = vmatpush2.bf16.msra.mxu0 0
    %2992 = vmatprep.subr.bf16.mxu0 0
    %2993 = vmatpush2.bf16.msra.mxu0 0
    %2994 = vmatprep.subr.bf16.mxu0 0
    %2995 = vmatpush2.bf16.msra.mxu0 0
    %2996 = vmatprep.subr.bf16.mxu0 0
    %2997 = vmatpush2.bf16.msra.mxu0 0
    %2998 = vmatprep.subr.bf16.mxu0 0
    %2999 = vmatpush2.bf16.msra.mxu0 0
    %3000 = vmatprep.subr.bf16.mxu0 0
    %3001 = vmatpush2.bf16.msra.mxu0 0
    %3002 = vmatprep.subr.bf16.mxu0 0
    %3003 = vmatpush2.bf16.msra.mxu0 0
    %3004 = vmatprep.subr.bf16.mxu0 0
    %3005 = vmatpush2.bf16.msra.mxu0 0
    %3006 = vmatprep.mubr.bf16.mxu0 0
    %3007 = vmatmul.mubr.bf16.gmra.mxu0 %v2972
    %v3008 = vpop.f32.mrf.mxu0
    %v3009 = vadd.f32 %v2963, %v3008
    %v3010 = vpop.f32.mrf.mxu0
    %v3011 = vpop.f32.mrf.mxu0
    %v3012 = vpop.f32.mrf.mxu0
    %3013 = vdwg.mxu0
    %v3014 = vadd.f32 %v3009, %v290
    %v3015 = vxor.u32 %v3014, 2147483648
    %v3016 = vmul.f32 %v3015, 1.442695
    %v3017 = vpow.pop %v3016
    %v3018 = vadd.f32 %v3017, 1.0
    %v3019 = vrcp.pop %v3018
    %v3020 = vmul.f32 1.0, %v3019
    %v3021 = vtanh.pop %v3014
    %v3022 = vmul.f32 %v3020, %v2579
    %3024 = vrot.lane.b32.xlu0 %v3021, 64
    %v3025 = vpop.permute.xlu0 %3024
    %v3027 = vmul.f32 %v3020, %v3025
    %3029 = vrot.lane.b32.xlu0 %v3027, 32
    %v3030 = vpop.permute.xlu0 %3029
    %v3032 = vadd.f32 %v3022, %v3030
    %v3033 = vtanh.pop %v3032
    %3035 = vrot.lane.b32.xlu0 %v3033, 64
    %v3036 = vpop.permute.xlu0 %3035
    %v3038 = vmul.f32 %v3020, %v3036
    %v3039 = vpack.c.bf16 %v3038, %v3038
    %3040 = vmatprep.subr.bf16.mxu0 0
    %3041 = vmatpush1.bf16.msra.mxu0 0
    %3042 = vmatprep.subr.bf16.mxu0 0
    %3043 = vmatpush1.bf16.msra.mxu0 0
    %3044 = vmatprep.subr.bf16.mxu0 0
    %3045 = vmatpush1.bf16.msra.mxu0 0
    %3046 = vmatprep.subr.bf16.mxu0 0
    %3047 = vmatpush1.bf16.msra.mxu0 0
    %3048 = vmatprep.subr.bf16.mxu0 0
    %3049 = vmatpush1.bf16.msra.mxu0 0
    %3050 = vmatprep.subr.bf16.mxu0 0
    %3051 = vmatpush1.bf16.msra.mxu0 0
    %3052 = vmatprep.subr.bf16.mxu0 0
    %3053 = vmatpush1.bf16.msra.mxu0 0
    %3054 = vmatprep.subr.bf16.mxu0 0
    %3055 = vmatpush1.bf16.msra.mxu0 %v58
    %3056 = vmatprep.subr.bf16.mxu0 0
    %3057 = vmatpush2.bf16.msra.mxu0 0
    %3058 = vmatprep.subr.bf16.mxu0 0
    %3059 = vmatpush2.bf16.msra.mxu0 0
    %3060 = vmatprep.subr.bf16.mxu0 0
    %3061 = vmatpush2.bf16.msra.mxu0 0
    %3062 = vmatprep.subr.bf16.mxu0 0
    %3063 = vmatpush2.bf16.msra.mxu0 0
    %3064 = vmatprep.subr.bf16.mxu0 0
    %3065 = vmatpush2.bf16.msra.mxu0 0
    %3066 = vmatprep.subr.bf16.mxu0 0
    %3067 = vmatpush2.bf16.msra.mxu0 0
    %3068 = vmatprep.subr.bf16.mxu0 0
    %3069 = vmatpush2.bf16.msra.mxu0 0
    %3070 = vmatprep.subr.bf16.mxu0 0
    %3071 = vmatpush2.bf16.msra.mxu0 0
    %3072 = vmatprep.mubr.bf16.mxu0 0
    %3073 = vmatmul.mubr.bf16.gmra.mxu0 %v2750
    %v3074 = vpop.f32.mrf.mxu0
    %v3075 = vadd.f32 0.0, %v3074
    %v3076 = vpop.f32.mrf.mxu0
    %v3077 = vpop.f32.mrf.mxu0
    %v3078 = vpop.f32.mrf.mxu0
    %3079 = vdwg.mxu0
    %3081 = vrot.lane.b32.xlu0 %v3039, 32
    %v3082 = vpop.permute.xlu0 %3081
    %v3084 = vsel %vm79, %v3082, 0
    %3086 = vmatprep.subr.bf16.mxu0 0
    %3087 = vmatpush1.bf16.msra.mxu0 0
    %3088 = vmatprep.subr.bf16.mxu0 0
    %3089 = vmatpush1.bf16.msra.mxu0 0
    %3090 = vmatprep.subr.bf16.mxu0 0
    %3091 = vmatpush1.bf16.msra.mxu0 0
    %3092 = vmatprep.subr.bf16.mxu0 0
    %3093 = vmatpush1.bf16.msra.mxu0 0
    %3094 = vmatprep.subr.bf16.mxu0 0
    %3095 = vmatpush1.bf16.msra.mxu0 0
    %3096 = vmatprep.subr.bf16.mxu0 0
    %3097 = vmatpush1.bf16.msra.mxu0 0
    %3098 = vmatprep.subr.bf16.mxu0 0
    %3099 = vmatpush1.bf16.msra.mxu0 %v40
    %3100 = vmatprep.subr.bf16.mxu0 0
    %3101 = vmatpush1.bf16.msra.mxu0 %v39
    %3102 = vmatprep.subr.bf16.mxu0 0
    %3103 = vmatpush2.bf16.msra.mxu0 0
    %3104 = vmatprep.subr.bf16.mxu0 0
    %3105 = vmatpush2.bf16.msra.mxu0 0
    %3106 = vmatprep.subr.bf16.mxu0 0
    %3107 = vmatpush2.bf16.msra.mxu0 0
    %3108 = vmatprep.subr.bf16.mxu0 0
    %3109 = vmatpush2.bf16.msra.mxu0 0
    %3110 = vmatprep.subr.bf16.mxu0 0
    %3111 = vmatpush2.bf16.msra.mxu0 0
    %3112 = vmatprep.subr.bf16.mxu0 0
    %3113 = vmatpush2.bf16.msra.mxu0 0
    %3114 = vmatprep.subr.bf16.mxu0 0
    %3115 = vmatpush2.bf16.msra.mxu0 0
    %3116 = vmatprep.subr.bf16.mxu0 0
    %3117 = vmatpush2.bf16.msra.mxu0 0
    %3118 = vmatprep.mubr.bf16.mxu0 0
    %3119 = vmatmul.mubr.bf16.gmra.mxu0 %v3084
    %v3120 = vpop.f32.mrf.mxu0
    %v3121 = vadd.f32 %v3075, %v3120
    %v3122 = vpop.f32.mrf.mxu0
    %v3123 = vpop.f32.mrf.mxu0
    %v3124 = vpop.f32.mrf.mxu0
    %3125 = vdwg.mxu0
    %v3126 = vadd.f32 %v3121, %v409
    %v3127 = vxor.u32 %v3126, 2147483648
    %v3128 = vmul.f32 %v3127, 1.442695
    %v3129 = vpow.pop %v3128
    %v3130 = vadd.f32 %v3129, 1.0
    %v3131 = vrcp.pop %v3130
    %v3132 = vmul.f32 1.0, %v3131
    %v3133 = vtanh.pop %v3126
    %v3134 = vmul.f32 %v3132, %v2691
    %3136 = vrot.lane.b32.xlu0 %v3133, 96
    %v3137 = vpop.permute.xlu0 %3136
    %v3139 = vmul.f32 %v3132, %v3137
    %3141 = vrot.lane.b32.xlu0 %v3139, 16
    %v3142 = vpop.permute.xlu0 %3141
    %v3144 = vadd.f32 %v3134, %v3142
    %v3145 = vtanh.pop %v3144
    %3147 = vrot.lane.b32.xlu0 %v3145, 32
    %v3148 = vpop.permute.xlu0 %3147
    %v3150 = vmul.f32 %v3132, %v3148
    %v3151 = vpack.c.bf16 %v3150, %v3150
    %v3152 = vpack.c.bf16 %v2816, %v2816
    %3154 = vrot.lane.b32.xlu0 %v3152, 80
    %v3155 = vpop.permute.xlu0 %3154
    %v3157 = vsel %vm317, %v3155, 0
    %3159 = vmatprep.subr.bf16.mxu0 0
    %3160 = vmatpush1.bf16.msra.mxu0 0
    %3161 = vmatprep.subr.bf16.mxu0 0
    %3162 = vmatpush1.bf16.msra.mxu0 0
    %3163 = vmatprep.subr.bf16.mxu0 0
    %3164 = vmatpush1.bf16.msra.mxu0 0
    %3165 = vmatprep.subr.bf16.mxu0 0
    %3166 = vmatpush1.bf16.msra.mxu0 0
    %3167 = vmatprep.subr.bf16.mxu0 0
    %3168 = vmatpush1.bf16.msra.mxu0 0
    %3169 = vmatprep.subr.bf16.mxu0 0
    %3170 = vmatpush1.bf16.msra.mxu0 0
    %3171 = vmatprep.subr.bf16.mxu0 0
    %3172 = vmatpush1.bf16.msra.mxu0 0
    %3173 = vmatprep.subr.bf16.mxu0 0
    %3174 = vmatpush1.bf16.msra.mxu0 %v61
    %3175 = vmatprep.subr.bf16.mxu0 0
    %3176 = vmatpush2.bf16.msra.mxu0 0
    %3177 = vmatprep.subr.bf16.mxu0 0
    %3178 = vmatpush2.bf16.msra.mxu0 0
    %3179 = vmatprep.subr.bf16.mxu0 0
    %3180 = vmatpush2.bf16.msra.mxu0 0
    %3181 = vmatprep.subr.bf16.mxu0 0
    %3182 = vmatpush2.bf16.msra.mxu0 0
    %3183 = vmatprep.subr.bf16.mxu0 0
    %3184 = vmatpush2.bf16.msra.mxu0 0
    %3185 = vmatprep.subr.bf16.mxu0 0
    %3186 = vmatpush2.bf16.msra.mxu0 0
    %3187 = vmatprep.subr.bf16.mxu0 0
    %3188 = vmatpush2.bf16.msra.mxu0 0
    %3189 = vmatprep.subr.bf16.mxu0 0
    %3190 = vmatpush2.bf16.msra.mxu0 0
    %3191 = vmatprep.mubr.bf16.mxu0 0
    %3192 = vmatmul.mubr.bf16.gmra.mxu0 %v3157
    %v3193 = vpop.f32.mrf.mxu0
    %v3194 = vadd.f32 0.0, %v3193
    %v3195 = vpop.f32.mrf.mxu0
    %v3196 = vpop.f32.mrf.mxu0
    %v3197 = vpop.f32.mrf.mxu0
    %3198 = vdwg.mxu0
    %3200 = vrot.lane.b32.xlu0 %v3151, 80
    %v3201 = vpop.permute.xlu0 %3200
    %v3203 = vsel %vm317, %v3201, 0
    %3205 = vmatprep.subr.bf16.mxu0 0
    %3206 = vmatpush1.bf16.msra.mxu0 0
    %3207 = vmatprep.subr.bf16.mxu0 0
    %3208 = vmatpush1.bf16.msra.mxu0 0
    %3209 = vmatprep.subr.bf16.mxu0 0
    %3210 = vmatpush1.bf16.msra.mxu0 0
    %3211 = vmatprep.subr.bf16.mxu0 0
    %3212 = vmatpush1.bf16.msra.mxu0 0
    %3213 = vmatprep.subr.bf16.mxu0 0
    %3214 = vmatpush1.bf16.msra.mxu0 0
    %3215 = vmatprep.subr.bf16.mxu0 0
    %3216 = vmatpush1.bf16.msra.mxu0 0
    %3217 = vmatprep.subr.bf16.mxu0 0
    %3218 = vmatpush1.bf16.msra.mxu0 0
    %3219 = vmatprep.subr.bf16.mxu0 0
    %3220 = vmatpush1.bf16.msra.mxu0 %v43
    %3221 = vmatprep.subr.bf16.mxu0 0
    %3222 = vmatpush2.bf16.msra.mxu0 0
    %3223 = vmatprep.subr.bf16.mxu0 0
    %3224 = vmatpush2.bf16.msra.mxu0 0
    %3225 = vmatprep.subr.bf16.mxu0 0
    %3226 = vmatpush2.bf16.msra.mxu0 0
    %3227 = vmatprep.subr.bf16.mxu0 0
    %3228 = vmatpush2.bf16.msra.mxu0 0
    %3229 = vmatprep.subr.bf16.mxu0 0
    %3230 = vmatpush2.bf16.msra.mxu0 0
    %3231 = vmatprep.subr.bf16.mxu0 0
    %3232 = vmatpush2.bf16.msra.mxu0 0
    %3233 = vmatprep.subr.bf16.mxu0 0
    %3234 = vmatpush2.bf16.msra.mxu0 0
    %3235 = vmatprep.subr.bf16.mxu0 0
    %3236 = vmatpush2.bf16.msra.mxu0 0
    %3237 = vmatprep.mubr.bf16.mxu0 0
    %3238 = vmatmul.mubr.bf16.gmra.mxu0 %v3203
    %v3239 = vpop.f32.mrf.mxu0
    %v3240 = vadd.f32 %v3194, %v3239
    %v3241 = vpop.f32.mrf.mxu0
    %v3242 = vpop.f32.mrf.mxu0
    %v3243 = vpop.f32.mrf.mxu0
    %3244 = vdwg.mxu0
    %v3245 = vadd.f32 %v3240, %v525
    %v3246 = vxor.u32 %v3245, 2147483648
    %v3247 = vmul.f32 %v3246, 1.442695
    %v3248 = vpow.pop %v3247
    %v3249 = vadd.f32 %v3248, 1.0
    %v3250 = vrcp.pop %v3249
    %v3251 = vmul.f32 1.0, %v3250
    %v3252 = vtanh.pop %v3245
    %v3253 = vmul.f32 %v3251, %v2810
    %3255 = vrot.lane.b32.xlu0 %v3252, 96
    %v3256 = vpop.permute.xlu0 %3255
    %v3258 = vmul.f32 %v3251, %v3256
    %3260 = vrot.lane.b32.xlu0 %v3258, 16
    %v3261 = vpop.permute.xlu0 %3260
    %v3263 = vadd.f32 %v3253, %v3261
    %v3264 = vtanh.pop %v3263
    %3266 = vrot.lane.b32.xlu0 %v3264, 32
    %v3267 = vpop.permute.xlu0 %3266
    %v3269 = vmul.f32 %v3251, %v3267
    %3270 = vmatprep.subr.bf16.mxu0 0
    %3271 = vmatpush1.bf16.msra.mxu0 0
    %3272 = vmatprep.subr.bf16.mxu0 0
    %3273 = vmatpush1.bf16.msra.mxu0 0
    %3274 = vmatprep.subr.bf16.mxu0 0
    %3275 = vmatpush1.bf16.msra.mxu0 0
    %3276 = vmatprep.subr.bf16.mxu0 0
    %3277 = vmatpush1.bf16.msra.mxu0 0
    %3278 = vmatprep.subr.bf16.mxu0 0
    %3279 = vmatpush1.bf16.msra.mxu0 0
    %3280 = vmatprep.subr.bf16.mxu0 0
    %3281 = vmatpush1.bf16.msra.mxu0 0
    %3282 = vmatprep.subr.bf16.mxu0 0
    %3283 = vmatpush1.bf16.msra.mxu0 %v49
    %3284 = vmatprep.subr.bf16.mxu0 0
    %3285 = vmatpush1.bf16.msra.mxu0 %v48
    %3286 = vmatprep.subr.bf16.mxu0 0
    %3287 = vmatpush2.bf16.msra.mxu0 0
    %3288 = vmatprep.subr.bf16.mxu0 0
    %3289 = vmatpush2.bf16.msra.mxu0 0
    %3290 = vmatprep.subr.bf16.mxu0 0
    %3291 = vmatpush2.bf16.msra.mxu0 0
    %3292 = vmatprep.subr.bf16.mxu0 0
    %3293 = vmatpush2.bf16.msra.mxu0 0
    %3294 = vmatprep.subr.bf16.mxu0 0
    %3295 = vmatpush2.bf16.msra.mxu0 0
    %3296 = vmatprep.subr.bf16.mxu0 0
    %3297 = vmatpush2.bf16.msra.mxu0 0
    %3298 = vmatprep.subr.bf16.mxu0 0
    %3299 = vmatpush2.bf16.msra.mxu0 0
    %3300 = vmatprep.subr.bf16.mxu0 0
    %3301 = vmatpush2.bf16.msra.mxu0 0
    %3302 = vmatprep.mubr.bf16.mxu0 0
    %3303 = vmatmul.mubr.bf16.gmra.mxu0 %v2972
    %v3304 = vpop.f32.mrf.mxu0
    %v3305 = vadd.f32 0.0, %v3304
    %v3306 = vpop.f32.mrf.mxu0
    %v3307 = vpop.f32.mrf.mxu0
    %v3308 = vpop.f32.mrf.mxu0
    %3309 = vdwg.mxu0
    %3310 = vrot.lane.b32.xlu0 %v78, 72
    %v3311 = vpop.permute.xlu0 %3310
    %v3313 = vsel %vm123, %v3311, 0
    %3315 = vmatprep.subr.bf16.mxu0 0
    %3316 = vmatpush1.bf16.msra.mxu0 0
    %3317 = vmatprep.subr.bf16.mxu0 0
    %3318 = vmatpush1.bf16.msra.mxu0 0
    %3319 = vmatprep.subr.bf16.mxu0 0
    %3320 = vmatpush1.bf16.msra.mxu0 0
    %3321 = vmatprep.subr.bf16.mxu0 0
    %3322 = vmatpush1.bf16.msra.mxu0 0
    %3323 = vmatprep.subr.bf16.mxu0 0
    %3324 = vmatpush1.bf16.msra.mxu0 0
    %3325 = vmatprep.subr.bf16.mxu0 0
    %3326 = vmatpush1.bf16.msra.mxu0 0
    %3327 = vmatprep.subr.bf16.mxu0 0
    %3328 = vmatpush1.bf16.msra.mxu0 0
    %3329 = vmatprep.subr.bf16.mxu0 0
    %3330 = vmatpush1.bf16.msra.mxu0 %v129
    %3331 = vmatprep.subr.bf16.mxu0 0
    %3332 = vmatpush2.bf16.msra.mxu0 0
    %3333 = vmatprep.subr.bf16.mxu0 0
    %3334 = vmatpush2.bf16.msra.mxu0 0
    %3335 = vmatprep.subr.bf16.mxu0 0
    %3336 = vmatpush2.bf16.msra.mxu0 0
    %3337 = vmatprep.subr.bf16.mxu0 0
    %3338 = vmatpush2.bf16.msra.mxu0 0
    %3339 = vmatprep.subr.bf16.mxu0 0
    %3340 = vmatpush2.bf16.msra.mxu0 0
    %3341 = vmatprep.subr.bf16.mxu0 0
    %3342 = vmatpush2.bf16.msra.mxu0 0
    %3343 = vmatprep.subr.bf16.mxu0 0
    %3344 = vmatpush2.bf16.msra.mxu0 0
    %3345 = vmatprep.subr.bf16.mxu0 0
    %3346 = vmatpush2.bf16.msra.mxu0 0
    %3347 = vmatprep.mubr.bf16.mxu0 0
    %3348 = vmatmul.mubr.bf16.gmra.mxu0 %v3313
    %v3349 = vpop.f32.mrf.mxu0
    %v3350 = vadd.f32 %v3305, %v3349
    %v3351 = vpop.f32.mrf.mxu0
    %v3352 = vpop.f32.mrf.mxu0
    %v3353 = vpop.f32.mrf.mxu0
    %3354 = vdwg.mxu0
    %v3355 = vadd.f32 %v3350, %v174
    %v3356 = vxor.u32 %v3355, 2147483648
    %v3357 = vmul.f32 %v3356, 1.442695
    %v3358 = vpow.pop %v3357
    %v3359 = vadd.f32 %v3358, 1.0
    %v3360 = vrcp.pop %v3359
    %v3361 = vmul.f32 1.0, %v3360
    %v3362 = vtanh.pop %v3355
    %v3363 = vmul.f32 %v3361, %v2920
    %3365 = vrot.lane.b32.xlu0 %v3362, 64
    %v3366 = vpop.permute.xlu0 %3365
    %v3368 = vmul.f32 %v3361, %v3366
    %3370 = vrot.lane.b32.xlu0 %v3368, 32
    %v3371 = vpop.permute.xlu0 %3370
    %v3373 = vadd.f32 %v3363, %v3371
    %v3374 = vtanh.pop %v3373
    %3376 = vrot.lane.b32.xlu0 %v3374, 64
    %v3377 = vpop.permute.xlu0 %3376
    %v3379 = vmul.f32 %v3361, %v3377
    %v3380 = vpack.c.bf16 %v3379, %v3379
    %3381 = vmatprep.subr.bf16.mxu0 0
    %3382 = vmatpush1.bf16.msra.mxu0 0
    %3383 = vmatprep.subr.bf16.mxu0 0
    %3384 = vmatpush1.bf16.msra.mxu0 0
    %3385 = vmatprep.subr.bf16.mxu0 0
    %3386 = vmatpush1.bf16.msra.mxu0 0
    %3387 = vmatprep.subr.bf16.mxu0 0
    %3388 = vmatpush1.bf16.msra.mxu0 0
    %3389 = vmatprep.subr.bf16.mxu0 0
    %3390 = vmatpush1.bf16.msra.mxu0 0
    %3391 = vmatprep.subr.bf16.mxu0 0
    %3392 = vmatpush1.bf16.msra.mxu0 0
    %3393 = vmatprep.subr.bf16.mxu0 0
    %3394 = vmatpush1.bf16.msra.mxu0 %v55
    %3395 = vmatprep.subr.bf16.mxu0 0
    %3396 = vmatpush1.bf16.msra.mxu0 %v54
    %3397 = vmatprep.subr.bf16.mxu0 0
    %3398 = vmatpush2.bf16.msra.mxu0 0
    %3399 = vmatprep.subr.bf16.mxu0 0
    %3400 = vmatpush2.bf16.msra.mxu0 0
    %3401 = vmatprep.subr.bf16.mxu0 0
    %3402 = vmatpush2.bf16.msra.mxu0 0
    %3403 = vmatprep.subr.bf16.mxu0 0
    %3404 = vmatpush2.bf16.msra.mxu0 0
    %3405 = vmatprep.subr.bf16.mxu0 0
    %3406 = vmatpush2.bf16.msra.mxu0 0
    %3407 = vmatprep.subr.bf16.mxu0 0
    %3408 = vmatpush2.bf16.msra.mxu0 0
    %3409 = vmatprep.subr.bf16.mxu0 0
    %3410 = vmatpush2.bf16.msra.mxu0 0
    %3411 = vmatprep.subr.bf16.mxu0 0
    %3412 = vmatpush2.bf16.msra.mxu0 0
    %3413 = vmatprep.mubr.bf16.mxu0 0
    %3414 = vmatmul.mubr.bf16.gmra.mxu0 %v3084
    %v3415 = vpop.f32.mrf.mxu0
    %v3416 = vadd.f32 0.0, %v3415
    %v3417 = vpop.f32.mrf.mxu0
    %v3418 = vpop.f32.mrf.mxu0
    %v3419 = vpop.f32.mrf.mxu0
    %3420 = vdwg.mxu0
    %3422 = vrot.lane.b32.xlu0 %v3380, 32
    %v3423 = vpop.permute.xlu0 %3422
    %v3425 = vsel %vm79, %v3423, 0
    %3427 = vmatprep.subr.bf16.mxu0 0
    %3428 = vmatpush1.bf16.msra.mxu0 0
    %3429 = vmatprep.subr.bf16.mxu0 0
    %3430 = vmatpush1.bf16.msra.mxu0 0
    %3431 = vmatprep.subr.bf16.mxu0 0
    %3432 = vmatpush1.bf16.msra.mxu0 0
    %3433 = vmatprep.subr.bf16.mxu0 0
    %3434 = vmatpush1.bf16.msra.mxu0 0
    %3435 = vmatprep.subr.bf16.mxu0 0
    %3436 = vmatpush1.bf16.msra.mxu0 0
    %3437 = vmatprep.subr.bf16.mxu0 0
    %3438 = vmatpush1.bf16.msra.mxu0 0
    %3439 = vmatprep.subr.bf16.mxu0 0
    %3440 = vmatpush1.bf16.msra.mxu0 %v34
    %3441 = vmatprep.subr.bf16.mxu0 0
    %3442 = vmatpush1.bf16.msra.mxu0 %v33
    %3443 = vmatprep.subr.bf16.mxu0 0
    %3444 = vmatpush2.bf16.msra.mxu0 0
    %3445 = vmatprep.subr.bf16.mxu0 0
    %3446 = vmatpush2.bf16.msra.mxu0 0
    %3447 = vmatprep.subr.bf16.mxu0 0
    %3448 = vmatpush2.bf16.msra.mxu0 0
    %3449 = vmatprep.subr.bf16.mxu0 0
    %3450 = vmatpush2.bf16.msra.mxu0 0
    %3451 = vmatprep.subr.bf16.mxu0 0
    %3452 = vmatpush2.bf16.msra.mxu0 0
    %3453 = vmatprep.subr.bf16.mxu0 0
    %3454 = vmatpush2.bf16.msra.mxu0 0
    %3455 = vmatprep.subr.bf16.mxu0 0
    %3456 = vmatpush2.bf16.msra.mxu0 0
    %3457 = vmatprep.subr.bf16.mxu0 0
    %3458 = vmatpush2.bf16.msra.mxu0 0
    %3459 = vmatprep.mubr.bf16.mxu0 0
    %3460 = vmatmul.mubr.bf16.gmra.mxu0 %v3425
    %v3461 = vpop.f32.mrf.mxu0
    %v3462 = vadd.f32 %v3416, %v3461
    %v3463 = vpop.f32.mrf.mxu0
    %v3464 = vpop.f32.mrf.mxu0
    %v3465 = vpop.f32.mrf.mxu0
    %3466 = vdwg.mxu0
    %v3467 = vadd.f32 %v3462, %v290
    %v3468 = vxor.u32 %v3467, 2147483648
    %v3469 = vmul.f32 %v3468, 1.442695
    %v3470 = vpow.pop %v3469
    %v3471 = vadd.f32 %v3470, 1.0
    %v3472 = vrcp.pop %v3471
    %v3473 = vmul.f32 1.0, %v3472
    %v3474 = vtanh.pop %v3467
    %v3475 = vmul.f32 %v3473, %v3032
    %3477 = vrot.lane.b32.xlu0 %v3474, 64
    %v3478 = vpop.permute.xlu0 %3477
    %v3480 = vmul.f32 %v3473, %v3478
    %3482 = vrot.lane.b32.xlu0 %v3480, 32
    %v3483 = vpop.permute.xlu0 %3482
    %v3485 = vadd.f32 %v3475, %v3483
    %v3486 = vtanh.pop %v3485
    %3488 = vrot.lane.b32.xlu0 %v3486, 64
    %v3489 = vpop.permute.xlu0 %3488
    %v3491 = vmul.f32 %v3473, %v3489
    %v3492 = vpack.c.bf16 %v3491, %v3491
    %3493 = vmatprep.subr.bf16.mxu0 0
    %3494 = vmatpush1.bf16.msra.mxu0 0
    %3495 = vmatprep.subr.bf16.mxu0 0
    %3496 = vmatpush1.bf16.msra.mxu0 0
    %3497 = vmatprep.subr.bf16.mxu0 0
    %3498 = vmatpush1.bf16.msra.mxu0 0
    %3499 = vmatprep.subr.bf16.mxu0 0
    %3500 = vmatpush1.bf16.msra.mxu0 0
    %3501 = vmatprep.subr.bf16.mxu0 0
    %3502 = vmatpush1.bf16.msra.mxu0 0
    %3503 = vmatprep.subr.bf16.mxu0 0
    %3504 = vmatpush1.bf16.msra.mxu0 0
    %3505 = vmatprep.subr.bf16.mxu0 0
    %3506 = vmatpush1.bf16.msra.mxu0 0
    %3507 = vmatprep.subr.bf16.mxu0 0
    %3508 = vmatpush1.bf16.msra.mxu0 %v58
    %3509 = vmatprep.subr.bf16.mxu0 0
    %3510 = vmatpush2.bf16.msra.mxu0 0
    %3511 = vmatprep.subr.bf16.mxu0 0
    %3512 = vmatpush2.bf16.msra.mxu0 0
    %3513 = vmatprep.subr.bf16.mxu0 0
    %3514 = vmatpush2.bf16.msra.mxu0 0
    %3515 = vmatprep.subr.bf16.mxu0 0
    %3516 = vmatpush2.bf16.msra.mxu0 0
    %3517 = vmatprep.subr.bf16.mxu0 0
    %3518 = vmatpush2.bf16.msra.mxu0 0
    %3519 = vmatprep.subr.bf16.mxu0 0
    %3520 = vmatpush2.bf16.msra.mxu0 0
    %3521 = vmatprep.subr.bf16.mxu0 0
    %3522 = vmatpush2.bf16.msra.mxu0 0
    %3523 = vmatprep.subr.bf16.mxu0 0
    %3524 = vmatpush2.bf16.msra.mxu0 0
    %3525 = vmatprep.mubr.bf16.mxu0 0
    %3526 = vmatmul.mubr.bf16.gmra.mxu0 %v3203
    %v3527 = vpop.f32.mrf.mxu0
    %v3528 = vadd.f32 0.0, %v3527
    %v3529 = vpop.f32.mrf.mxu0
    %v3530 = vpop.f32.mrf.mxu0
    %v3531 = vpop.f32.mrf.mxu0
    %3532 = vdwg.mxu0
    %3534 = vrot.lane.b32.xlu0 %v3492, 32
    %v3535 = vpop.permute.xlu0 %3534
    %v3537 = vsel %vm79, %v3535, 0
    %3539 = vmatprep.subr.bf16.mxu0 0
    %3540 = vmatpush1.bf16.msra.mxu0 0
    %3541 = vmatprep.subr.bf16.mxu0 0
    %3542 = vmatpush1.bf16.msra.mxu0 0
    %3543 = vmatprep.subr.bf16.mxu0 0
    %3544 = vmatpush1.bf16.msra.mxu0 0
    %3545 = vmatprep.subr.bf16.mxu0 0
    %3546 = vmatpush1.bf16.msra.mxu0 0
    %3547 = vmatprep.subr.bf16.mxu0 0
    %3548 = vmatpush1.bf16.msra.mxu0 0
    %3549 = vmatprep.subr.bf16.mxu0 0
    %3550 = vmatpush1.bf16.msra.mxu0 0
    %3551 = vmatprep.subr.bf16.mxu0 0
    %3552 = vmatpush1.bf16.msra.mxu0 %v40
    %3553 = vmatprep.subr.bf16.mxu0 0
    %3554 = vmatpush1.bf16.msra.mxu0 %v39
    %3555 = vmatprep.subr.bf16.mxu0 0
    %3556 = vmatpush2.bf16.msra.mxu0 0
    %3557 = vmatprep.subr.bf16.mxu0 0
    %3558 = vmatpush2.bf16.msra.mxu0 0
    %3559 = vmatprep.subr.bf16.mxu0 0
    %3560 = vmatpush2.bf16.msra.mxu0 0
    %3561 = vmatprep.subr.bf16.mxu0 0
    %3562 = vmatpush2.bf16.msra.mxu0 0
    %3563 = vmatprep.subr.bf16.mxu0 0
    %3564 = vmatpush2.bf16.msra.mxu0 0
    %3565 = vmatprep.subr.bf16.mxu0 0
    %3566 = vmatpush2.bf16.msra.mxu0 0
    %3567 = vmatprep.subr.bf16.mxu0 0
    %3568 = vmatpush2.bf16.msra.mxu0 0
    %3569 = vmatprep.subr.bf16.mxu0 0
    %3570 = vmatpush2.bf16.msra.mxu0 0
    %3571 = vmatprep.mubr.bf16.mxu0 0
    %3572 = vmatmul.mubr.bf16.gmra.mxu0 %v3537
    %v3573 = vpop.f32.mrf.mxu0
    %v3574 = vadd.f32 %v3528, %v3573
    %v3575 = vpop.f32.mrf.mxu0
    %v3576 = vpop.f32.mrf.mxu0
    %v3577 = vpop.f32.mrf.mxu0
    %3578 = vdwg.mxu0
    %v3579 = vadd.f32 %v3574, %v409
    %v3580 = vxor.u32 %v3579, 2147483648
    %v3581 = vmul.f32 %v3580, 1.442695
    %v3582 = vpow.pop %v3581
    %v3583 = vadd.f32 %v3582, 1.0
    %v3584 = vrcp.pop %v3583
    %v3585 = vmul.f32 1.0, %v3584
    %v3586 = vtanh.pop %v3579
    %v3587 = vmul.f32 %v3585, %v3144
    %3589 = vrot.lane.b32.xlu0 %v3586, 96
    %v3590 = vpop.permute.xlu0 %3589
    %v3592 = vmul.f32 %v3585, %v3590
    %3594 = vrot.lane.b32.xlu0 %v3592, 16
    %v3595 = vpop.permute.xlu0 %3594
    %v3597 = vadd.f32 %v3587, %v3595
    %v3598 = vtanh.pop %v3597
    %3600 = vrot.lane.b32.xlu0 %v3598, 32
    %v3601 = vpop.permute.xlu0 %3600
    %v3603 = vmul.f32 %v3585, %v3601
    %v3604 = vpack.c.bf16 %v3603, %v3603
    %v3605 = vpack.c.bf16 %v3269, %v3269
    %3607 = vrot.lane.b32.xlu0 %v3605, 80
    %v3608 = vpop.permute.xlu0 %3607
    %v3610 = vsel %vm317, %v3608, 0
    %3612 = vmatprep.subr.bf16.mxu0 0
    %3613 = vmatpush1.bf16.msra.mxu0 0
    %3614 = vmatprep.subr.bf16.mxu0 0
    %3615 = vmatpush1.bf16.msra.mxu0 0
    %3616 = vmatprep.subr.bf16.mxu0 0
    %3617 = vmatpush1.bf16.msra.mxu0 0
    %3618 = vmatprep.subr.bf16.mxu0 0
    %3619 = vmatpush1.bf16.msra.mxu0 0
    %3620 = vmatprep.subr.bf16.mxu0 0
    %3621 = vmatpush1.bf16.msra.mxu0 0
    %3622 = vmatprep.subr.bf16.mxu0 0
    %3623 = vmatpush1.bf16.msra.mxu0 0
    %3624 = vmatprep.subr.bf16.mxu0 0
    %3625 = vmatpush1.bf16.msra.mxu0 0
    %3626 = vmatprep.subr.bf16.mxu0 0
    %3627 = vmatpush1.bf16.msra.mxu0 %v61
    %3628 = vmatprep.subr.bf16.mxu0 0
    %3629 = vmatpush2.bf16.msra.mxu0 0
    %3630 = vmatprep.subr.bf16.mxu0 0
    %3631 = vmatpush2.bf16.msra.mxu0 0
    %3632 = vmatprep.subr.bf16.mxu0 0
    %3633 = vmatpush2.bf16.msra.mxu0 0
    %3634 = vmatprep.subr.bf16.mxu0 0
    %3635 = vmatpush2.bf16.msra.mxu0 0
    %3636 = vmatprep.subr.bf16.mxu0 0
    %3637 = vmatpush2.bf16.msra.mxu0 0
    %3638 = vmatprep.subr.bf16.mxu0 0
    %3639 = vmatpush2.bf16.msra.mxu0 0
    %3640 = vmatprep.subr.bf16.mxu0 0
    %3641 = vmatpush2.bf16.msra.mxu0 0
    %3642 = vmatprep.subr.bf16.mxu0 0
    %3643 = vmatpush2.bf16.msra.mxu0 0
    %3644 = vmatprep.mubr.bf16.mxu0 0
    %3645 = vmatmul.mubr.bf16.gmra.mxu0 %v3610
    %v3646 = vpop.f32.mrf.mxu0
    %v3647 = vadd.f32 0.0, %v3646
    %v3648 = vpop.f32.mrf.mxu0
    %v3649 = vpop.f32.mrf.mxu0
    %v3650 = vpop.f32.mrf.mxu0
    %3651 = vdwg.mxu0
    %3653 = vrot.lane.b32.xlu0 %v3604, 80
    %v3654 = vpop.permute.xlu0 %3653
    %v3656 = vsel %vm317, %v3654, 0
    %3658 = vmatprep.subr.bf16.mxu0 0
    %3659 = vmatpush1.bf16.msra.mxu0 0
    %3660 = vmatprep.subr.bf16.mxu0 0
    %3661 = vmatpush1.bf16.msra.mxu0 0
    %3662 = vmatprep.subr.bf16.mxu0 0
    %3663 = vmatpush1.bf16.msra.mxu0 0
    %3664 = vmatprep.subr.bf16.mxu0 0
    %3665 = vmatpush1.bf16.msra.mxu0 0
    %3666 = vmatprep.subr.bf16.mxu0 0
    %3667 = vmatpush1.bf16.msra.mxu0 0
    %3668 = vmatprep.subr.bf16.mxu0 0
    %3669 = vmatpush1.bf16.msra.mxu0 0
    %3670 = vmatprep.subr.bf16.mxu0 0
    %3671 = vmatpush1.bf16.msra.mxu0 0
    %3672 = vmatprep.subr.bf16.mxu0 0
    %3673 = vmatpush1.bf16.msra.mxu0 %v43
    %3674 = vmatprep.subr.bf16.mxu0 0
    %3675 = vmatpush2.bf16.msra.mxu0 0
    %3676 = vmatprep.subr.bf16.mxu0 0
    %3677 = vmatpush2.bf16.msra.mxu0 0
    %3678 = vmatprep.subr.bf16.mxu0 0
    %3679 = vmatpush2.bf16.msra.mxu0 0
    %3680 = vmatprep.subr.bf16.mxu0 0
    %3681 = vmatpush2.bf16.msra.mxu0 0
    %3682 = vmatprep.subr.bf16.mxu0 0
    %3683 = vmatpush2.bf16.msra.mxu0 0
    %3684 = vmatprep.subr.bf16.mxu0 0
    %3685 = vmatpush2.bf16.msra.mxu0 0
    %3686 = vmatprep.subr.bf16.mxu0 0
    %3687 = vmatpush2.bf16.msra.mxu0 0
    %3688 = vmatprep.subr.bf16.mxu0 0
    %3689 = vmatpush2.bf16.msra.mxu0 0
    %3690 = vmatprep.mubr.bf16.mxu0 0
    %3691 = vmatmul.mubr.bf16.gmra.mxu0 %v3656
    %v3692 = vpop.f32.mrf.mxu0
    %v3693 = vadd.f32 %v3647, %v3692
    %v3694 = vpop.f32.mrf.mxu0
    %v3695 = vpop.f32.mrf.mxu0
    %v3696 = vpop.f32.mrf.mxu0
    %3697 = vdwg.mxu0
    %v3698 = vadd.f32 %v3693, %v525
    %v3699 = vxor.u32 %v3698, 2147483648
    %v3700 = vmul.f32 %v3699, 1.442695
    %v3701 = vpow.pop %v3700
    %v3702 = vadd.f32 %v3701, 1.0
    %v3703 = vrcp.pop %v3702
    %v3704 = vmul.f32 1.0, %v3703
    %v3705 = vtanh.pop %v3698
    %v3706 = vmul.f32 %v3704, %v3263
    %3708 = vrot.lane.b32.xlu0 %v3705, 96
    %v3709 = vpop.permute.xlu0 %3708
    %v3711 = vmul.f32 %v3704, %v3709
    %3713 = vrot.lane.b32.xlu0 %v3711, 16
    %v3714 = vpop.permute.xlu0 %3713
    %v3716 = vadd.f32 %v3706, %v3714
    %v3717 = vtanh.pop %v3716
    %3719 = vrot.lane.b32.xlu0 %v3717, 32
    %v3720 = vpop.permute.xlu0 %3719
    %v3722 = vmul.f32 %v3704, %v3720
    %v3723 = vmax.f32 %v3603, 0.0
    %v3724 = vpack.c.bf16 %v3723, %v3723
    %v3725 = vlaneseq
    %v3726 = vshrl.u32 %v3725, 7
    %v3727 = vsub.s32 0, %v3726
    %v3728 = vrot.slane %v69, %v3727
    %3730 = vrot.lane.b32.xlu0 %v3724, 80
    %v3731 = vpop.permute.xlu0 %3730
    %v3733 = vsel %vm317, %v3731, 0
    %3735 = vmatprep.subr.bf16.mxu0 0
    %3736 = vmatpush1.bf16.msra.mxu0 0
    %3737 = vmatprep.subr.bf16.mxu0 0
    %3738 = vmatpush1.bf16.msra.mxu0 0
    %3739 = vmatprep.subr.bf16.mxu0 0
    %3740 = vmatpush1.bf16.msra.mxu0 0
    %3741 = vmatprep.subr.bf16.mxu0 0
    %3742 = vmatpush1.bf16.msra.mxu0 0
    %3743 = vmatprep.subr.bf16.mxu0 0
    %3744 = vmatpush1.bf16.msra.mxu0 0
    %3745 = vmatprep.subr.bf16.mxu0 0
    %3746 = vmatpush1.bf16.msra.mxu0 0
    %3747 = vmatprep.subr.bf16.mxu0 0
    %3748 = vmatpush1.bf16.msra.mxu0 0
    %3749 = vmatprep.subr.bf16.mxu0 0
    %3750 = vmatpush1.bf16.msra.mxu0 %v68
    %3751 = vmatprep.subr.bf16.mxu0 0
    %3752 = vmatpush2.bf16.msra.mxu0 0
    %3753 = vmatprep.subr.bf16.mxu0 0
    %3754 = vmatpush2.bf16.msra.mxu0 0
    %3755 = vmatprep.subr.bf16.mxu0 0
    %3756 = vmatpush2.bf16.msra.mxu0 0
    %3757 = vmatprep.subr.bf16.mxu0 0
    %3758 = vmatpush2.bf16.msra.mxu0 0
    %3759 = vmatprep.subr.bf16.mxu0 0
    %3760 = vmatpush2.bf16.msra.mxu0 0
    %3761 = vmatprep.subr.bf16.mxu0 0
    %3762 = vmatpush2.bf16.msra.mxu0 0
    %3763 = vmatprep.subr.bf16.mxu0 0
    %3764 = vmatpush2.bf16.msra.mxu0 0
    %3765 = vmatprep.subr.bf16.mxu0 0
    %3766 = vmatpush2.bf16.msra.mxu0 0
    %3767 = vmatprep.mubr.bf16.mxu0 0
    %3768 = vmatmul.mubr.bf16.gmra.mxu0 %v3733
    %v3769 = vpop.f32.mrf.mxu0
    %v3770 = vadd.f32 %v3728, %v3769
    %v3771 = vpop.f32.mrf.mxu0
    %v3772 = vpop.f32.mrf.mxu0
    %v3773 = vpop.f32.mrf.mxu0
    %3774 = vdwg.mxu0
    %v3775 = vmax.f32 %v3770, 0.0
    %v3776 = vpack.c.bf16 %v3775, %v3775
    %v3777 = vlaneseq
    %v3778 = vshrl.u32 %v3777, 7
    %v3779 = vsub.s32 0, %v3778
    %v3780 = vrot.slane %v73, %v3779
    %v3782 = vsel %vm317, %v3776, 0
    %3784 = vmatprep.subr.bf16.mxu0 0
    %3785 = vmatpush1.bf16.msra.mxu0 0
    %3786 = vmatprep.subr.bf16.mxu0 0
    %3787 = vmatpush1.bf16.msra.mxu0 0
    %3788 = vmatprep.subr.bf16.mxu0 0
    %3789 = vmatpush1.bf16.msra.mxu0 0
    %3790 = vmatprep.subr.bf16.mxu0 0
    %3791 = vmatpush1.bf16.msra.mxu0 0
    %3792 = vmatprep.subr.bf16.mxu0 0
    %3793 = vmatpush1.bf16.msra.mxu0 0
    %3794 = vmatprep.subr.bf16.mxu0 0
    %3795 = vmatpush1.bf16.msra.mxu0 0
    %3796 = vmatprep.subr.bf16.mxu0 0
    %3797 = vmatpush1.bf16.msra.mxu0 0
    %3798 = vmatprep.subr.bf16.mxu0 0
    %3799 = vmatpush1.bf16.msra.mxu0 %v72
    %3800 = vmatprep.subr.bf16.mxu0 0
    %3801 = vmatpush2.bf16.msra.mxu0 0
    %3802 = vmatprep.subr.bf16.mxu0 0
    %3803 = vmatpush2.bf16.msra.mxu0 0
    %3804 = vmatprep.subr.bf16.mxu0 0
    %3805 = vmatpush2.bf16.msra.mxu0 0
    %3806 = vmatprep.subr.bf16.mxu0 0
    %3807 = vmatpush2.bf16.msra.mxu0 0
    %3808 = vmatprep.subr.bf16.mxu0 0
    %3809 = vmatpush2.bf16.msra.mxu0 0
    %3810 = vmatprep.subr.bf16.mxu0 0
    %3811 = vmatpush2.bf16.msra.mxu0 0
    %3812 = vmatprep.subr.bf16.mxu0 0
    %3813 = vmatpush2.bf16.msra.mxu0 0
    %3814 = vmatprep.subr.bf16.mxu0 0
    %3815 = vmatpush2.bf16.msra.mxu0 0
    %3816 = vmatprep.mubr.bf16.mxu0 0
    %3817 = vmatmul.mubr.bf16.gmra.mxu0 %v3782
    %v3818 = vpop.f32.mrf.mxu0
    %v3819 = vadd.f32 %v3780, %v3818
    %v3820 = vpop.f32.mrf.mxu0
    %v3821 = vpop.f32.mrf.mxu0
    %v3822 = vpop.f32.mrf.mxu0
    %3823 = vdwg.mxu0
    %v3824 = vmax.f32 %v3819, 0.0
    %v3825 = vpack.c.bf16 %v3824, %v3824
    %v3826 = vlaneseq
    %v3827 = vshrl.u32 %v3826, 7
    %v3828 = vsub.s32 0, %v3827
    %v3829 = vrot.slane %v76, %v3828
    %vm3830 = vcmask 31744
    %v3832 = vsel %vm3830, %v3825, 0
    %vm3834 = vcmask 1041408
    %v3836 = vsel %vm3834, %v75, 0
    %3838 = vmatprep.subr.bf16.mxu0 0
    %3839 = vmatpush1.bf16.msra.mxu0 0
    %3840 = vmatprep.subr.bf16.mxu0 0
    %3841 = vmatpush1.bf16.msra.mxu0 0
    %3842 = vmatprep.subr.bf16.mxu0 0
    %3843 = vmatpush1.bf16.msra.mxu0 0
    %3844 = vmatprep.subr.bf16.mxu0 0
    %3845 = vmatpush1.bf16.msra.mxu0 0
    %3846 = vmatprep.subr.bf16.mxu0 0
    %3847 = vmatpush1.bf16.msra.mxu0 0
    %3848 = vmatprep.subr.bf16.mxu0 0
    %3849 = vmatpush1.bf16.msra.mxu0 0
    %3850 = vmatprep.subr.bf16.mxu0 0
    %3851 = vmatpush1.bf16.msra.mxu0 0
    %3852 = vmatprep.subr.bf16.mxu0 0
    %3853 = vmatpush1.bf16.msra.mxu0 %v3836
    %3854 = vmatprep.subr.bf16.mxu0 0
    %3855 = vmatpush2.bf16.msra.mxu0 0
    %3856 = vmatprep.subr.bf16.mxu0 0
    %3857 = vmatpush2.bf16.msra.mxu0 0
    %3858 = vmatprep.subr.bf16.mxu0 0
    %3859 = vmatpush2.bf16.msra.mxu0 0
    %3860 = vmatprep.subr.bf16.mxu0 0
    %3861 = vmatpush2.bf16.msra.mxu0 0
    %3862 = vmatprep.subr.bf16.mxu0 0
    %3863 = vmatpush2.bf16.msra.mxu0 0
    %3864 = vmatprep.subr.bf16.mxu0 0
    %3865 = vmatpush2.bf16.msra.mxu0 0
    %3866 = vmatprep.subr.bf16.mxu0 0
    %3867 = vmatpush2.bf16.msra.mxu0 0
    %3868 = vmatprep.subr.bf16.mxu0 0
    %3869 = vmatpush2.bf16.msra.mxu0 0
    %3870 = vmatprep.mubr.bf16.mxu0 0
    %3871 = vmatmul.mubr.bf16.gmra.mxu0 %v3832
    %v3872 = vpop.f32.mrf.mxu0
    %v3873 = vadd.f32 %v3829, %v3872
    %v3874 = vpop.f32.mrf.mxu0
    %v3875 = vpop.f32.mrf.mxu0
    %v3876 = vpop.f32.mrf.mxu0
    %3877 = vdwg.mxu0
    %vm3878 = vcmask 17408
    %3879 = vst.msk [vmem:[#allocation5] sm:$0x3] %vm3878, %v3873
    %v3880 = vmax.f32 %v3722, 0.0
    %v3881 = vpack.c.bf16 %v3880, %v3880
    %3883 = vrot.lane.b32.xlu0 %v3881, 80
    %v3884 = vpop.permute.xlu0 %3883
    %v3886 = vsel %vm317, %v3884, 0
    %3888 = vmatprep.subr.bf16.mxu0 0
    %3889 = vmatpush1.bf16.msra.mxu0 0
    %3890 = vmatprep.subr.bf16.mxu0 0
    %3891 = vmatpush1.bf16.msra.mxu0 0
    %3892 = vmatprep.subr.bf16.mxu0 0
    %3893 = vmatpush1.bf16.msra.mxu0 0
    %3894 = vmatprep.subr.bf16.mxu0 0
    %3895 = vmatpush1.bf16.msra.mxu0 0
    %3896 = vmatprep.subr.bf16.mxu0 0
    %3897 = vmatpush1.bf16.msra.mxu0 0
    %3898 = vmatprep.subr.bf16.mxu0 0
    %3899 = vmatpush1.bf16.msra.mxu0 0
    %3900 = vmatprep.subr.bf16.mxu0 0
    %3901 = vmatpush1.bf16.msra.mxu0 0
    %3902 = vmatprep.subr.bf16.mxu0 0
    %3903 = vmatpush1.bf16.msra.mxu0 %v68
    %3904 = vmatprep.subr.bf16.mxu0 0
    %3905 = vmatpush2.bf16.msra.mxu0 0
    %3906 = vmatprep.subr.bf16.mxu0 0
    %3907 = vmatpush2.bf16.msra.mxu0 0
    %3908 = vmatprep.subr.bf16.mxu0 0
    %3909 = vmatpush2.bf16.msra.mxu0 0
    %3910 = vmatprep.subr.bf16.mxu0 0
    %3911 = vmatpush2.bf16.msra.mxu0 0
    %3912 = vmatprep.subr.bf16.mxu0 0
    %3913 = vmatpush2.bf16.msra.mxu0 0
    %3914 = vmatprep.subr.bf16.mxu0 0
    %3915 = vmatpush2.bf16.msra.mxu0 0
    %3916 = vmatprep.subr.bf16.mxu0 0
    %3917 = vmatpush2.bf16.msra.mxu0 0
    %3918 = vmatprep.subr.bf16.mxu0 0
    %3919 = vmatpush2.bf16.msra.mxu0 0
    %3920 = vmatprep.mubr.bf16.mxu0 0
    %3921 = vmatmul.mubr.bf16.gmra.mxu0 %v3886
    %v3922 = vpop.f32.mrf.mxu0
    %v3923 = vadd.f32 %v3728, %v3922
    %v3924 = vpop.f32.mrf.mxu0
    %v3925 = vpop.f32.mrf.mxu0
    %v3926 = vpop.f32.mrf.mxu0
    %3927 = vdwg.mxu0
    %v3928 = vmax.f32 %v3923, 0.0
    %v3929 = vpack.c.bf16 %v3928, %v3928
    %v3931 = vsel %vm317, %v3929, 0
    %3933 = vmatprep.subr.bf16.mxu0 0
    %3934 = vmatpush1.bf16.msra.mxu0 0
    %3935 = vmatprep.subr.bf16.mxu0 0
    %3936 = vmatpush1.bf16.msra.mxu0 0
    %3937 = vmatprep.subr.bf16.mxu0 0
    %3938 = vmatpush1.bf16.msra.mxu0 0
    %3939 = vmatprep.subr.bf16.mxu0 0
    %3940 = vmatpush1.bf16.msra.mxu0 0
    %3941 = vmatprep.subr.bf16.mxu0 0
    %3942 = vmatpush1.bf16.msra.mxu0 0
    %3943 = vmatprep.subr.bf16.mxu0 0
    %3944 = vmatpush1.bf16.msra.mxu0 0
    %3945 = vmatprep.subr.bf16.mxu0 0
    %3946 = vmatpush1.bf16.msra.mxu0 0
    %3947 = vmatprep.subr.bf16.mxu0 0
    %3948 = vmatpush1.bf16.msra.mxu0 %v72
    %3949 = vmatprep.subr.bf16.mxu0 0
    %3950 = vmatpush2.bf16.msra.mxu0 0
    %3951 = vmatprep.subr.bf16.mxu0 0
    %3952 = vmatpush2.bf16.msra.mxu0 0
    %3953 = vmatprep.subr.bf16.mxu0 0
    %3954 = vmatpush2.bf16.msra.mxu0 0
    %3955 = vmatprep.subr.bf16.mxu0 0
    %3956 = vmatpush2.bf16.msra.mxu0 0
    %3957 = vmatprep.subr.bf16.mxu0 0
    %3958 = vmatpush2.bf16.msra.mxu0 0
    %3959 = vmatprep.subr.bf16.mxu0 0
    %3960 = vmatpush2.bf16.msra.mxu0 0
    %3961 = vmatprep.subr.bf16.mxu0 0
    %3962 = vmatpush2.bf16.msra.mxu0 0
    %3963 = vmatprep.subr.bf16.mxu0 0
    %3964 = vmatpush2.bf16.msra.mxu0 0
    %3965 = vmatprep.mubr.bf16.mxu0 0
    %3966 = vmatmul.mubr.bf16.gmra.mxu0 %v3931
    %v3967 = vpop.f32.mrf.mxu0
    %v3968 = vadd.f32 %v3780, %v3967
    %v3969 = vpop.f32.mrf.mxu0
    %v3970 = vpop.f32.mrf.mxu0
    %v3971 = vpop.f32.mrf.mxu0
    %3972 = vdwg.mxu0
    %v3973 = vmax.f32 %v3968, 0.0
    %v3974 = vpack.c.bf16 %v3973, %v3973
    %v3976 = vsel %vm3830, %v3974, 0
    %3978 = vmatprep.subr.bf16.mxu0 0
    %3979 = vmatpush1.bf16.msra.mxu0 0
    %3980 = vmatprep.subr.bf16.mxu0 0
    %3981 = vmatpush1.bf16.msra.mxu0 0
    %3982 = vmatprep.subr.bf16.mxu0 0
    %3983 = vmatpush1.bf16.msra.mxu0 0
    %3984 = vmatprep.subr.bf16.mxu0 0
    %3985 = vmatpush1.bf16.msra.mxu0 0
    %3986 = vmatprep.subr.bf16.mxu0 0
    %3987 = vmatpush1.bf16.msra.mxu0 0
    %3988 = vmatprep.subr.bf16.mxu0 0
    %3989 = vmatpush1.bf16.msra.mxu0 0
    %3990 = vmatprep.subr.bf16.mxu0 0
    %3991 = vmatpush1.bf16.msra.mxu0 0
    %3992 = vmatprep.subr.bf16.mxu0 0
    %3993 = vmatpush1.bf16.msra.mxu0 %v3836
    %3994 = vmatprep.subr.bf16.mxu0 0
    %3995 = vmatpush2.bf16.msra.mxu0 0
    %3996 = vmatprep.subr.bf16.mxu0 0
    %3997 = vmatpush2.bf16.msra.mxu0 0
    %3998 = vmatprep.subr.bf16.mxu0 0
    %3999 = vmatpush2.bf16.msra.mxu0 0
    %4000 = vmatprep.subr.bf16.mxu0 0
    %4001 = vmatpush2.bf16.msra.mxu0 0
    %4002 = vmatprep.subr.bf16.mxu0 0
    %4003 = vmatpush2.bf16.msra.mxu0 0
    %4004 = vmatprep.subr.bf16.mxu0 0
    %4005 = vmatpush2.bf16.msra.mxu0 0
    %4006 = vmatprep.subr.bf16.mxu0 0
    %4007 = vmatpush2.bf16.msra.mxu0 0
    %4008 = vmatprep.subr.bf16.mxu0 0
    %4009 = vmatpush2.bf16.msra.mxu0 0
    %4010 = vmatprep.mubr.bf16.mxu0 0
    %4011 = vmatmul.mubr.bf16.gmra.mxu0 %v3976
    %v4012 = vpop.f32.mrf.mxu0
    %v4013 = vadd.f32 %v3829, %v4012
    %v4014 = vpop.f32.mrf.mxu0
    %v4015 = vpop.f32.mrf.mxu0
    %v4016 = vpop.f32.mrf.mxu0
    %4017 = vdwg.mxu0
    %4018 = vst.msk [vmem:[#allocation5 + $0x2] sm:$0x3] %vm3878, %v4013
    // Predicated region
    $region14: #{forward.1} parent=1 // pred_check
      _
    $region15: #{forward.1} parent=1 // pred_check_branch
      %4020 = sbr.rel (0) target = $region17
    $region16: #{forward.1} parent=1 // pred_region
      %s4022 = ssub.s32 64, 64
      %4023 = vsyncadd [#allocation4], %s4022
      %s4025 = sshll.u32 [#allocation5], 4
      %s4026 = int_to_ptr.vmem [resolvable:$true] %s4025
      %4028 = dma.vmem_to_hbm [thread:$0]  %s4026, 64, %s2, [#allocation4]
    $region17: #{forward.1} parent=1 // pred_fallthru
      _
    // Predicated region
    $region18: #{forward.1} parent=1 // pred_check
      _
    $region19: #{forward.1} parent=1 // pred_check_branch
      %4030 = sbr.rel (0) target = $region21
    $region20: #{forward.1} parent=1 // pred_region
      %4031 = dma.done [#allocation4], 64
    $region21: #{forward.1} parent=1 // pred_fallthru
      _
    %4032 = vsyncpa [#allocation3], 1
    %4033 = vsyncpa [#allocation4], 1

</llo_original>
